<compile_context>
chip_gen: v6e
topology: v6e:2x2x1
jax: 0.10.0
libtpu: 0.0.40
codegen_flags: <defaults>
</compile_context>

<pallas_src>
import functools

import jax
import jax.numpy as jnp
from jax.experimental import pallas as pl
from jax.experimental.pallas import tpu as pltpu

BN_EPS = 1e-5                      # PyTorch nn.BatchNorm1d default eps
VMEM_LIMIT = 32 * 1024 * 1024      # fits v5e/v6e/v7x scoped VMEM comfortably


# --------------------------------------------------------------------------
# Kernels
# --------------------------------------------------------------------------
def _stats1_kernel(x_ref, w1_ref, stat_ref):
    """Per-tile partial [sum; sumsq] of z1 = x @ W1 (pre-BN layer-1 act).

    Padded x rows are exactly zero and W1 has no bias, so they contribute
    exactly 0 to both moments -- no row mask needed in this pass.
    """
    z = jnp.dot(x_ref[...], w1_ref[...], preferred_element_type=jnp.float32)
    stat_ref[...] = jnp.concatenate(
        [jnp.sum(z, axis=0, keepdims=True),
         jnp.sum(z * z, axis=0, keepdims=True)], axis=0)


def _stats2_kernel(n_valid, x_ref, w1_ref, s1_ref, t1_ref, w2_ref, stat_ref):
    """Per-tile partial [sum; sumsq] of z2 = relu(bn1(x@W1)) @ W2.

    bn1 has a shift, so padded rows produce relu(shift) != 0 after layer 1 and
    must be masked out before the second matmul / the statistics.
    """
    i = pl.program_id(0)
    z1 = jnp.dot(x_ref[...], w1_ref[...], preferred_element_type=jnp.float32)
    h1 = jnp.maximum(z1 * s1_ref[...] + t1_ref[...], 0.0)
    tile_n = h1.shape[0]
    row = jax.lax.broadcasted_iota(jnp.int32, h1.shape, 0) + i * tile_n
    h1 = jnp.where(row < n_valid, h1, 0.0)          # padded rows -> zero z2
    z2 = jnp.dot(h1.astype(w2_ref.dtype), w2_ref[...],
                 preferred_element_type=jnp.float32)
    stat_ref[...] = jnp.concatenate(
        [jnp.sum(z2, axis=0, keepdims=True),
         jnp.sum(z2 * z2, axis=0, keepdims=True)], axis=0)


def _final_kernel(x_ref, w1_ref, s1_ref, t1_ref, w2_ref, s2_ref, t2_ref,
                  wc_ref, bc_ref, o_ref):
    """Full forward for one N-tile with precomputed BN scale/shift."""
    z1 = jnp.dot(x_ref[...], w1_ref[...], preferred_element_type=jnp.float32)
    h1 = jnp.maximum(z1 * s1_ref[...] + t1_ref[...], 0.0)
    z2 = jnp.dot(h1.astype(w2_ref.dtype), w2_ref[...],
                 preferred_element_type=jnp.float32)
    h2 = jnp.maximum(z2 * s2_ref[...] + t2_ref[...], 0.0)
    o_ref[...] = (jnp.dot(h2.astype(wc_ref.dtype), wc_ref[...],
                          preferred_element_type=jnp.float32)
                  + bc_ref[...]).astype(o_ref.dtype)


# --------------------------------------------------------------------------
# Wrapper
# --------------------------------------------------------------------------
def _bn_scale_shift(s, sq, n, g, b):
    """Training-mode BN (biased variance) folded into per-channel scale/shift."""
    mean = s / n
    var = jnp.maximum(sq / n - mean * mean, 0.0)
    scale = g.astype(jnp.float32) * jax.lax.rsqrt(var + BN_EPS)
    shift = b.astype(jnp.float32) - mean * scale
    return scale.reshape(1, -1), shift.reshape(1, -1)


def _const_spec(shape):
    """Block covering the whole array; same block every step (loaded once)."""
    nd = len(shape)
    return pl.BlockSpec(shape, lambda i, _nd=nd: (0,) * _nd)


@functools.partial(jax.jit, static_argnames=("tile_n",))
def auxiliary_head_ppi(x, w1, g1, b1, w2, g2, b2, wc, bc, *, tile_n=256):
    """x: (N, C) node features -> (N, num_classes) logits (training-mode BN)."""
    N, C = x.shape
    H1 = w1.shape[1]
    H2 = w2.shape[1]
    num_classes = wc.shape[1]

    assert tile_n % 8 == 0, "tile_n must be a multiple of the sublane size (8)"
    nt = pl.cdiv(N, tile_n)
    n_pad = nt * tile_n
    pad_cls = max(128, ((num_classes + 127) // 128) * 128)   # lane-dense output

    # bf16 MXU operands (fp32 accumulation inside kernels); zero-pad ragged N.
    xb = jnp.pad(x, ((0, n_pad - N), (0, 0))).astype(jnp.bfloat16)
    w1b = w1.astype(jnp.bfloat16)
    w2b = w2.astype(jnp.bfloat16)
    wcb = jnp.pad(wc, ((0, 0), (0, pad_cls - num_classes))).astype(jnp.bfloat16)
    bcp = jnp.pad(bc.reshape(1, -1).astype(jnp.float32),
                  ((0, 0), (0, pad_cls - num_classes)))

    x_spec = pl.BlockSpec((tile_n, C), lambda i: (i, 0))
    cparams = pltpu.CompilerParams(dimension_semantics=("parallel",),
                                   vmem_limit_bytes=VMEM_LIMIT)

    # ---- pass 1: per-tile partial stats of z1 = x @ W1 ----------------------
    stats1 = pl.pallas_call(
        _stats1_kernel,
        out_shape=jax.ShapeDtypeStruct((nt, 2, H1), jnp.float32),
        grid_spec=pltpu.PrefetchScalarGridSpec(
            num_scalar_prefetch=0, grid=(nt,),
            in_specs=[x_spec, _const_spec((C, H1))],
            out_specs=pl.BlockSpec((None, 2, H1), lambda i: (i, 0, 0))),
        compiler_params=cparams,
        cost_estimate=pl.CostEstimate(
            flops=2 * n_pad * C * H1, transcendentals=0,
            bytes_accessed=n_pad * C * 2 + C * H1 * 2 + nt * 2 * H1 * 4),
    )(xb, w1b)
    scale1, shift1 = _bn_scale_shift(stats1[:, 0, :].sum(0),
                                     stats1[:, 1, :].sum(0), N, g1, b1)

    # ---- pass 2: per-tile partial stats of z2 = relu(bn1(x@W1)) @ W2 --------
    stats2 = pl.pallas_call(
        functools.partial(_stats2_kernel, N),
        out_shape=jax.ShapeDtypeStruct((nt, 2, H2), jnp.float32),
        grid_spec=pltpu.PrefetchScalarGridSpec(
            num_scalar_prefetch=0, grid=(nt,),
            in_specs=[x_spec, _const_spec((C, H1)),
                      _const_spec((1, H1)), _const_spec((1, H1)),
                      _const_spec((H1, H2))],
            out_specs=pl.BlockSpec((None, 2, H2), lambda i: (i, 0, 0))),
        compiler_params=cparams,
        cost_estimate=pl.CostEstimate(
            flops=2 * n_pad * (C * H1 + H1 * H2), transcendentals=0,
            bytes_accessed=(n_pad * C * 2 + C * H1 * 2 + H1 * H2 * 2
                            + nt * 2 * H2 * 4)),
    )(xb, w1b, scale1, shift1, w2b)
    scale2, shift2 = _bn_scale_shift(stats2[:, 0, :].sum(0),
                                     stats2[:, 1, :].sum(0), N, g2, b2)

    # ---- pass 3: full forward per tile, lane-dense padded output ------------
    out_pad = pl.pallas_call(
        _final_kernel,
        out_shape=jax.ShapeDtypeStruct((n_pad, pad_cls), jnp.float32),
        grid_spec=pltpu.PrefetchScalarGridSpec(
            num_scalar_prefetch=0, grid=(nt,),
            in_specs=[x_spec, _const_spec((C, H1)),
                      _const_spec((1, H1)), _const_spec((1, H1)),
                      _const_spec((H1, H2)),
                      _const_spec((1, H2)), _const_spec((1, H2)),
                      _const_spec((H2, pad_cls)), _const_spec((1, pad_cls))],
            out_specs=pl.BlockSpec((tile_n, pad_cls), lambda i: (i, 0))),
        compiler_params=cparams,
        cost_estimate=pl.CostEstimate(
            flops=2 * n_pad * (C * H1 + H1 * H2 + H2 * pad_cls),
            transcendentals=0,
            bytes_accessed=(n_pad * C * 2 + C * H1 * 2 + H1 * H2 * 2
                            + H2 * pad_cls * 2 + n_pad * pad_cls * 4)),
    )(xb, w1b, scale1, shift1, w2b, scale2, shift2, wcb, bcp)

    return out_pad[:N, :num_classes].astype(x.dtype)


# --------------------------------------------------------------------------
# Reference (same bf16-MXU / fp32-accumulate numerics, training-mode BN)
# --------------------------------------------------------------------------
def _bn_ref(h, g, b):
    m = h.mean(0, keepdims=True)
    v = ((h - m) ** 2).mean(0, keepdims=True)
    return (h - m) * jax.lax.rsqrt(v + BN_EPS) * g.reshape(1, -1) + b.reshape(1, -1)


def ref_forward(x, w1, g1, b1, w2, g2, b2, wc, bc):
    z1 = jnp.dot(x.astype(jnp.bfloat16), w1.astype(jnp.bfloat16),
                 preferred_element_type=jnp.float32)
    h1 = jnp.maximum(_bn_ref(z1, g1, b1), 0.0)
    z2 = jnp.dot(h1.astype(jnp.bfloat16), w2.astype(jnp.bfloat16),
                 preferred_element_type=jnp.float32)
    h2 = jnp.maximum(_bn_ref(z2, g2, b2), 0.0)
    return (jnp.dot(h2.astype(jnp.bfloat16), wc.astype(jnp.bfloat16),
                    preferred_element_type=jnp.float32) + bc.reshape(1, -1))


if __name__ == "__main__":
    # Small module-consistent shapes; N is NOT a multiple of the tile so the
    # ragged-tile masking path is exercised.
    N, C, H1, H2, NUM_CLASSES = 600, 32, 128, 768, 16

    key = jax.random.PRNGKey(0)
    kx, k1, k2, kc, kb = jax.random.split(key, 5)

    x = jax.random.normal(kx, (N, C), dtype=jnp.float32)

    # Weights stored as (in, out) so every layer is h @ W on the MXU.
    w1 = jax.random.normal(k1, (C, H1), jnp.float32) * (1.0 / jnp.sqrt(C))
    w2 = jax.random.normal(k2, (H1, H2), jnp.float32) * (1.0 / jnp.sqrt(H1))
    wc = jax.random.normal(kc, (H2, NUM_CLASSES), jnp.float32) * (1.0 / jnp.sqrt(H2))
    bc = jax.random.normal(kb, (NUM_CLASSES,), jnp.float32) * 0.01

    # BatchNorm affine params: PyTorch default init (gamma=1, beta=0).
    g1 = jnp.ones((H1,), jnp.float32)
    b1 = jnp.zeros((H1,), jnp.float32)
    g2 = jnp.ones((H2,), jnp.float32)
    b2 = jnp.zeros((H2,), jnp.float32)

    # TODO(synk): eval-mode BN (running stats) would skip the two stats passes;
    # this implements training-mode (batch-statistics) BN like the PyTorch
    # module in .train().
    out = auxiliary_head_ppi(x, w1, g1, b1, w2, g2, b2, wc, bc, tile_n=256)
    out = jax.block_until_ready(out)

    ref = ref_forward(x, w1, g1, b1, w2, g2, b2, wc, bc)
    assert out.shape == (N, NUM_CLASSES)
    assert jnp.allclose(out, ref, atol=2e-2, rtol=2e-2), "mismatch vs reference"

    print("KERNEL_OK")
</pallas_src>

<mosaic_0001>
module attributes {stable_mosaic.version = 11 : i64} {
  func.func @_stats1_kernel(%arg0: i32, %arg1: memref<256x32xbf16, #tpu.memory_space<vmem>>, %arg2: memref<32x128xbf16, #tpu.memory_space<vmem>>, %arg3: memref<1x2x128xf32, #tpu.memory_space<vmem>>) attributes {dimension_semantics = [#tpu.dimension_semantics<parallel>], iteration_bounds = array<i64: 3>, scalar_prefetch = 0 : i64, scratch_operands = 0 : i64, tpu.core_type = #tpu.core_type<tc>, window_params = [{transform_indices = @transform_0, window_bounds = array<i64: 256, 32>}, {pipeline_mode = #tpu.pipeline_mode<synchronous>, transform_indices = @transform_1, window_bounds = array<i64: 32, 128>}, {transform_indices = @transform_2, window_bounds = array<i64: 1, 2, 128>}]} {
    %c0 = arith.constant 0 : index
    %c0_0 = arith.constant 0 : index
    %0 = vector.load %arg1[%c0, %c0_0] : memref<256x32xbf16, #tpu.memory_space<vmem>>, vector<256x32xbf16>
    %c0_1 = arith.constant 0 : index
    %c0_2 = arith.constant 0 : index
    %1 = vector.load %arg2[%c0_1, %c0_2] : memref<32x128xbf16, #tpu.memory_space<vmem>>, vector<32x128xbf16>
    %cst = arith.constant dense<0.000000e+00> : vector<256x128xf32>
    %2 = tpu.matmul %0, %1, %cst {dimension_numbers = #tpu.dot_dimension_numbers<[1], [0], [0], [1], [0, 0, 1, 1], [], []>} : vector<256x32xbf16>, vector<32x128xbf16>, vector<256x128xf32> -> vector<256x128xf32>
    %cst_3 = arith.constant dense<0.000000e+00> : vector<128xf32>
    %3 = vector.multi_reduction <add>, %2, %cst_3 [0] : vector<256x128xf32> to vector<128xf32>
    %4 = vector.shape_cast %3 : vector<128xf32> to vector<1x128xf32>
    %5 = arith.mulf %2, %2 : vector<256x128xf32>
    %cst_4 = arith.constant dense<0.000000e+00> : vector<128xf32>
    %6 = vector.multi_reduction <add>, %5, %cst_4 [0] : vector<256x128xf32> to vector<128xf32>
    %7 = vector.shape_cast %6 : vector<128xf32> to vector<1x128xf32>
    %8 = tpu.concatenate %4, %7 in 0 : vector<1x128xf32>, vector<1x128xf32> -> vector<2x128xf32>
    %c0_5 = arith.constant 0 : index
    %c0_6 = arith.constant 0 : index
    %c0_7 = arith.constant 0 : index
    %9 = vector.load %arg3[%c0_5, %c0_6, %c0_7] : memref<1x2x128xf32, #tpu.memory_space<vmem>>, vector<1x2x128xf32>
    %10 = vector.shape_cast %9 : vector<1x2x128xf32> to vector<2x128xf32>
    %11 = vector.shape_cast %8 : vector<2x128xf32> to vector<1x2x128xf32>
    tpu.vector_store %arg3[%c0_5, %c0_6, %c0_7], %11 {strides = array<i32>} : memref<1x2x128xf32, #tpu.memory_space<vmem>>, vector<1x2x128xf32>,
    return
  }
  func.func @transform_0(%arg0: i32) -> (i32, i32) {
    %c0_i32 = arith.constant 0 : i32
    %c0_i32_0 = arith.constant 0 : i32
    return %arg0, %c0_i32 : i32, i32
  }
  func.func @transform_1(%arg0: i32) -> (i32, i32) {
    %c0_i32 = arith.constant 0 : i32
    %c0_i32_0 = arith.constant 0 : i32
    %c0_i32_1 = arith.constant 0 : i32
    return %c0_i32, %c0_i32_0 : i32, i32
  }
  func.func @transform_2(%arg0: i32) -> (i32, i32, i32) {
    %c0_i32 = arith.constant 0 : i32
    %c0_i32_0 = arith.constant 0 : i32
    %c0_i32_1 = arith.constant 0 : i32
    return %arg0, %c0_i32, %c0_i32_0 : i32, i32, i32
  }
}

module attributes {stable_mosaic.version = 11 : i64} {
  func.func @_stats2_kernel(%arg0: i32, %arg1: memref<256x32xbf16, #tpu.memory_space<vmem>>, %arg2: memref<32x128xbf16, #tpu.memory_space<vmem>>, %arg3: memref<1x128xf32, #tpu.memory_space<vmem>>, %arg4: memref<1x128xf32, #tpu.memory_space<vmem>>, %arg5: memref<128x768xbf16, #tpu.memory_space<vmem>>, %arg6: memref<1x2x768xf32, #tpu.memory_space<vmem>>) attributes {dimension_semantics = [#tpu.dimension_semantics<parallel>], iteration_bounds = array<i64: 3>, scalar_prefetch = 0 : i64, scratch_operands = 0 : i64, tpu.core_type = #tpu.core_type<tc>, window_params = [{transform_indices = @transform_0, window_bounds = array<i64: 256, 32>}, {pipeline_mode = #tpu.pipeline_mode<synchronous>, transform_indices = @transform_1, window_bounds = array<i64: 32, 128>}, {pipeline_mode = #tpu.pipeline_mode<synchronous>, transform_indices = @transform_2, window_bounds = array<i64: 1, 128>}, {pipeline_mode = #tpu.pipeline_mode<synchronous>, transform_indices = @transform_3, window_bounds = array<i64: 1, 128>}, {pipeline_mode = #tpu.pipeline_mode<synchronous>, transform_indices = @transform_4, window_bounds = array<i64: 128, 768>}, {transform_indices = @transform_5, window_bounds = array<i64: 1, 2, 768>}]} {
    %c0 = arith.constant 0 : index
    %c0_0 = arith.constant 0 : index
    %0 = vector.load %arg1[%c0, %c0_0] : memref<256x32xbf16, #tpu.memory_space<vmem>>, vector<256x32xbf16>
    %c0_1 = arith.constant 0 : index
    %c0_2 = arith.constant 0 : index
    %1 = vector.load %arg2[%c0_1, %c0_2] : memref<32x128xbf16, #tpu.memory_space<vmem>>, vector<32x128xbf16>
    %cst = arith.constant dense<0.000000e+00> : vector<256x128xf32>
    %2 = tpu.matmul %0, %1, %cst {dimension_numbers = #tpu.dot_dimension_numbers<[1], [0], [0], [1], [0, 0, 1, 1], [], []>} : vector<256x32xbf16>, vector<32x128xbf16>, vector<256x128xf32> -> vector<256x128xf32>
    %c0_3 = arith.constant 0 : index
    %c0_4 = arith.constant 0 : index
    %3 = vector.load %arg3[%c0_3, %c0_4] : memref<1x128xf32, #tpu.memory_space<vmem>>, vector<1x128xf32>
    %4 = vector.broadcast %3 : vector<1x128xf32> to vector<256x128xf32>
    %5 = arith.mulf %2, %4 : vector<256x128xf32>
    %c0_5 = arith.constant 0 : index
    %c0_6 = arith.constant 0 : index
    %6 = vector.load %arg4[%c0_5, %c0_6] : memref<1x128xf32, #tpu.memory_space<vmem>>, vector<1x128xf32>
    %7 = vector.broadcast %6 : vector<1x128xf32> to vector<256x128xf32>
    %8 = arith.addf %5, %7 : vector<256x128xf32>
    %cst_7 = arith.constant 0.000000e+00 : f32
    %9 = vector.broadcast %cst_7 : f32 to vector<256x128xf32>
    %10 = arith.maximumf %8, %9 : vector<256x128xf32>
    %11 = tpu.iota {dimensions = array<i32: 0>} : vector<256x128xi32>
    %c256_i32 = arith.constant 256 : i32
    %12 = arith.muli %arg0, %c256_i32 : i32
    %13 = vector.broadcast %12 : i32 to vector<256x128xi32>
    %14 = arith.addi %11, %13 : vector<256x128xi32>
    %c600_i32 = arith.constant 600 : i32
    %15 = vector.broadcast %c600_i32 : i32 to vector<256x128xi32>
    %16 = arith.cmpi slt, %14, %15 : vector<256x128xi32>
    %cst_8 = arith.constant 0.000000e+00 : f32
    %17 = vector.broadcast %cst_8 : f32 to vector<256x128xf32>
    %18 = arith.select %16, %10, %17 : vector<256x128xi1>, vector<256x128xf32>
    %19 = arith.truncf %18 : vector<256x128xf32> to vector<256x128xbf16>
    %c0_9 = arith.constant 0 : index
    %c0_10 = arith.constant 0 : index
    %20 = vector.load %arg5[%c0_9, %c0_10] : memref<128x768xbf16, #tpu.memory_space<vmem>>, vector<128x768xbf16>
    %cst_11 = arith.constant dense<0.000000e+00> : vector<256x768xf32>
    %21 = tpu.matmul %19, %20, %cst_11 {dimension_numbers = #tpu.dot_dimension_numbers<[1], [0], [0], [1], [0, 0, 1, 1], [], []>} : vector<256x128xbf16>, vector<128x768xbf16>, vector<256x768xf32> -> vector<256x768xf32>
    %cst_12 = arith.constant dense<0.000000e+00> : vector<768xf32>
    %22 = vector.multi_reduction <add>, %21, %cst_12 [0] : vector<256x768xf32> to vector<768xf32>
    %23 = vector.shape_cast %22 : vector<768xf32> to vector<1x768xf32>
    %24 = arith.mulf %21, %21 : vector<256x768xf32>
    %cst_13 = arith.constant dense<0.000000e+00> : vector<768xf32>
    %25 = vector.multi_reduction <add>, %24, %cst_13 [0] : vector<256x768xf32> to vector<768xf32>
    %26 = vector.shape_cast %25 : vector<768xf32> to vector<1x768xf32>
    %27 = tpu.concatenate %23, %26 in 0 : vector<1x768xf32>, vector<1x768xf32> -> vector<2x768xf32>
    %c0_14 = arith.constant 0 : index
    %c0_15 = arith.constant 0 : index
    %c0_16 = arith.constant 0 : index
    %28 = vector.load %arg6[%c0_14, %c0_15, %c0_16] : memref<1x2x768xf32, #tpu.memory_space<vmem>>, vector<1x2x768xf32>
    %29 = vector.shape_cast %28 : vector<1x2x768xf32> to vector<2x768xf32>
    %30 = vector.shape_cast %27 : vector<2x768xf32> to vector<1x2x768xf32>
    tpu.vector_store %arg6[%c0_14, %c0_15, %c0_16], %30 {strides = array<i32>} : memref<1x2x768xf32, #tpu.memory_space<vmem>>, vector<1x2x768xf32>,
    return
  }
  func.func @transform_0(%arg0: i32) -> (i32, i32) {
    %c0_i32 = arith.constant 0 : i32
    %c0_i32_0 = arith.constant 0 : i32
    return %arg0, %c0_i32 : i32, i32
  }
  func.func @transform_1(%arg0: i32) -> (i32, i32) {
    %c0_i32 = arith.constant 0 : i32
    %c0_i32_0 = arith.constant 0 : i32
    %c0_i32_1 = arith.constant 0 : i32
    return %c0_i32, %c0_i32_0 : i32, i32
  }
  func.func @transform_2(%arg0: i32) -> (i32, i32) {
    %c0_i32 = arith.constant 0 : i32
    %c0_i32_0 = arith.constant 0 : i32
    %c0_i32_1 = arith.constant 0 : i32
    return %c0_i32, %c0_i32_0 : i32, i32
  }
  func.func @transform_3(%arg0: i32) -> (i32, i32) {
    %c0_i32 = arith.constant 0 : i32
    %c0_i32_0 = arith.constant 0 : i32
    %c0_i32_1 = arith.constant 0 : i32
    return %c0_i32, %c0_i32_0 : i32, i32
  }
  func.func @transform_4(%arg0: i32) -> (i32, i32) {
    %c0_i32 = arith.constant 0 : i32
    %c0_i32_0 = arith.constant 0 : i32
    %c0_i32_1 = arith.constant 0 : i32
    return %c0_i32, %c0_i32_0 : i32, i32
  }
  func.func @transform_5(%arg0: i32) -> (i32, i32, i32) {
    %c0_i32 = arith.constant 0 : i32
    %c0_i32_0 = arith.constant 0 : i32
    %c0_i32_1 = arith.constant 0 : i32
    return %arg0, %c0_i32, %c0_i32_0 : i32, i32, i32
  }
}

module attributes {stable_mosaic.version = 11 : i64} {
  func.func @_final_kernel(%arg0: i32, %arg1: memref<256x32xbf16, #tpu.memory_space<vmem>>, %arg2: memref<32x128xbf16, #tpu.memory_space<vmem>>, %arg3: memref<1x128xf32, #tpu.memory_space<vmem>>, %arg4: memref<1x128xf32, #tpu.memory_space<vmem>>, %arg5: memref<128x768xbf16, #tpu.memory_space<vmem>>, %arg6: memref<1x768xf32, #tpu.memory_space<vmem>>, %arg7: memref<1x768xf32, #tpu.memory_space<vmem>>, %arg8: memref<768x128xbf16, #tpu.memory_space<vmem>>, %arg9: memref<1x128xf32, #tpu.memory_space<vmem>>, %arg10: memref<256x128xf32, #tpu.memory_space<vmem>>) attributes {dimension_semantics = [#tpu.dimension_semantics<parallel>], iteration_bounds = array<i64: 3>, scalar_prefetch = 0 : i64, scratch_operands = 0 : i64, tpu.core_type = #tpu.core_type<tc>, window_params = [{transform_indices = @transform_0, window_bounds = array<i64: 256, 32>}, {pipeline_mode = #tpu.pipeline_mode<synchronous>, transform_indices = @transform_1, window_bounds = array<i64: 32, 128>}, {pipeline_mode = #tpu.pipeline_mode<synchronous>, transform_indices = @transform_2, window_bounds = array<i64: 1, 128>}, {pipeline_mode = #tpu.pipeline_mode<synchronous>, transform_indices = @transform_3, window_bounds = array<i64: 1, 128>}, {pipeline_mode = #tpu.pipeline_mode<synchronous>, transform_indices = @transform_4, window_bounds = array<i64: 128, 768>}, {pipeline_mode = #tpu.pipeline_mode<synchronous>, transform_indices = @transform_5, window_bounds = array<i64: 1, 768>}, {pipeline_mode = #tpu.pipeline_mode<synchronous>, transform_indices = @transform_6, window_bounds = array<i64: 1, 768>}, {pipeline_mode = #tpu.pipeline_mode<synchronous>, transform_indices = @transform_7, window_bounds = array<i64: 768, 128>}, {pipeline_mode = #tpu.pipeline_mode<synchronous>, transform_indices = @transform_8, window_bounds = array<i64: 1, 128>}, {transform_indices = @transform_9, window_bounds = array<i64: 256, 128>}]} {
    %c0 = arith.constant 0 : index
    %c0_0 = arith.constant 0 : index
    %0 = vector.load %arg1[%c0, %c0_0] : memref<256x32xbf16, #tpu.memory_space<vmem>>, vector<256x32xbf16>
    %c0_1 = arith.constant 0 : index
    %c0_2 = arith.constant 0 : index
    %1 = vector.load %arg2[%c0_1, %c0_2] : memref<32x128xbf16, #tpu.memory_space<vmem>>, vector<32x128xbf16>
    %cst = arith.constant dense<0.000000e+00> : vector<256x128xf32>
    %2 = tpu.matmul %0, %1, %cst {dimension_numbers = #tpu.dot_dimension_numbers<[1], [0], [0], [1], [0, 0, 1, 1], [], []>} : vector<256x32xbf16>, vector<32x128xbf16>, vector<256x128xf32> -> vector<256x128xf32>
    %c0_3 = arith.constant 0 : index
    %c0_4 = arith.constant 0 : index
    %3 = vector.load %arg3[%c0_3, %c0_4] : memref<1x128xf32, #tpu.memory_space<vmem>>, vector<1x128xf32>
    %4 = vector.broadcast %3 : vector<1x128xf32> to vector<256x128xf32>
    %5 = arith.mulf %2, %4 : vector<256x128xf32>
    %c0_5 = arith.constant 0 : index
    %c0_6 = arith.constant 0 : index
    %6 = vector.load %arg4[%c0_5, %c0_6] : memref<1x128xf32, #tpu.memory_space<vmem>>, vector<1x128xf32>
    %7 = vector.broadcast %6 : vector<1x128xf32> to vector<256x128xf32>
    %8 = arith.addf %5, %7 : vector<256x128xf32>
    %cst_7 = arith.constant 0.000000e+00 : f32
    %9 = vector.broadcast %cst_7 : f32 to vector<256x128xf32>
    %10 = arith.maximumf %8, %9 : vector<256x128xf32>
    %11 = arith.truncf %10 : vector<256x128xf32> to vector<256x128xbf16>
    %c0_8 = arith.constant 0 : index
    %c0_9 = arith.constant 0 : index
    %12 = vector.load %arg5[%c0_8, %c0_9] : memref<128x768xbf16, #tpu.memory_space<vmem>>, vector<128x768xbf16>
    %cst_10 = arith.constant dense<0.000000e+00> : vector<256x768xf32>
    %13 = tpu.matmul %11, %12, %cst_10 {dimension_numbers = #tpu.dot_dimension_numbers<[1], [0], [0], [1], [0, 0, 1, 1], [], []>} : vector<256x128xbf16>, vector<128x768xbf16>, vector<256x768xf32> -> vector<256x768xf32>
    %c0_11 = arith.constant 0 : index
    %c0_12 = arith.constant 0 : index
    %14 = vector.load %arg6[%c0_11, %c0_12] : memref<1x768xf32, #tpu.memory_space<vmem>>, vector<1x768xf32>
    %15 = vector.broadcast %14 : vector<1x768xf32> to vector<256x768xf32>
    %16 = arith.mulf %13, %15 : vector<256x768xf32>
    %c0_13 = arith.constant 0 : index
    %c0_14 = arith.constant 0 : index
    %17 = vector.load %arg7[%c0_13, %c0_14] : memref<1x768xf32, #tpu.memory_space<vmem>>, vector<1x768xf32>
    %18 = vector.broadcast %17 : vector<1x768xf32> to vector<256x768xf32>
    %19 = arith.addf %16, %18 : vector<256x768xf32>
    %cst_15 = arith.constant 0.000000e+00 : f32
    %20 = vector.broadcast %cst_15 : f32 to vector<256x768xf32>
    %21 = arith.maximumf %19, %20 : vector<256x768xf32>
    %22 = arith.truncf %21 : vector<256x768xf32> to vector<256x768xbf16>
    %c0_16 = arith.constant 0 : index
    %c0_17 = arith.constant 0 : index
    %23 = vector.load %arg8[%c0_16, %c0_17] : memref<768x128xbf16, #tpu.memory_space<vmem>>, vector<768x128xbf16>
    %cst_18 = arith.constant dense<0.000000e+00> : vector<256x128xf32>
    %24 = tpu.matmul %22, %23, %cst_18 {dimension_numbers = #tpu.dot_dimension_numbers<[1], [0], [0], [1], [0, 0, 1, 1], [], []>} : vector<256x768xbf16>, vector<768x128xbf16>, vector<256x128xf32> -> vector<256x128xf32>
    %c0_19 = arith.constant 0 : index
    %c0_20 = arith.constant 0 : index
    %25 = vector.load %arg9[%c0_19, %c0_20] : memref<1x128xf32, #tpu.memory_space<vmem>>, vector<1x128xf32>
    %26 = vector.broadcast %25 : vector<1x128xf32> to vector<256x128xf32>
    %27 = arith.addf %24, %26 : vector<256x128xf32>
    %c0_21 = arith.constant 0 : index
    %c0_22 = arith.constant 0 : index
    %28 = vector.load %arg10[%c0_21, %c0_22] : memref<256x128xf32, #tpu.memory_space<vmem>>, vector<256x128xf32>
    tpu.vector_store %arg10[%c0_21, %c0_22], %27 {strides = array<i32>} : memref<256x128xf32, #tpu.memory_space<vmem>>, vector<256x128xf32>,
    return
  }
  func.func @transform_0(%arg0: i32) -> (i32, i32) {
    %c0_i32 = arith.constant 0 : i32
    %c0_i32_0 = arith.constant 0 : i32
    return %arg0, %c0_i32 : i32, i32
  }
  func.func @transform_1(%arg0: i32) -> (i32, i32) {
    %c0_i32 = arith.constant 0 : i32
    %c0_i32_0 = arith.constant 0 : i32
    %c0_i32_1 = arith.constant 0 : i32
    return %c0_i32, %c0_i32_0 : i32, i32
  }
  func.func @transform_2(%arg0: i32) -> (i32, i32) {
    %c0_i32 = arith.constant 0 : i32
    %c0_i32_0 = arith.constant 0 : i32
    %c0_i32_1 = arith.constant 0 : i32
    return %c0_i32, %c0_i32_0 : i32, i32
  }
  func.func @transform_3(%arg0: i32) -> (i32, i32) {
    %c0_i32 = arith.constant 0 : i32
    %c0_i32_0 = arith.constant 0 : i32
    %c0_i32_1 = arith.constant 0 : i32
    return %c0_i32, %c0_i32_0 : i32, i32
  }
  func.func @transform_4(%arg0: i32) -> (i32, i32) {
    %c0_i32 = arith.constant 0 : i32
    %c0_i32_0 = arith.constant 0 : i32
    %c0_i32_1 = arith.constant 0 : i32
    return %c0_i32, %c0_i32_0 : i32, i32
  }
  func.func @transform_5(%arg0: i32) -> (i32, i32) {
    %c0_i32 = arith.constant 0 : i32
    %c0_i32_0 = arith.constant 0 : i32
    %c0_i32_1 = arith.constant 0 : i32
    return %c0_i32, %c0_i32_0 : i32, i32
  }
  func.func @transform_6(%arg0: i32) -> (i32, i32) {
    %c0_i32 = arith.constant 0 : i32
    %c0_i32_0 = arith.constant 0 : i32
    %c0_i32_1 = arith.constant 0 : i32
    return %c0_i32, %c0_i32_0 : i32, i32
  }
  func.func @transform_7(%arg0: i32) -> (i32, i32) {
    %c0_i32 = arith.constant 0 : i32
    %c0_i32_0 = arith.constant 0 : i32
    %c0_i32_1 = arith.constant 0 : i32
    return %c0_i32, %c0_i32_0 : i32, i32
  }
  func.func @transform_8(%arg0: i32) -> (i32, i32) {
    %c0_i32 = arith.constant 0 : i32
    %c0_i32_0 = arith.constant 0 : i32
    %c0_i32_1 = arith.constant 0 : i32
    return %c0_i32, %c0_i32_0 : i32, i32
  }
  func.func @transform_9(%arg0: i32) -> (i32, i32) {
    %c0_i32 = arith.constant 0 : i32
    %c0_i32_0 = arith.constant 0 : i32
    return %arg0, %c0_i32 : i32, i32
  }
}

</mosaic_0001>

<llo_original>
// kernel: auxiliary_head_ppi.3
$region0: #{auxiliary_head_ppi.3}
  #allocation0 [shape = 'u32[]', space=smem, size = 0x4, offset = 0x4, fixed_abs, tag = 'smem constant byte address 0x4 - core index']
  #allocation1 [shape = 'u32[144,128]{1,0:T(1,128)}', space=vmem, size = 0x12000, scoped, tag = 'internal scratch']
  %s0 = inlined_call_operand.vmem [shape: bf16[768,32], index: 0, kind: input, shape index: {}]
  %s1 = inlined_call_operand.vmem [shape: bf16[32,128], index: 1, kind: input, shape index: {}]
  %s2 = inlined_call_operand.vmem [shape: f32[3,2,128], index: 2, kind: output, shape index: {}]
  %s3 = sld [smem:[#allocation0]]
  $region41: #{auxiliary_head_ppi.3} parent=0
    _
  %s5 = ssub.s32 1, %s3
  %s6 = scalar_select 0, %s5, %s3
  loop: start=0, step=1, limit=5
  $region2: #{auxiliary_head_ppi.3} parent=0 // loop_pre_header
    _
  $region3: #{auxiliary_head_ppi.3} parent=0 // loop_header
    %s8 = sphi 0, %s12
    %p9 = scmp.ge.s32.totalorder %s8, 5
    %s18 = sphi 0, %s20
    %s21 = sphi 0, %s18
    %s22 = sphi 0, %s21
    %s38 = sphi 0, %s22
    %s42 = sphi 0, %s42
    %s44 = sphi 0, %s42
    %s45 = sphi 0, %s44
    %s59 = sphi 0, %s45
    %s65 = sphi 0, %s67
    %s68 = sphi 0, %s65
    %s69 = sphi 0, %s68
    %s85 = sphi 0, %s69
  $region4: #{auxiliary_head_ppi.3} parent=0 // loop_header_branch
    %11 = sbr.rel (%p9) target = $region8
  $region5: #{auxiliary_head_ppi.3} parent=0 // loop_body
    %s13 = ssub.s32 %s8, 1
    %s14 = ssub.s32 %s8, 2
    %s15 = sadd.s32 %s8, 1
    %s16 = ssub.s32 %s8, %s15
    %p17 = scmp.eq.s32.totalorder %s16, 0
    %s19 = sadd.s32 %s18, 1
    %s20 = scalar_select %p17, %s18, %s19
    %p23 = pneg %p17
    %p24 = scmp.eq.s32.totalorder %s8, 2
    %p25 = por %p23, %p24
    %p26 = scmp.ne.s32.totalorder %s18, %s21
    %p27 = scmp.eq.s32.totalorder %s8, 0
    %p28 = por %p26, %p27
    %p29 = scmp.ne.s32.totalorder %s18, %s21
    %p30 = scmp.eq.s32.totalorder %s13, 2
    %p31 = por %p29, %p30
    %p32 = scmp.ne.s32.totalorder %s21, %s22
    %p33 = scmp.eq.s32.totalorder %s13, 0
    %p34 = por %p32, %p33
    %p35 = scmp.ne.s32.totalorder %s21, %s22
    %p36 = scmp.eq.s32.totalorder %s14, 2
    %p37 = por %p35, %p36
    %p39 = scmp.ne.s32.totalorder %s22, %s38
    %p40 = scmp.eq.s32.totalorder %s14, 0
    %p41 = por %p39, %p40
    %s43 = sadd.s32 %s42, 1
    %p46 = scmp.eq.s32.totalorder %s8, 2
    %p47 = scmp.ne.s32.totalorder %s42, %s44
    %p48 = scmp.eq.s32.totalorder %s8, 0
    %p49 = por %p47, %p48
    %p50 = scmp.ne.s32.totalorder %s42, %s44
    %p51 = scmp.eq.s32.totalorder %s13, 2
    %p52 = por %p50, %p51
    %p53 = scmp.ne.s32.totalorder %s44, %s45
    %p54 = scmp.eq.s32.totalorder %s13, 0
    %p55 = por %p53, %p54
    %p56 = scmp.ne.s32.totalorder %s44, %s45
    %p57 = scmp.eq.s32.totalorder %s14, 2
    %p58 = por %p56, %p57
    %p60 = scmp.ne.s32.totalorder %s45, %s59
    %p61 = scmp.eq.s32.totalorder %s14, 0
    %p62 = por %p60, %p61
    %s63 = ssub.s32 %s8, %s15
    %p64 = scmp.eq.s32.totalorder %s63, 0
    %s66 = sadd.s32 %s65, 1
    %s67 = scalar_select %p64, %s65, %s66
    %p70 = pneg %p64
    %p71 = scmp.eq.s32.totalorder %s8, 2
    %p72 = por %p70, %p71
    %p73 = scmp.ne.s32.totalorder %s65, %s68
    %p74 = scmp.eq.s32.totalorder %s8, 0
    %p75 = por %p73, %p74
    %p76 = scmp.ne.s32.totalorder %s65, %s68
    %p77 = scmp.eq.s32.totalorder %s13, 2
    %p78 = por %p76, %p77
    %p79 = scmp.ne.s32.totalorder %s68, %s69
    %p80 = scmp.eq.s32.totalorder %s13, 0
    %p81 = por %p79, %p80
    %p82 = scmp.ne.s32.totalorder %s68, %s69
    %p83 = scmp.eq.s32.totalorder %s14, 2
    %p84 = por %p82, %p83
    %p86 = scmp.ne.s32.totalorder %s69, %s85
    %p87 = scmp.eq.s32.totalorder %s14, 0
    %p88 = por %p86, %p87
    %p89 = scmp.le.s32.totalorder 1, %s8
    %p90 = scmp.lt.s32.totalorder %s8, 4
    %p91 = pnand %p89, %p90
    %p92 = pneg %p91
    // Predicated region
    $region9: #{auxiliary_head_ppi.3} parent=5 // pred_check
      _
    $region10: #{auxiliary_head_ppi.3} parent=5 // pred_check_branch
      %94 = sbr.rel (%p91) target = $region12
    $region11: #{auxiliary_head_ppi.3} parent=5 // pred_region
      %s95 = ssub.s32 %s8, 1
      // Predicated region
      $region13: #{auxiliary_head_ppi.3} parent=11 // pred_check
        %p96 = pneg %p55
      $region14: #{auxiliary_head_ppi.3} parent=11 // pred_check_branch
        %98 = sbr.rel (%p96) target = $region16
      $region15: #{auxiliary_head_ppi.3} parent=11 // pred_region
        _
      $region16: #{auxiliary_head_ppi.3} parent=11 // pred_fallthru
        _
    $region12: #{auxiliary_head_ppi.3} parent=5 // pred_fallthru
      _
    %p99 = scmp.lt.s32.totalorder %s8, 3
    // Predicated region
    $region17: #{auxiliary_head_ppi.3} parent=5 // pred_check
      %p100 = pneg %p99
    $region18: #{auxiliary_head_ppi.3} parent=5 // pred_check_branch
      %102 = sbr.rel (%p100) target = $region20
    $region19: #{auxiliary_head_ppi.3} parent=5 // pred_region
      // Predicated region
      $region21: #{auxiliary_head_ppi.3} parent=19 // pred_check
        %p103 = pneg %p28
      $region22: #{auxiliary_head_ppi.3} parent=19 // pred_check_branch
        %105 = sbr.rel (%p103) target = $region24
      $region23: #{auxiliary_head_ppi.3} parent=19 // pred_region
        %s106 = smul.u32 32, %s8
        %p107 = scmp.lt.s32.totalorder %s106, 95
        %s108 = scalar_select %p107, %s106, 95
        %s109 = smul.addr %s108, 4
        %s110 = scalar_lea.vmem %s0, %s109
        %s111 = smul.u32 32, %s8
      $region24: #{auxiliary_head_ppi.3} parent=19 // pred_fallthru
        _
    $region20: #{auxiliary_head_ppi.3} parent=5 // pred_fallthru
      _
    %p112 = scmp.le.s32.totalorder 1, %s8
    %p113 = scmp.lt.s32.totalorder %s8, 4
    %p114 = pnand %p112, %p113
    %p115 = pneg %p114
    // Predicated region
    $region25: #{auxiliary_head_ppi.3} parent=5 // pred_check
      _
    $region26: #{auxiliary_head_ppi.3} parent=5 // pred_check_branch
      %117 = sbr.rel (%p114) target = $region28
    $region27: #{auxiliary_head_ppi.3} parent=5 // pred_region
      %s118 = ssub.s32 %s8, 1
      %s119 = smul.u32 32, %s13
      %p120 = scmp.lt.s32.totalorder %s119, 95
      %s121 = scalar_select %p120, %s119, 95
      %s122 = smul.addr %s121, 4
      %s123 = scalar_lea.vmem %s0, %s122
      %p124 = pneg %p34
      %p125 = pneg %p31
      %p126 = pneg %p55
      %p127 = pneg %p52
      %p128 = pneg %p81
      %p129 = pneg %p78
      %p130 = scmp.lt.s32.totalorder %s13, 2
      %s131 = scalar_select %p130, %s13, 2
      %s132 = smul.addr %s131, 2
      %s133 = scalar_lea.vmem %s2, %s132
      %s134 = smul.u32 32, %s13
      %p135 = scmp.lt.s32.totalorder %s134, 95
      %s136 = scalar_select %p135, %s134, 95
      %s137 = smul.addr %s136, 4
      %s138 = scalar_lea.vmem %s0, %s137
      %s139 = smul.u32 32, %s13
      %p140 = scmp.lt.s32.totalorder %s13, 2
      %s141 = scalar_select %p140, %s13, 2
      %s142 = smul.addr %s141, 2
      %s143 = scalar_lea.vmem %s2, %s142
      %v145 = vld [vmem:[%s138] sm:$0xf]
      %v146 = vld [vmem:[%s138 + $0x4] sm:$0xf]
      %v147 = vld [vmem:[%s138 + $0x8] sm:$0xf]
      %v148 = vld [vmem:[%s138 + $0xc] sm:$0xf]
      %v149 = vld [vmem:[%s138 + $0x10] sm:$0xf]
      %v150 = vld [vmem:[%s138 + $0x14] sm:$0xf]
      %v151 = vld [vmem:[%s138 + $0x18] sm:$0xf]
      %v152 = vld [vmem:[%s138 + $0x1c] sm:$0xf]
      %v153 = vld [vmem:[%s138 + $0x20] sm:$0xf]
      %v154 = vld [vmem:[%s138 + $0x24] sm:$0xf]
      %v155 = vld [vmem:[%s138 + $0x28] sm:$0xf]
      %v156 = vld [vmem:[%s138 + $0x2c] sm:$0xf]
      %v157 = vld [vmem:[%s138 + $0x30] sm:$0xf]
      %v158 = vld [vmem:[%s138 + $0x34] sm:$0xf]
      %v159 = vld [vmem:[%s138 + $0x38] sm:$0xf]
      %v160 = vld [vmem:[%s138 + $0x3c] sm:$0xf]
      %v161 = vld [vmem:[%s138 + $0x40] sm:$0xf]
      %v162 = vld [vmem:[%s138 + $0x44] sm:$0xf]
      %v163 = vld [vmem:[%s138 + $0x48] sm:$0xf]
      %v164 = vld [vmem:[%s138 + $0x4c] sm:$0xf]
      %v165 = vld [vmem:[%s138 + $0x50] sm:$0xf]
      %v166 = vld [vmem:[%s138 + $0x54] sm:$0xf]
      %v167 = vld [vmem:[%s138 + $0x58] sm:$0xf]
      %v168 = vld [vmem:[%s138 + $0x5c] sm:$0xf]
      %v169 = vld [vmem:[%s138 + $0x60] sm:$0xf]
      %v170 = vld [vmem:[%s138 + $0x64] sm:$0xf]
      %v171 = vld [vmem:[%s138 + $0x68] sm:$0xf]
      %v172 = vld [vmem:[%s138 + $0x6c] sm:$0xf]
      %v173 = vld [vmem:[%s138 + $0x70] sm:$0xf]
      %v174 = vld [vmem:[%s138 + $0x74] sm:$0xf]
      %v175 = vld [vmem:[%s138 + $0x78] sm:$0xf]
      %v176 = vld [vmem:[%s138 + $0x7c] sm:$0xf]
      %v177 = vld [vmem:[%s1] sm:$0xf]
      %v178 = vld [vmem:[%s1 + $0x4] sm:$0xf]
      %v179 = vld [vmem:[%s1 + $0x8] sm:$0xf]
      %v180 = vld [vmem:[%s1 + $0xc] sm:$0xf]
      %v213 = vunpack.c.l.b16 %v145
      %v214 = vunpack.c.l.b16 %v146
      %v215 = vunpack.c.l.b16 %v147
      %v216 = vunpack.c.l.b16 %v148
      %v217 = vunpack.c.l.b16 %v149
      %v218 = vunpack.c.l.b16 %v150
      %v219 = vunpack.c.l.b16 %v151
      %v220 = vunpack.c.l.b16 %v152
      %v221 = vunpack.c.l.b16 %v153
      %v222 = vunpack.c.l.b16 %v154
      %v223 = vunpack.c.l.b16 %v155
      %v224 = vunpack.c.l.b16 %v156
      %v225 = vunpack.c.l.b16 %v157
      %v226 = vunpack.c.l.b16 %v158
      %v227 = vunpack.c.l.b16 %v159
      %v228 = vunpack.c.l.b16 %v160
      %v229 = vunpack.c.l.b16 %v161
      %v230 = vunpack.c.l.b16 %v162
      %v231 = vunpack.c.l.b16 %v163
      %v232 = vunpack.c.l.b16 %v164
      %v233 = vunpack.c.l.b16 %v165
      %v234 = vunpack.c.l.b16 %v166
      %v235 = vunpack.c.l.b16 %v167
      %v236 = vunpack.c.l.b16 %v168
      %v237 = vunpack.c.l.b16 %v169
      %v238 = vunpack.c.l.b16 %v170
      %v239 = vunpack.c.l.b16 %v171
      %v240 = vunpack.c.l.b16 %v172
      %v241 = vunpack.c.l.b16 %v173
      %v242 = vunpack.c.l.b16 %v174
      %v243 = vunpack.c.l.b16 %v175
      %v244 = vunpack.c.l.b16 %v176
      %v245 = vpack.c.b16 %v214, %v213
      %v246 = vpack.c.b16 %v216, %v215
      %v247 = vpack.c.b16 %v218, %v217
      %v248 = vpack.c.b16 %v220, %v219
      %v249 = vpack.c.b16 %v222, %v221
      %v250 = vpack.c.b16 %v224, %v223
      %v251 = vpack.c.b16 %v226, %v225
      %v252 = vpack.c.b16 %v228, %v227
      %v253 = vpack.c.b16 %v230, %v229
      %v254 = vpack.c.b16 %v232, %v231
      %v255 = vpack.c.b16 %v234, %v233
      %v256 = vpack.c.b16 %v236, %v235
      %v257 = vpack.c.b16 %v238, %v237
      %v258 = vpack.c.b16 %v240, %v239
      %v259 = vpack.c.b16 %v242, %v241
      %v260 = vpack.c.b16 %v244, %v243
      %v265 = vunpack.c.l.b16 %v177
      %v266 = vunpack.c.l.b16 %v178
      %v267 = vunpack.c.l.b16 %v179
      %v268 = vunpack.c.l.b16 %v180
      %v269 = vpack.c.b16 %v266, %v265
      %v270 = vpack.c.b16 %v268, %v267
      %vm273 = vcmask 261120
      %v275 = vsel %vm273, %v245, 0
      %v278 = vsel %vm273, %v246, 0
      %v281 = vsel %vm273, %v247, 0
      %v284 = vsel %vm273, %v248, 0
      %v287 = vsel %vm273, %v249, 0
      %v290 = vsel %vm273, %v250, 0
      %v293 = vsel %vm273, %v251, 0
      %v296 = vsel %vm273, %v252, 0
      %v299 = vsel %vm273, %v253, 0
      %v302 = vsel %vm273, %v254, 0
      %v305 = vsel %vm273, %v255, 0
      %v308 = vsel %vm273, %v256, 0
      %v311 = vsel %vm273, %v257, 0
      %v314 = vsel %vm273, %v258, 0
      %v317 = vsel %vm273, %v259, 0
      %v320 = vsel %vm273, %v260, 0
      %322 = vmatprep.subr.bf16.mxu0 0
      %323 = vmatpush1.bf16.msra.mxu0 0
      %324 = vmatprep.subr.bf16.mxu0 0
      %325 = vmatpush1.bf16.msra.mxu0 0
      %326 = vmatprep.subr.bf16.mxu0 0
      %327 = vmatpush1.bf16.msra.mxu0 0
      %328 = vmatprep.subr.bf16.mxu0 0
      %329 = vmatpush1.bf16.msra.mxu0 0
      %330 = vmatprep.subr.bf16.mxu0 0
      %331 = vmatpush1.bf16.msra.mxu0 0
      %332 = vmatprep.subr.bf16.mxu0 0
      %333 = vmatpush1.bf16.msra.mxu0 0
      %334 = vmatprep.subr.bf16.mxu0 0
      %335 = vmatpush1.bf16.msra.mxu0 %v270
      %336 = vmatprep.subr.bf16.mxu0 0
      %337 = vmatpush1.bf16.msra.mxu0 %v269
      %338 = vmatprep.subr.bf16.mxu0 0
      %339 = vmatpush2.bf16.msra.mxu0 0
      %340 = vmatprep.subr.bf16.mxu0 0
      %341 = vmatpush2.bf16.msra.mxu0 0
      %342 = vmatprep.subr.bf16.mxu0 0
      %343 = vmatpush2.bf16.msra.mxu0 0
      %344 = vmatprep.subr.bf16.mxu0 0
      %345 = vmatpush2.bf16.msra.mxu0 0
      %346 = vmatprep.subr.bf16.mxu0 0
      %347 = vmatpush2.bf16.msra.mxu0 0
      %348 = vmatprep.subr.bf16.mxu0 0
      %349 = vmatpush2.bf16.msra.mxu0 0
      %350 = vmatprep.subr.bf16.mxu0 0
      %351 = vmatpush2.bf16.msra.mxu0 0
      %352 = vmatprep.subr.bf16.mxu0 0
      %353 = vmatpush2.bf16.msra.mxu0 0
      %354 = vmatprep.mubr.bf16.mxu0 0
      %355 = vmatmul.mubr.bf16.gmra.mxu0 %v275
      %v356 = vpop.f32.mrf.mxu0
      %v357 = vadd.f32 0.0, %v356
      %v358 = vpop.f32.mrf.mxu0
      %v359 = vpop.f32.mrf.mxu0
      %v360 = vadd.f32 0.0, %v359
      %v361 = vpop.f32.mrf.mxu0
      %362 = vmatprep.mubr.bf16.mxu0 0
      %363 = vmatmul.mubr.bf16.gmra.mxu0 %v278
      %v364 = vpop.f32.mrf.mxu0
      %v365 = vadd.f32 0.0, %v364
      %v366 = vpop.f32.mrf.mxu0
      %v367 = vpop.f32.mrf.mxu0
      %v368 = vadd.f32 0.0, %v367
      %v369 = vpop.f32.mrf.mxu0
      %370 = vmatprep.mubr.bf16.mxu0 0
      %371 = vmatmul.mubr.bf16.gmra.mxu0 %v281
      %v372 = vpop.f32.mrf.mxu0
      %v373 = vadd.f32 0.0, %v372
      %v374 = vpop.f32.mrf.mxu0
      %v375 = vpop.f32.mrf.mxu0
      %v376 = vadd.f32 0.0, %v375
      %v377 = vpop.f32.mrf.mxu0
      %378 = vmatprep.mubr.bf16.mxu0 0
      %379 = vmatmul.mubr.bf16.gmra.mxu0 %v284
      %v380 = vpop.f32.mrf.mxu0
      %v381 = vadd.f32 0.0, %v380
      %v382 = vpop.f32.mrf.mxu0
      %v383 = vpop.f32.mrf.mxu0
      %v384 = vadd.f32 0.0, %v383
      %v385 = vpop.f32.mrf.mxu0
      %386 = vmatprep.mubr.bf16.mxu0 0
      %387 = vmatmul.mubr.bf16.gmra.mxu0 %v287
      %v388 = vpop.f32.mrf.mxu0
      %v389 = vadd.f32 0.0, %v388
      %v390 = vpop.f32.mrf.mxu0
      %v391 = vpop.f32.mrf.mxu0
      %v392 = vadd.f32 0.0, %v391
      %v393 = vpop.f32.mrf.mxu0
      %394 = vmatprep.mubr.bf16.mxu0 0
      %395 = vmatmul.mubr.bf16.gmra.mxu0 %v290
      %v396 = vpop.f32.mrf.mxu0
      %v397 = vadd.f32 0.0, %v396
      %v398 = vpop.f32.mrf.mxu0
      %v399 = vpop.f32.mrf.mxu0
      %v400 = vadd.f32 0.0, %v399
      %v401 = vpop.f32.mrf.mxu0
      %402 = vmatprep.mubr.bf16.mxu0 0
      %403 = vmatmul.mubr.bf16.gmra.mxu0 %v293
      %v404 = vpop.f32.mrf.mxu0
      %v405 = vadd.f32 0.0, %v404
      %v406 = vpop.f32.mrf.mxu0
      %v407 = vpop.f32.mrf.mxu0
      %v408 = vadd.f32 0.0, %v407
      %v409 = vpop.f32.mrf.mxu0
      %410 = vmatprep.mubr.bf16.mxu0 0
      %411 = vmatmul.mubr.bf16.gmra.mxu0 %v296
      %v412 = vpop.f32.mrf.mxu0
      %v413 = vadd.f32 0.0, %v412
      %v414 = vpop.f32.mrf.mxu0
      %v415 = vpop.f32.mrf.mxu0
      %v416 = vadd.f32 0.0, %v415
      %v417 = vpop.f32.mrf.mxu0
      %418 = vmatprep.mubr.bf16.mxu0 0
      %419 = vmatmul.mubr.bf16.gmra.mxu0 %v299
      %v420 = vpop.f32.mrf.mxu0
      %v421 = vadd.f32 0.0, %v420
      %v422 = vpop.f32.mrf.mxu0
      %v423 = vpop.f32.mrf.mxu0
      %v424 = vadd.f32 0.0, %v423
      %v425 = vpop.f32.mrf.mxu0
      %426 = vmatprep.mubr.bf16.mxu0 0
      %427 = vmatmul.mubr.bf16.gmra.mxu0 %v302
      %v428 = vpop.f32.mrf.mxu0
      %v429 = vadd.f32 0.0, %v428
      %v430 = vpop.f32.mrf.mxu0
      %v431 = vpop.f32.mrf.mxu0
      %v432 = vadd.f32 0.0, %v431
      %v433 = vpop.f32.mrf.mxu0
      %434 = vmatprep.mubr.bf16.mxu0 0
      %435 = vmatmul.mubr.bf16.gmra.mxu0 %v305
      %v436 = vpop.f32.mrf.mxu0
      %v437 = vadd.f32 0.0, %v436
      %v438 = vpop.f32.mrf.mxu0
      %v439 = vpop.f32.mrf.mxu0
      %v440 = vadd.f32 0.0, %v439
      %v441 = vpop.f32.mrf.mxu0
      %442 = vmatprep.mubr.bf16.mxu0 0
      %443 = vmatmul.mubr.bf16.gmra.mxu0 %v308
      %v444 = vpop.f32.mrf.mxu0
      %v445 = vadd.f32 0.0, %v444
      %v446 = vpop.f32.mrf.mxu0
      %v447 = vpop.f32.mrf.mxu0
      %v448 = vadd.f32 0.0, %v447
      %v449 = vpop.f32.mrf.mxu0
      %450 = vmatprep.mubr.bf16.mxu0 0
      %451 = vmatmul.mubr.bf16.gmra.mxu0 %v311
      %v452 = vpop.f32.mrf.mxu0
      %v453 = vadd.f32 0.0, %v452
      %v454 = vpop.f32.mrf.mxu0
      %v455 = vpop.f32.mrf.mxu0
      %v456 = vadd.f32 0.0, %v455
      %v457 = vpop.f32.mrf.mxu0
      %458 = vmatprep.mubr.bf16.mxu0 0
      %459 = vmatmul.mubr.bf16.gmra.mxu0 %v314
      %v460 = vpop.f32.mrf.mxu0
      %v461 = vadd.f32 0.0, %v460
      %v462 = vpop.f32.mrf.mxu0
      %v463 = vpop.f32.mrf.mxu0
      %v464 = vadd.f32 0.0, %v463
      %v465 = vpop.f32.mrf.mxu0
      %466 = vmatprep.mubr.bf16.mxu0 0
      %467 = vmatmul.mubr.bf16.gmra.mxu0 %v317
      %v468 = vpop.f32.mrf.mxu0
      %v469 = vadd.f32 0.0, %v468
      %v470 = vpop.f32.mrf.mxu0
      %v471 = vpop.f32.mrf.mxu0
      %v472 = vadd.f32 0.0, %v471
      %v473 = vpop.f32.mrf.mxu0
      %474 = vmatprep.mubr.bf16.mxu0 0
      %475 = vmatmul.mubr.bf16.gmra.mxu0 %v320
      %v476 = vpop.f32.mrf.mxu0
      %v477 = vadd.f32 0.0, %v476
      %v478 = vpop.f32.mrf.mxu0
      %v479 = vpop.f32.mrf.mxu0
      %v480 = vadd.f32 0.0, %v479
      %v481 = vpop.f32.mrf.mxu0
      %482 = vdwg.mxu0
      %v483 = vadd.f32 %v357, %v360
      %v484 = vadd.f32 %v483, %v365
      %v485 = vadd.f32 %v484, %v368
      %v486 = vadd.f32 %v485, %v373
      %v487 = vadd.f32 %v486, %v376
      %v488 = vadd.f32 %v487, %v381
      %v489 = vadd.f32 %v488, %v384
      %v490 = vadd.f32 %v489, %v389
      %v491 = vadd.f32 %v490, %v392
      %v492 = vadd.f32 %v491, %v397
      %v493 = vadd.f32 %v492, %v400
      %v494 = vadd.f32 %v493, %v405
      %v495 = vadd.f32 %v494, %v408
      %v496 = vadd.f32 %v495, %v413
      %v497 = vadd.f32 %v496, %v416
      %v498 = vadd.f32 %v497, %v421
      %v499 = vadd.f32 %v498, %v424
      %v500 = vadd.f32 %v499, %v429
      %v501 = vadd.f32 %v500, %v432
      %v502 = vadd.f32 %v501, %v437
      %v503 = vadd.f32 %v502, %v440
      %v504 = vadd.f32 %v503, %v445
      %v505 = vadd.f32 %v504, %v448
      %v506 = vadd.f32 %v505, %v453
      %v507 = vadd.f32 %v506, %v456
      %v508 = vadd.f32 %v507, %v461
      %v509 = vadd.f32 %v508, %v464
      %v510 = vadd.f32 %v509, %v469
      %v511 = vadd.f32 %v510, %v472
      %v512 = vadd.f32 %v511, %v477
      %v513 = vadd.f32 %v512, %v480
      %v514 = vrot.slane %v513, 4
      %v515 = vadd.f32 %v513, %v514
      %v516 = vrot.slane %v515, 2
      %v517 = vadd.f32 %v515, %v516
      %v518 = vrot.slane %v517, 1
      %v519 = vadd.f32 %v517, %v518
      %v520 = vmul.f32 %v357, %v357
      %v521 = vmul.f32 %v360, %v360
      %v522 = vmul.f32 %v365, %v365
      %v523 = vmul.f32 %v368, %v368
      %v524 = vmul.f32 %v373, %v373
      %v525 = vmul.f32 %v376, %v376
      %v526 = vmul.f32 %v381, %v381
      %v527 = vmul.f32 %v384, %v384
      %v528 = vmul.f32 %v389, %v389
      %v529 = vmul.f32 %v392, %v392
      %v530 = vmul.f32 %v397, %v397
      %v531 = vmul.f32 %v400, %v400
      %v532 = vmul.f32 %v405, %v405
      %v533 = vmul.f32 %v408, %v408
      %v534 = vmul.f32 %v413, %v413
      %v535 = vmul.f32 %v416, %v416
      %v536 = vmul.f32 %v421, %v421
      %v537 = vmul.f32 %v424, %v424
      %v538 = vmul.f32 %v429, %v429
      %v539 = vmul.f32 %v432, %v432
      %v540 = vmul.f32 %v437, %v437
      %v541 = vmul.f32 %v440, %v440
      %v542 = vmul.f32 %v445, %v445
      %v543 = vmul.f32 %v448, %v448
      %v544 = vmul.f32 %v453, %v453
      %v545 = vmul.f32 %v456, %v456
      %v546 = vmul.f32 %v461, %v461
      %v547 = vmul.f32 %v464, %v464
      %v548 = vmul.f32 %v469, %v469
      %v549 = vmul.f32 %v472, %v472
      %v550 = vmul.f32 %v477, %v477
      %v551 = vmul.f32 %v480, %v480
      %v552 = vadd.f32 %v520, %v521
      %v553 = vadd.f32 %v552, %v522
      %v554 = vadd.f32 %v553, %v523
      %v555 = vadd.f32 %v554, %v524
      %v556 = vadd.f32 %v555, %v525
      %v557 = vadd.f32 %v556, %v526
      %v558 = vadd.f32 %v557, %v527
      %v559 = vadd.f32 %v558, %v528
      %v560 = vadd.f32 %v559, %v529
      %v561 = vadd.f32 %v560, %v530
      %v562 = vadd.f32 %v561, %v531
      %v563 = vadd.f32 %v562, %v532
      %v564 = vadd.f32 %v563, %v533
      %v565 = vadd.f32 %v564, %v534
      %v566 = vadd.f32 %v565, %v535
      %v567 = vadd.f32 %v566, %v536
      %v568 = vadd.f32 %v567, %v537
      %v569 = vadd.f32 %v568, %v538
      %v570 = vadd.f32 %v569, %v539
      %v571 = vadd.f32 %v570, %v540
      %v572 = vadd.f32 %v571, %v541
      %v573 = vadd.f32 %v572, %v542
      %v574 = vadd.f32 %v573, %v543
      %v575 = vadd.f32 %v574, %v544
      %v576 = vadd.f32 %v575, %v545
      %v577 = vadd.f32 %v576, %v546
      %v578 = vadd.f32 %v577, %v547
      %v579 = vadd.f32 %v578, %v548
      %v580 = vadd.f32 %v579, %v549
      %v581 = vadd.f32 %v580, %v550
      %v582 = vadd.f32 %v581, %v551
      %v583 = vrot.slane %v582, 4
      %v584 = vadd.f32 %v582, %v583
      %v585 = vrot.slane %v584, 2
      %v586 = vadd.f32 %v584, %v585
      %v587 = vrot.slane %v586, 1
      %v588 = vadd.f32 %v586, %v587
      %vm589 = vcmask 1040384
      %v590 = vsel %vm589, %v519, %v588
      %591 = vst [vmem:[%s143] sm:$0x3] %v590
      %p592 = scmp.lt.s32.totalorder %s13, 2
      %s593 = scalar_select %p592, %s13, 2
      %s594 = smul.addr %s593, 2
      %s595 = scalar_lea.vmem %s2, %s594
      // Predicated region
      $region29: #{auxiliary_head_ppi.3} parent=27 // pred_check
        %p596 = pneg %p78
      $region30: #{auxiliary_head_ppi.3} parent=27 // pred_check_branch
        %598 = sbr.rel (%p596) target = $region32
      $region31: #{auxiliary_head_ppi.3} parent=27 // pred_region
        _
      $region32: #{auxiliary_head_ppi.3} parent=27 // pred_fallthru
        _
    $region28: #{auxiliary_head_ppi.3} parent=5 // pred_fallthru
      _
    %p599 = scmp.le.s32.totalorder 2, %s8
    // Predicated region
    $region33: #{auxiliary_head_ppi.3} parent=5 // pred_check
      %p600 = pneg %p599
    $region34: #{auxiliary_head_ppi.3} parent=5 // pred_check_branch
      %602 = sbr.rel (%p600) target = $region36
    $region35: #{auxiliary_head_ppi.3} parent=5 // pred_region
      %s603 = ssub.s32 %s8, 2
      // Predicated region
      $region37: #{auxiliary_head_ppi.3} parent=35 // pred_check
        %p604 = pneg %p84
      $region38: #{auxiliary_head_ppi.3} parent=35 // pred_check_branch
        %606 = sbr.rel (%p604) target = $region40
      $region39: #{auxiliary_head_ppi.3} parent=35 // pred_region
        %p607 = scmp.lt.s32.totalorder %s14, 2
        %s608 = scalar_select %p607, %s14, 2
        %s609 = smul.addr %s608, 2
        %s610 = scalar_lea.vmem %s2, %s609
      $region40: #{auxiliary_head_ppi.3} parent=35 // pred_fallthru
        _
    $region36: #{auxiliary_head_ppi.3} parent=5 // pred_fallthru
      _
  $region6: #{auxiliary_head_ppi.3} parent=0 // loop_footer
    %s12 = sadd.s32 1, %s8
  $region7: #{auxiliary_head_ppi.3} parent=0 // loop_footer_branch
    %7 = sbr.rel target = $region3
  $region8: #{auxiliary_head_ppi.3} parent=0 // loop_exit
    _

// kernel: auxiliary_head_ppi.4
$region0: #{auxiliary_head_ppi.4}
  #allocation0 [shape = 'u32[]', space=smem, size = 0x4, offset = 0x4, fixed_abs, tag = 'smem constant byte address 0x4 - core index']
  #allocation1 [shape = 'u32[144,128]{1,0:T(1,128)}', space=vmem, size = 0x12000, scoped, tag = 'internal scratch']
  %s0 = inlined_call_operand.vmem [shape: bf16[768,32], index: 0, kind: input, shape index: {}]
  %s1 = inlined_call_operand.vmem [shape: bf16[32,128], index: 1, kind: input, shape index: {}]
  %s2 = inlined_call_operand.vmem [shape: f32[1,128], index: 2, kind: input, shape index: {}]
  %s3 = inlined_call_operand.vmem [shape: f32[1,128], index: 3, kind: input, shape index: {}]
  %s4 = inlined_call_operand.vmem [shape: bf16[128,768], index: 4, kind: input, shape index: {}]
  %s5 = inlined_call_operand.vmem [shape: f32[3,2,768], index: 5, kind: output, shape index: {}]
  %s6 = sld [smem:[#allocation0]]
  $region53: #{auxiliary_head_ppi.4} parent=0
    _
  %s8 = ssub.s32 1, %s6
  %s9 = scalar_select 0, %s8, %s6
  loop: start=0, step=1, limit=5
  $region2: #{auxiliary_head_ppi.4} parent=0 // loop_pre_header
    _
  $region3: #{auxiliary_head_ppi.4} parent=0 // loop_header
    %s11 = sphi 0, %s15
    %p12 = scmp.ge.s32.totalorder %s11, 5
    %s21 = sphi 0, %s23
    %s24 = sphi 0, %s21
    %s25 = sphi 0, %s24
    %s41 = sphi 0, %s25
    %s45 = sphi 0, %s45
    %s47 = sphi 0, %s45
    %s48 = sphi 0, %s47
    %s62 = sphi 0, %s48
    %s66 = sphi 0, %s66
    %s68 = sphi 0, %s66
    %s69 = sphi 0, %s68
    %s83 = sphi 0, %s69
    %s87 = sphi 0, %s87
    %s89 = sphi 0, %s87
    %s90 = sphi 0, %s89
    %s104 = sphi 0, %s90
    %s108 = sphi 0, %s108
    %s110 = sphi 0, %s108
    %s111 = sphi 0, %s110
    %s125 = sphi 0, %s111
    %s131 = sphi 0, %s133
    %s134 = sphi 0, %s131
    %s135 = sphi 0, %s134
    %s151 = sphi 0, %s135
  $region4: #{auxiliary_head_ppi.4} parent=0 // loop_header_branch
    %14 = sbr.rel (%p12) target = $region8
  $region5: #{auxiliary_head_ppi.4} parent=0 // loop_body
    %s16 = ssub.s32 %s11, 1
    %s17 = ssub.s32 %s11, 2
    %s18 = sadd.s32 %s11, 1
    %s19 = ssub.s32 %s11, %s18
    %p20 = scmp.eq.s32.totalorder %s19, 0
    %s22 = sadd.s32 %s21, 1
    %s23 = scalar_select %p20, %s21, %s22
    %p26 = pneg %p20
    %p27 = scmp.eq.s32.totalorder %s11, 2
    %p28 = por %p26, %p27
    %p29 = scmp.ne.s32.totalorder %s21, %s24
    %p30 = scmp.eq.s32.totalorder %s11, 0
    %p31 = por %p29, %p30
    %p32 = scmp.ne.s32.totalorder %s21, %s24
    %p33 = scmp.eq.s32.totalorder %s16, 2
    %p34 = por %p32, %p33
    %p35 = scmp.ne.s32.totalorder %s24, %s25
    %p36 = scmp.eq.s32.totalorder %s16, 0
    %p37 = por %p35, %p36
    %p38 = scmp.ne.s32.totalorder %s24, %s25
    %p39 = scmp.eq.s32.totalorder %s17, 2
    %p40 = por %p38, %p39
    %p42 = scmp.ne.s32.totalorder %s25, %s41
    %p43 = scmp.eq.s32.totalorder %s17, 0
    %p44 = por %p42, %p43
    %s46 = sadd.s32 %s45, 1
    %p49 = scmp.eq.s32.totalorder %s11, 2
    %p50 = scmp.ne.s32.totalorder %s45, %s47
    %p51 = scmp.eq.s32.totalorder %s11, 0
    %p52 = por %p50, %p51
    %p53 = scmp.ne.s32.totalorder %s45, %s47
    %p54 = scmp.eq.s32.totalorder %s16, 2
    %p55 = por %p53, %p54
    %p56 = scmp.ne.s32.totalorder %s47, %s48
    %p57 = scmp.eq.s32.totalorder %s16, 0
    %p58 = por %p56, %p57
    %p59 = scmp.ne.s32.totalorder %s47, %s48
    %p60 = scmp.eq.s32.totalorder %s17, 2
    %p61 = por %p59, %p60
    %p63 = scmp.ne.s32.totalorder %s48, %s62
    %p64 = scmp.eq.s32.totalorder %s17, 0
    %p65 = por %p63, %p64
    %s67 = sadd.s32 %s66, 1
    %p70 = scmp.eq.s32.totalorder %s11, 2
    %p71 = scmp.ne.s32.totalorder %s66, %s68
    %p72 = scmp.eq.s32.totalorder %s11, 0
    %p73 = por %p71, %p72
    %p74 = scmp.ne.s32.totalorder %s66, %s68
    %p75 = scmp.eq.s32.totalorder %s16, 2
    %p76 = por %p74, %p75
    %p77 = scmp.ne.s32.totalorder %s68, %s69
    %p78 = scmp.eq.s32.totalorder %s16, 0
    %p79 = por %p77, %p78
    %p80 = scmp.ne.s32.totalorder %s68, %s69
    %p81 = scmp.eq.s32.totalorder %s17, 2
    %p82 = por %p80, %p81
    %p84 = scmp.ne.s32.totalorder %s69, %s83
    %p85 = scmp.eq.s32.totalorder %s17, 0
    %p86 = por %p84, %p85
    %s88 = sadd.s32 %s87, 1
    %p91 = scmp.eq.s32.totalorder %s11, 2
    %p92 = scmp.ne.s32.totalorder %s87, %s89
    %p93 = scmp.eq.s32.totalorder %s11, 0
    %p94 = por %p92, %p93
    %p95 = scmp.ne.s32.totalorder %s87, %s89
    %p96 = scmp.eq.s32.totalorder %s16, 2
    %p97 = por %p95, %p96
    %p98 = scmp.ne.s32.totalorder %s89, %s90
    %p99 = scmp.eq.s32.totalorder %s16, 0
    %p100 = por %p98, %p99
    %p101 = scmp.ne.s32.totalorder %s89, %s90
    %p102 = scmp.eq.s32.totalorder %s17, 2
    %p103 = por %p101, %p102
    %p105 = scmp.ne.s32.totalorder %s90, %s104
    %p106 = scmp.eq.s32.totalorder %s17, 0
    %p107 = por %p105, %p106
    %s109 = sadd.s32 %s108, 1
    %p112 = scmp.eq.s32.totalorder %s11, 2
    %p113 = scmp.ne.s32.totalorder %s108, %s110
    %p114 = scmp.eq.s32.totalorder %s11, 0
    %p115 = por %p113, %p114
    %p116 = scmp.ne.s32.totalorder %s108, %s110
    %p117 = scmp.eq.s32.totalorder %s16, 2
    %p118 = por %p116, %p117
    %p119 = scmp.ne.s32.totalorder %s110, %s111
    %p120 = scmp.eq.s32.totalorder %s16, 0
    %p121 = por %p119, %p120
    %p122 = scmp.ne.s32.totalorder %s110, %s111
    %p123 = scmp.eq.s32.totalorder %s17, 2
    %p124 = por %p122, %p123
    %p126 = scmp.ne.s32.totalorder %s111, %s125
    %p127 = scmp.eq.s32.totalorder %s17, 0
    %p128 = por %p126, %p127
    %s129 = ssub.s32 %s11, %s18
    %p130 = scmp.eq.s32.totalorder %s129, 0
    %s132 = sadd.s32 %s131, 1
    %s133 = scalar_select %p130, %s131, %s132
    %p136 = pneg %p130
    %p137 = scmp.eq.s32.totalorder %s11, 2
    %p138 = por %p136, %p137
    %p139 = scmp.ne.s32.totalorder %s131, %s134
    %p140 = scmp.eq.s32.totalorder %s11, 0
    %p141 = por %p139, %p140
    %p142 = scmp.ne.s32.totalorder %s131, %s134
    %p143 = scmp.eq.s32.totalorder %s16, 2
    %p144 = por %p142, %p143
    %p145 = scmp.ne.s32.totalorder %s134, %s135
    %p146 = scmp.eq.s32.totalorder %s16, 0
    %p147 = por %p145, %p146
    %p148 = scmp.ne.s32.totalorder %s134, %s135
    %p149 = scmp.eq.s32.totalorder %s17, 2
    %p150 = por %p148, %p149
    %p152 = scmp.ne.s32.totalorder %s135, %s151
    %p153 = scmp.eq.s32.totalorder %s17, 0
    %p154 = por %p152, %p153
    %p155 = scmp.le.s32.totalorder 1, %s11
    %p156 = scmp.lt.s32.totalorder %s11, 4
    %p157 = pnand %p155, %p156
    %p158 = pneg %p157
    // Predicated region
    $region9: #{auxiliary_head_ppi.4} parent=5 // pred_check
      _
    $region10: #{auxiliary_head_ppi.4} parent=5 // pred_check_branch
      %160 = sbr.rel (%p157) target = $region12
    $region11: #{auxiliary_head_ppi.4} parent=5 // pred_region
      %s161 = ssub.s32 %s11, 1
      // Predicated region
      $region13: #{auxiliary_head_ppi.4} parent=11 // pred_check
        %p162 = pneg %p58
      $region14: #{auxiliary_head_ppi.4} parent=11 // pred_check_branch
        %164 = sbr.rel (%p162) target = $region16
      $region15: #{auxiliary_head_ppi.4} parent=11 // pred_region
        _
      $region16: #{auxiliary_head_ppi.4} parent=11 // pred_fallthru
        _
      // Predicated region
      $region17: #{auxiliary_head_ppi.4} parent=11 // pred_check
        %p165 = pneg %p79
      $region18: #{auxiliary_head_ppi.4} parent=11 // pred_check_branch
        %167 = sbr.rel (%p165) target = $region20
      $region19: #{auxiliary_head_ppi.4} parent=11 // pred_region
        _
      $region20: #{auxiliary_head_ppi.4} parent=11 // pred_fallthru
        _
      // Predicated region
      $region21: #{auxiliary_head_ppi.4} parent=11 // pred_check
        %p168 = pneg %p100
      $region22: #{auxiliary_head_ppi.4} parent=11 // pred_check_branch
        %170 = sbr.rel (%p168) target = $region24
      $region23: #{auxiliary_head_ppi.4} parent=11 // pred_region
        _
      $region24: #{auxiliary_head_ppi.4} parent=11 // pred_fallthru
        _
      // Predicated region
      $region25: #{auxiliary_head_ppi.4} parent=11 // pred_check
        %p171 = pneg %p121
      $region26: #{auxiliary_head_ppi.4} parent=11 // pred_check_branch
        %173 = sbr.rel (%p171) target = $region28
      $region27: #{auxiliary_head_ppi.4} parent=11 // pred_region
        _
      $region28: #{auxiliary_head_ppi.4} parent=11 // pred_fallthru
        _
    $region12: #{auxiliary_head_ppi.4} parent=5 // pred_fallthru
      _
    %p174 = scmp.lt.s32.totalorder %s11, 3
    // Predicated region
    $region29: #{auxiliary_head_ppi.4} parent=5 // pred_check
      %p175 = pneg %p174
    $region30: #{auxiliary_head_ppi.4} parent=5 // pred_check_branch
      %177 = sbr.rel (%p175) target = $region32
    $region31: #{auxiliary_head_ppi.4} parent=5 // pred_region
      // Predicated region
      $region33: #{auxiliary_head_ppi.4} parent=31 // pred_check
        %p178 = pneg %p31
      $region34: #{auxiliary_head_ppi.4} parent=31 // pred_check_branch
        %180 = sbr.rel (%p178) target = $region36
      $region35: #{auxiliary_head_ppi.4} parent=31 // pred_region
        %s181 = smul.u32 32, %s11
        %p182 = scmp.lt.s32.totalorder %s181, 95
        %s183 = scalar_select %p182, %s181, 95
        %s184 = smul.addr %s183, 4
        %s185 = scalar_lea.vmem %s0, %s184
        %s186 = smul.u32 32, %s11
      $region36: #{auxiliary_head_ppi.4} parent=31 // pred_fallthru
        _
    $region32: #{auxiliary_head_ppi.4} parent=5 // pred_fallthru
      _
    %p187 = scmp.le.s32.totalorder 1, %s11
    %p188 = scmp.lt.s32.totalorder %s11, 4
    %p189 = pnand %p187, %p188
    %p190 = pneg %p189
    // Predicated region
    $region37: #{auxiliary_head_ppi.4} parent=5 // pred_check
      _
    $region38: #{auxiliary_head_ppi.4} parent=5 // pred_check_branch
      %192 = sbr.rel (%p189) target = $region40
    $region39: #{auxiliary_head_ppi.4} parent=5 // pred_region
      %s193 = ssub.s32 %s11, 1
      %s194 = smul.u32 32, %s16
      %p195 = scmp.lt.s32.totalorder %s194, 95
      %s196 = scalar_select %p195, %s194, 95
      %s197 = smul.addr %s196, 4
      %s198 = scalar_lea.vmem %s0, %s197
      %p199 = pneg %p37
      %p200 = pneg %p34
      %p201 = pneg %p58
      %p202 = pneg %p55
      %p203 = pneg %p79
      %p204 = pneg %p76
      %p205 = pneg %p100
      %p206 = pneg %p97
      %p207 = pneg %p121
      %p208 = pneg %p118
      %p209 = pneg %p147
      %p210 = pneg %p144
      %p211 = scmp.lt.s32.totalorder %s16, 2
      %s212 = scalar_select %p211, %s16, 2
      %s213 = smul.addr %s212, 6
      %s214 = smul.addr %s213, 2
      %s215 = scalar_lea.vmem %s5, %s214
      %s216 = smul.u32 32, %s16
      %p217 = scmp.lt.s32.totalorder %s216, 95
      %s218 = scalar_select %p217, %s216, 95
      %s219 = smul.addr %s218, 4
      %s220 = scalar_lea.vmem %s0, %s219
      %s221 = smul.u32 32, %s16
      %p222 = scmp.lt.s32.totalorder %s16, 2
      %s223 = scalar_select %p222, %s16, 2
      %s224 = smul.addr %s223, 6
      %s225 = smul.addr %s224, 2
      %s226 = scalar_lea.vmem %s5, %s225
      %v228 = vld [vmem:[%s220] sm:$0xf]
      %v229 = vld [vmem:[%s220 + $0x4] sm:$0xf]
      %v230 = vld [vmem:[%s220 + $0x8] sm:$0xf]
      %v231 = vld [vmem:[%s220 + $0xc] sm:$0xf]
      %v232 = vld [vmem:[%s220 + $0x10] sm:$0xf]
      %v233 = vld [vmem:[%s220 + $0x14] sm:$0xf]
      %v234 = vld [vmem:[%s220 + $0x18] sm:$0xf]
      %v235 = vld [vmem:[%s220 + $0x1c] sm:$0xf]
      %v236 = vld [vmem:[%s220 + $0x20] sm:$0xf]
      %v237 = vld [vmem:[%s220 + $0x24] sm:$0xf]
      %v238 = vld [vmem:[%s220 + $0x28] sm:$0xf]
      %v239 = vld [vmem:[%s220 + $0x2c] sm:$0xf]
      %v240 = vld [vmem:[%s220 + $0x30] sm:$0xf]
      %v241 = vld [vmem:[%s220 + $0x34] sm:$0xf]
      %v242 = vld [vmem:[%s220 + $0x38] sm:$0xf]
      %v243 = vld [vmem:[%s220 + $0x3c] sm:$0xf]
      %v244 = vld [vmem:[%s220 + $0x40] sm:$0xf]
      %v245 = vld [vmem:[%s220 + $0x44] sm:$0xf]
      %v246 = vld [vmem:[%s220 + $0x48] sm:$0xf]
      %v247 = vld [vmem:[%s220 + $0x4c] sm:$0xf]
      %v248 = vld [vmem:[%s220 + $0x50] sm:$0xf]
      %v249 = vld [vmem:[%s220 + $0x54] sm:$0xf]
      %v250 = vld [vmem:[%s220 + $0x58] sm:$0xf]
      %v251 = vld [vmem:[%s220 + $0x5c] sm:$0xf]
      %v252 = vld [vmem:[%s220 + $0x60] sm:$0xf]
      %v253 = vld [vmem:[%s220 + $0x64] sm:$0xf]
      %v254 = vld [vmem:[%s220 + $0x68] sm:$0xf]
      %v255 = vld [vmem:[%s220 + $0x6c] sm:$0xf]
      %v256 = vld [vmem:[%s220 + $0x70] sm:$0xf]
      %v257 = vld [vmem:[%s220 + $0x74] sm:$0xf]
      %v258 = vld [vmem:[%s220 + $0x78] sm:$0xf]
      %v259 = vld [vmem:[%s220 + $0x7c] sm:$0xf]
      %v260 = vld [vmem:[%s1] sm:$0xf]
      %v261 = vld [vmem:[%s1 + $0x4] sm:$0xf]
      %v262 = vld [vmem:[%s1 + $0x8] sm:$0xf]
      %v263 = vld [vmem:[%s1 + $0xc] sm:$0xf]
      %v296 = vunpack.c.l.b16 %v228
      %v297 = vunpack.c.l.b16 %v229
      %v298 = vunpack.c.l.b16 %v230
      %v299 = vunpack.c.l.b16 %v231
      %v300 = vunpack.c.l.b16 %v232
      %v301 = vunpack.c.l.b16 %v233
      %v302 = vunpack.c.l.b16 %v234
      %v303 = vunpack.c.l.b16 %v235
      %v304 = vunpack.c.l.b16 %v236
      %v305 = vunpack.c.l.b16 %v237
      %v306 = vunpack.c.l.b16 %v238
      %v307 = vunpack.c.l.b16 %v239
      %v308 = vunpack.c.l.b16 %v240
      %v309 = vunpack.c.l.b16 %v241
      %v310 = vunpack.c.l.b16 %v242
      %v311 = vunpack.c.l.b16 %v243
      %v312 = vunpack.c.l.b16 %v244
      %v313 = vunpack.c.l.b16 %v245
      %v314 = vunpack.c.l.b16 %v246
      %v315 = vunpack.c.l.b16 %v247
      %v316 = vunpack.c.l.b16 %v248
      %v317 = vunpack.c.l.b16 %v249
      %v318 = vunpack.c.l.b16 %v250
      %v319 = vunpack.c.l.b16 %v251
      %v320 = vunpack.c.l.b16 %v252
      %v321 = vunpack.c.l.b16 %v253
      %v322 = vunpack.c.l.b16 %v254
      %v323 = vunpack.c.l.b16 %v255
      %v324 = vunpack.c.l.b16 %v256
      %v325 = vunpack.c.l.b16 %v257
      %v326 = vunpack.c.l.b16 %v258
      %v327 = vunpack.c.l.b16 %v259
      %v328 = vpack.c.b16 %v297, %v296
      %v329 = vpack.c.b16 %v299, %v298
      %v330 = vpack.c.b16 %v301, %v300
      %v331 = vpack.c.b16 %v303, %v302
      %v332 = vpack.c.b16 %v305, %v304
      %v333 = vpack.c.b16 %v307, %v306
      %v334 = vpack.c.b16 %v309, %v308
      %v335 = vpack.c.b16 %v311, %v310
      %v336 = vpack.c.b16 %v313, %v312
      %v337 = vpack.c.b16 %v315, %v314
      %v338 = vpack.c.b16 %v317, %v316
      %v339 = vpack.c.b16 %v319, %v318
      %v340 = vpack.c.b16 %v321, %v320
      %v341 = vpack.c.b16 %v323, %v322
      %v342 = vpack.c.b16 %v325, %v324
      %v343 = vpack.c.b16 %v327, %v326
      %v348 = vunpack.c.l.b16 %v260
      %v349 = vunpack.c.l.b16 %v261
      %v350 = vunpack.c.l.b16 %v262
      %v351 = vunpack.c.l.b16 %v263
      %v352 = vpack.c.b16 %v349, %v348
      %v353 = vpack.c.b16 %v351, %v350
      %vm356 = vcmask 261120
      %v358 = vsel %vm356, %v328, 0
      %v361 = vsel %vm356, %v329, 0
      %v364 = vsel %vm356, %v330, 0
      %v367 = vsel %vm356, %v331, 0
      %v370 = vsel %vm356, %v332, 0
      %v373 = vsel %vm356, %v333, 0
      %v376 = vsel %vm356, %v334, 0
      %v379 = vsel %vm356, %v335, 0
      %v382 = vsel %vm356, %v336, 0
      %v385 = vsel %vm356, %v337, 0
      %v388 = vsel %vm356, %v338, 0
      %v391 = vsel %vm356, %v339, 0
      %v394 = vsel %vm356, %v340, 0
      %v397 = vsel %vm356, %v341, 0
      %v400 = vsel %vm356, %v342, 0
      %v403 = vsel %vm356, %v343, 0
      %405 = vmatprep.subr.bf16.mxu0 0
      %406 = vmatpush1.bf16.msra.mxu0 0
      %407 = vmatprep.subr.bf16.mxu0 0
      %408 = vmatpush1.bf16.msra.mxu0 0
      %409 = vmatprep.subr.bf16.mxu0 0
      %410 = vmatpush1.bf16.msra.mxu0 0
      %411 = vmatprep.subr.bf16.mxu0 0
      %412 = vmatpush1.bf16.msra.mxu0 0
      %413 = vmatprep.subr.bf16.mxu0 0
      %414 = vmatpush1.bf16.msra.mxu0 0
      %415 = vmatprep.subr.bf16.mxu0 0
      %416 = vmatpush1.bf16.msra.mxu0 0
      %417 = vmatprep.subr.bf16.mxu0 0
      %418 = vmatpush1.bf16.msra.mxu0 %v353
      %419 = vmatprep.subr.bf16.mxu0 0
      %420 = vmatpush1.bf16.msra.mxu0 %v352
      %421 = vmatprep.subr.bf16.mxu0 0
      %422 = vmatpush2.bf16.msra.mxu0 0
      %423 = vmatprep.subr.bf16.mxu0 0
      %424 = vmatpush2.bf16.msra.mxu0 0
      %425 = vmatprep.subr.bf16.mxu0 0
      %426 = vmatpush2.bf16.msra.mxu0 0
      %427 = vmatprep.subr.bf16.mxu0 0
      %428 = vmatpush2.bf16.msra.mxu0 0
      %429 = vmatprep.subr.bf16.mxu0 0
      %430 = vmatpush2.bf16.msra.mxu0 0
      %431 = vmatprep.subr.bf16.mxu0 0
      %432 = vmatpush2.bf16.msra.mxu0 0
      %433 = vmatprep.subr.bf16.mxu0 0
      %434 = vmatpush2.bf16.msra.mxu0 0
      %435 = vmatprep.subr.bf16.mxu0 0
      %436 = vmatpush2.bf16.msra.mxu0 0
      %437 = vmatprep.mubr.bf16.mxu0 0
      %438 = vmatmul.mubr.bf16.gmra.mxu0 %v358
      %v439 = vpop.f32.mrf.mxu0
      %v440 = vadd.f32 0.0, %v439
      %v441 = vpop.f32.mrf.mxu0
      %v442 = vpop.f32.mrf.mxu0
      %v443 = vadd.f32 0.0, %v442
      %v444 = vpop.f32.mrf.mxu0
      %445 = vmatprep.mubr.bf16.mxu0 0
      %446 = vmatmul.mubr.bf16.gmra.mxu0 %v361
      %v447 = vpop.f32.mrf.mxu0
      %v448 = vadd.f32 0.0, %v447
      %v449 = vpop.f32.mrf.mxu0
      %v450 = vpop.f32.mrf.mxu0
      %v451 = vadd.f32 0.0, %v450
      %v452 = vpop.f32.mrf.mxu0
      %453 = vmatprep.mubr.bf16.mxu0 0
      %454 = vmatmul.mubr.bf16.gmra.mxu0 %v364
      %v455 = vpop.f32.mrf.mxu0
      %v456 = vadd.f32 0.0, %v455
      %v457 = vpop.f32.mrf.mxu0
      %v458 = vpop.f32.mrf.mxu0
      %v459 = vadd.f32 0.0, %v458
      %v460 = vpop.f32.mrf.mxu0
      %461 = vmatprep.mubr.bf16.mxu0 0
      %462 = vmatmul.mubr.bf16.gmra.mxu0 %v367
      %v463 = vpop.f32.mrf.mxu0
      %v464 = vadd.f32 0.0, %v463
      %v465 = vpop.f32.mrf.mxu0
      %v466 = vpop.f32.mrf.mxu0
      %v467 = vadd.f32 0.0, %v466
      %v468 = vpop.f32.mrf.mxu0
      %469 = vmatprep.mubr.bf16.mxu0 0
      %470 = vmatmul.mubr.bf16.gmra.mxu0 %v370
      %v471 = vpop.f32.mrf.mxu0
      %v472 = vadd.f32 0.0, %v471
      %v473 = vpop.f32.mrf.mxu0
      %v474 = vpop.f32.mrf.mxu0
      %v475 = vadd.f32 0.0, %v474
      %v476 = vpop.f32.mrf.mxu0
      %477 = vmatprep.mubr.bf16.mxu0 0
      %478 = vmatmul.mubr.bf16.gmra.mxu0 %v373
      %v479 = vpop.f32.mrf.mxu0
      %v480 = vadd.f32 0.0, %v479
      %v481 = vpop.f32.mrf.mxu0
      %v482 = vpop.f32.mrf.mxu0
      %v483 = vadd.f32 0.0, %v482
      %v484 = vpop.f32.mrf.mxu0
      %485 = vmatprep.mubr.bf16.mxu0 0
      %486 = vmatmul.mubr.bf16.gmra.mxu0 %v376
      %v487 = vpop.f32.mrf.mxu0
      %v488 = vadd.f32 0.0, %v487
      %v489 = vpop.f32.mrf.mxu0
      %v490 = vpop.f32.mrf.mxu0
      %v491 = vadd.f32 0.0, %v490
      %v492 = vpop.f32.mrf.mxu0
      %493 = vmatprep.mubr.bf16.mxu0 0
      %494 = vmatmul.mubr.bf16.gmra.mxu0 %v379
      %v495 = vpop.f32.mrf.mxu0
      %v496 = vadd.f32 0.0, %v495
      %v497 = vpop.f32.mrf.mxu0
      %v498 = vpop.f32.mrf.mxu0
      %v499 = vadd.f32 0.0, %v498
      %v500 = vpop.f32.mrf.mxu0
      %501 = vmatprep.mubr.bf16.mxu0 0
      %502 = vmatmul.mubr.bf16.gmra.mxu0 %v382
      %v503 = vpop.f32.mrf.mxu0
      %v504 = vadd.f32 0.0, %v503
      %v505 = vpop.f32.mrf.mxu0
      %v506 = vpop.f32.mrf.mxu0
      %v507 = vadd.f32 0.0, %v506
      %v508 = vpop.f32.mrf.mxu0
      %509 = vmatprep.mubr.bf16.mxu0 0
      %510 = vmatmul.mubr.bf16.gmra.mxu0 %v385
      %v511 = vpop.f32.mrf.mxu0
      %v512 = vadd.f32 0.0, %v511
      %v513 = vpop.f32.mrf.mxu0
      %v514 = vpop.f32.mrf.mxu0
      %v515 = vadd.f32 0.0, %v514
      %v516 = vpop.f32.mrf.mxu0
      %517 = vmatprep.mubr.bf16.mxu0 0
      %518 = vmatmul.mubr.bf16.gmra.mxu0 %v388
      %v519 = vpop.f32.mrf.mxu0
      %v520 = vadd.f32 0.0, %v519
      %v521 = vpop.f32.mrf.mxu0
      %v522 = vpop.f32.mrf.mxu0
      %v523 = vadd.f32 0.0, %v522
      %v524 = vpop.f32.mrf.mxu0
      %525 = vmatprep.mubr.bf16.mxu0 0
      %526 = vmatmul.mubr.bf16.gmra.mxu0 %v391
      %v527 = vpop.f32.mrf.mxu0
      %v528 = vadd.f32 0.0, %v527
      %v529 = vpop.f32.mrf.mxu0
      %v530 = vpop.f32.mrf.mxu0
      %v531 = vadd.f32 0.0, %v530
      %v532 = vpop.f32.mrf.mxu0
      %533 = vmatprep.mubr.bf16.mxu0 0
      %534 = vmatmul.mubr.bf16.gmra.mxu0 %v394
      %v535 = vpop.f32.mrf.mxu0
      %v536 = vadd.f32 0.0, %v535
      %v537 = vpop.f32.mrf.mxu0
      %v538 = vpop.f32.mrf.mxu0
      %v539 = vadd.f32 0.0, %v538
      %v540 = vpop.f32.mrf.mxu0
      %541 = vmatprep.mubr.bf16.mxu0 0
      %542 = vmatmul.mubr.bf16.gmra.mxu0 %v397
      %v543 = vpop.f32.mrf.mxu0
      %v544 = vadd.f32 0.0, %v543
      %v545 = vpop.f32.mrf.mxu0
      %v546 = vpop.f32.mrf.mxu0
      %v547 = vadd.f32 0.0, %v546
      %v548 = vpop.f32.mrf.mxu0
      %549 = vmatprep.mubr.bf16.mxu0 0
      %550 = vmatmul.mubr.bf16.gmra.mxu0 %v400
      %v551 = vpop.f32.mrf.mxu0
      %v552 = vadd.f32 0.0, %v551
      %v553 = vpop.f32.mrf.mxu0
      %v554 = vpop.f32.mrf.mxu0
      %v555 = vadd.f32 0.0, %v554
      %v556 = vpop.f32.mrf.mxu0
      %557 = vmatprep.mubr.bf16.mxu0 0
      %558 = vmatmul.mubr.bf16.gmra.mxu0 %v403
      %v559 = vpop.f32.mrf.mxu0
      %v560 = vadd.f32 0.0, %v559
      %v561 = vpop.f32.mrf.mxu0
      %v562 = vpop.f32.mrf.mxu0
      %v563 = vadd.f32 0.0, %v562
      %v564 = vpop.f32.mrf.mxu0
      %565 = vdwg.mxu0
      %v566 = vld [vmem:[%s2] sm:$0x1]
      %v568 = vlaneseq
      %v569 = vshrl.u32 %v568, 7
      %v570 = vsub.s32 0, %v569
      %v571 = vrot.slane %v566, %v570
      %v573 = vmul.f32 %v440, %v571
      %v574 = vmul.f32 %v443, %v571
      %v575 = vmul.f32 %v448, %v571
      %v576 = vmul.f32 %v451, %v571
      %v577 = vmul.f32 %v456, %v571
      %v578 = vmul.f32 %v459, %v571
      %v579 = vmul.f32 %v464, %v571
      %v580 = vmul.f32 %v467, %v571
      %v581 = vmul.f32 %v472, %v571
      %v582 = vmul.f32 %v475, %v571
      %v583 = vmul.f32 %v480, %v571
      %v584 = vmul.f32 %v483, %v571
      %v585 = vmul.f32 %v488, %v571
      %v586 = vmul.f32 %v491, %v571
      %v587 = vmul.f32 %v496, %v571
      %v588 = vmul.f32 %v499, %v571
      %v589 = vmul.f32 %v504, %v571
      %v590 = vmul.f32 %v507, %v571
      %v591 = vmul.f32 %v512, %v571
      %v592 = vmul.f32 %v515, %v571
      %v593 = vmul.f32 %v520, %v571
      %v594 = vmul.f32 %v523, %v571
      %v595 = vmul.f32 %v528, %v571
      %v596 = vmul.f32 %v531, %v571
      %v597 = vmul.f32 %v536, %v571
      %v598 = vmul.f32 %v539, %v571
      %v599 = vmul.f32 %v544, %v571
      %v600 = vmul.f32 %v547, %v571
      %v601 = vmul.f32 %v552, %v571
      %v602 = vmul.f32 %v555, %v571
      %v603 = vmul.f32 %v560, %v571
      %v604 = vmul.f32 %v563, %v571
      %v605 = vld [vmem:[%s3] sm:$0x1]
      %v607 = vlaneseq
      %v608 = vshrl.u32 %v607, 7
      %v609 = vsub.s32 0, %v608
      %v610 = vrot.slane %v605, %v609
      %v612 = vadd.f32 %v573, %v610
      %v613 = vadd.f32 %v574, %v610
      %v614 = vadd.f32 %v575, %v610
      %v615 = vadd.f32 %v576, %v610
      %v616 = vadd.f32 %v577, %v610
      %v617 = vadd.f32 %v578, %v610
      %v618 = vadd.f32 %v579, %v610
      %v619 = vadd.f32 %v580, %v610
      %v620 = vadd.f32 %v581, %v610
      %v621 = vadd.f32 %v582, %v610
      %v622 = vadd.f32 %v583, %v610
      %v623 = vadd.f32 %v584, %v610
      %v624 = vadd.f32 %v585, %v610
      %v625 = vadd.f32 %v586, %v610
      %v626 = vadd.f32 %v587, %v610
      %v627 = vadd.f32 %v588, %v610
      %v628 = vadd.f32 %v589, %v610
      %v629 = vadd.f32 %v590, %v610
      %v630 = vadd.f32 %v591, %v610
      %v631 = vadd.f32 %v592, %v610
      %v632 = vadd.f32 %v593, %v610
      %v633 = vadd.f32 %v594, %v610
      %v634 = vadd.f32 %v595, %v610
      %v635 = vadd.f32 %v596, %v610
      %v636 = vadd.f32 %v597, %v610
      %v637 = vadd.f32 %v598, %v610
      %v638 = vadd.f32 %v599, %v610
      %v639 = vadd.f32 %v600, %v610
      %v640 = vadd.f32 %v601, %v610
      %v641 = vadd.f32 %v602, %v610
      %v642 = vadd.f32 %v603, %v610
      %v643 = vadd.f32 %v604, %v610
      %v644 = vmax.f32 %v612, 0.0
      %v645 = vmax.f32 %v613, 0.0
      %v646 = vmax.f32 %v614, 0.0
      %v647 = vmax.f32 %v615, 0.0
      %v648 = vmax.f32 %v616, 0.0
      %v649 = vmax.f32 %v617, 0.0
      %v650 = vmax.f32 %v618, 0.0
      %v651 = vmax.f32 %v619, 0.0
      %v652 = vmax.f32 %v620, 0.0
      %v653 = vmax.f32 %v621, 0.0
      %v654 = vmax.f32 %v622, 0.0
      %v655 = vmax.f32 %v623, 0.0
      %v656 = vmax.f32 %v624, 0.0
      %v657 = vmax.f32 %v625, 0.0
      %v658 = vmax.f32 %v626, 0.0
      %v659 = vmax.f32 %v627, 0.0
      %v660 = vmax.f32 %v628, 0.0
      %v661 = vmax.f32 %v629, 0.0
      %v662 = vmax.f32 %v630, 0.0
      %v663 = vmax.f32 %v631, 0.0
      %v664 = vmax.f32 %v632, 0.0
      %v665 = vmax.f32 %v633, 0.0
      %v666 = vmax.f32 %v634, 0.0
      %v667 = vmax.f32 %v635, 0.0
      %v668 = vmax.f32 %v636, 0.0
      %v669 = vmax.f32 %v637, 0.0
      %v670 = vmax.f32 %v638, 0.0
      %v671 = vmax.f32 %v639, 0.0
      %v672 = vmax.f32 %v640, 0.0
      %v673 = vmax.f32 %v641, 0.0
      %v674 = vmax.f32 %v642, 0.0
      %v675 = vmax.f32 %v643, 0.0
      %v676 = vlaneseq
      %v677 = vshrl.u32 %v676, 7
      %v678 = vadd.s32 %v677, 8
      %v679 = vadd.s32 %v677, 16
      %v680 = vadd.s32 %v677, 24
      %v681 = vadd.s32 %v677, 32
      %v682 = vadd.s32 %v677, 40
      %v683 = vadd.s32 %v677, 48
      %v684 = vadd.s32 %v677, 56
      %v685 = vadd.s32 %v677, 64
      %v686 = vadd.s32 %v677, 72
      %v687 = vadd.s32 %v677, 80
      %v688 = vadd.s32 %v677, 88
      %v689 = vadd.s32 %v677, 96
      %v690 = vadd.s32 %v677, 104
      %v691 = vadd.s32 %v677, 112
      %v692 = vadd.s32 %v677, 120
      %v693 = vadd.s32 %v677, 128
      %v694 = vadd.s32 %v677, 136
      %v695 = vadd.s32 %v677, 144
      %v696 = vadd.s32 %v677, 152
      %v697 = vadd.s32 %v677, 160
      %v698 = vadd.s32 %v677, 168
      %v699 = vadd.s32 %v677, 176
      %v700 = vadd.s32 %v677, 184
      %v701 = vadd.s32 %v677, 192
      %v702 = vadd.s32 %v677, 200
      %v703 = vadd.s32 %v677, 208
      %v704 = vadd.s32 %v677, 216
      %v705 = vadd.s32 %v677, 224
      %v706 = vadd.s32 %v677, 232
      %v707 = vadd.s32 %v677, 240
      %v708 = vadd.s32 %v677, 248
      %s709 = smul.u32 %s16, 256
      %v710 = vstv %s709
      %v711 = vadd.s32 %v677, %v710
      %v712 = vadd.s32 %v678, %v710
      %v713 = vadd.s32 %v679, %v710
      %v714 = vadd.s32 %v680, %v710
      %v715 = vadd.s32 %v681, %v710
      %v716 = vadd.s32 %v682, %v710
      %v717 = vadd.s32 %v683, %v710
      %v718 = vadd.s32 %v684, %v710
      %v719 = vadd.s32 %v685, %v710
      %v720 = vadd.s32 %v686, %v710
      %v721 = vadd.s32 %v687, %v710
      %v722 = vadd.s32 %v688, %v710
      %v723 = vadd.s32 %v689, %v710
      %v724 = vadd.s32 %v690, %v710
      %v725 = vadd.s32 %v691, %v710
      %v726 = vadd.s32 %v692, %v710
      %v727 = vadd.s32 %v693, %v710
      %v728 = vadd.s32 %v694, %v710
      %v729 = vadd.s32 %v695, %v710
      %v730 = vadd.s32 %v696, %v710
      %v731 = vadd.s32 %v697, %v710
      %v732 = vadd.s32 %v698, %v710
      %v733 = vadd.s32 %v699, %v710
      %v734 = vadd.s32 %v700, %v710
      %v735 = vadd.s32 %v701, %v710
      %v736 = vadd.s32 %v702, %v710
      %v737 = vadd.s32 %v703, %v710
      %v738 = vadd.s32 %v704, %v710
      %v739 = vadd.s32 %v705, %v710
      %v740 = vadd.s32 %v706, %v710
      %v741 = vadd.s32 %v707, %v710
      %v742 = vadd.s32 %v708, %v710
      %vm743 = vcmp.lt.s32.totalorder %v711, 600
      %vm744 = vcmp.lt.s32.totalorder %v712, 600
      %vm745 = vcmp.lt.s32.totalorder %v713, 600
      %vm746 = vcmp.lt.s32.totalorder %v714, 600
      %vm747 = vcmp.lt.s32.totalorder %v715, 600
      %vm748 = vcmp.lt.s32.totalorder %v716, 600
      %vm749 = vcmp.lt.s32.totalorder %v717, 600
      %vm750 = vcmp.lt.s32.totalorder %v718, 600
      %vm751 = vcmp.lt.s32.totalorder %v719, 600
      %vm752 = vcmp.lt.s32.totalorder %v720, 600
      %vm753 = vcmp.lt.s32.totalorder %v721, 600
      %vm754 = vcmp.lt.s32.totalorder %v722, 600
      %vm755 = vcmp.lt.s32.totalorder %v723, 600
      %vm756 = vcmp.lt.s32.totalorder %v724, 600
      %vm757 = vcmp.lt.s32.totalorder %v725, 600
      %vm758 = vcmp.lt.s32.totalorder %v726, 600
      %vm759 = vcmp.lt.s32.totalorder %v727, 600
      %vm760 = vcmp.lt.s32.totalorder %v728, 600
      %vm761 = vcmp.lt.s32.totalorder %v729, 600
      %vm762 = vcmp.lt.s32.totalorder %v730, 600
      %vm763 = vcmp.lt.s32.totalorder %v731, 600
      %vm764 = vcmp.lt.s32.totalorder %v732, 600
      %vm765 = vcmp.lt.s32.totalorder %v733, 600
      %vm766 = vcmp.lt.s32.totalorder %v734, 600
      %vm767 = vcmp.lt.s32.totalorder %v735, 600
      %vm768 = vcmp.lt.s32.totalorder %v736, 600
      %vm769 = vcmp.lt.s32.totalorder %v737, 600
      %vm770 = vcmp.lt.s32.totalorder %v738, 600
      %vm771 = vcmp.lt.s32.totalorder %v739, 600
      %vm772 = vcmp.lt.s32.totalorder %v740, 600
      %vm773 = vcmp.lt.s32.totalorder %v741, 600
      %vm774 = vcmp.lt.s32.totalorder %v742, 600
      %v775 = vsel %vm743, %v644, 0.0
      %v776 = vsel %vm744, %v645, 0.0
      %v777 = vsel %vm745, %v646, 0.0
      %v778 = vsel %vm746, %v647, 0.0
      %v779 = vsel %vm747, %v648, 0.0
      %v780 = vsel %vm748, %v649, 0.0
      %v781 = vsel %vm749, %v650, 0.0
      %v782 = vsel %vm750, %v651, 0.0
      %v783 = vsel %vm751, %v652, 0.0
      %v784 = vsel %vm752, %v653, 0.0
      %v785 = vsel %vm753, %v654, 0.0
      %v786 = vsel %vm754, %v655, 0.0
      %v787 = vsel %vm755, %v656, 0.0
      %v788 = vsel %vm756, %v657, 0.0
      %v789 = vsel %vm757, %v658, 0.0
      %v790 = vsel %vm758, %v659, 0.0
      %v791 = vsel %vm759, %v660, 0.0
      %v792 = vsel %vm760, %v661, 0.0
      %v793 = vsel %vm761, %v662, 0.0
      %v794 = vsel %vm762, %v663, 0.0
      %v795 = vsel %vm763, %v664, 0.0
      %v796 = vsel %vm764, %v665, 0.0
      %v797 = vsel %vm765, %v666, 0.0
      %v798 = vsel %vm766, %v667, 0.0
      %v799 = vsel %vm767, %v668, 0.0
      %v800 = vsel %vm768, %v669, 0.0
      %v801 = vsel %vm769, %v670, 0.0
      %v802 = vsel %vm770, %v671, 0.0
      %v803 = vsel %vm771, %v672, 0.0
      %v804 = vsel %vm772, %v673, 0.0
      %v805 = vsel %vm773, %v674, 0.0
      %v806 = vsel %vm774, %v675, 0.0
      %v807 = vpack.c.bf16 %v776, %v775
      %v808 = vpack.c.bf16 %v778, %v777
      %v809 = vpack.c.bf16 %v780, %v779
      %v810 = vpack.c.bf16 %v782, %v781
      %v811 = vpack.c.bf16 %v784, %v783
      %v812 = vpack.c.bf16 %v786, %v785
      %v813 = vpack.c.bf16 %v788, %v787
      %v814 = vpack.c.bf16 %v790, %v789
      %v815 = vpack.c.bf16 %v792, %v791
      %v816 = vpack.c.bf16 %v794, %v793
      %v817 = vpack.c.bf16 %v796, %v795
      %v818 = vpack.c.bf16 %v798, %v797
      %v819 = vpack.c.bf16 %v800, %v799
      %v820 = vpack.c.bf16 %v802, %v801
      %v821 = vpack.c.bf16 %v804, %v803
      %v822 = vpack.c.bf16 %v806, %v805
      %v823 = vld [vmem:[%s4] sm:$0xff]
      %v824 = vld [vmem:[%s4 + $0x8] sm:$0xff]
      %v825 = vld [vmem:[%s4 + $0x10] sm:$0xff]
      %v826 = vld [vmem:[%s4 + $0x18] sm:$0xff]
      %v827 = vld [vmem:[%s4 + $0x20] sm:$0xff]
      %v828 = vld [vmem:[%s4 + $0x28] sm:$0xff]
      %v829 = vld [vmem:[%s4 + $0x30] sm:$0xff]
      %v830 = vld [vmem:[%s4 + $0x38] sm:$0xff]
      %v831 = vld [vmem:[%s4 + $0x40] sm:$0xff]
      %v832 = vld [vmem:[%s4 + $0x48] sm:$0xff]
      %v833 = vld [vmem:[%s4 + $0x50] sm:$0xff]
      %v834 = vld [vmem:[%s4 + $0x58] sm:$0xff]
      %v835 = vld [vmem:[%s4 + $0x60] sm:$0xff]
      %v836 = vld [vmem:[%s4 + $0x68] sm:$0xff]
      %v837 = vld [vmem:[%s4 + $0x70] sm:$0xff]
      %v838 = vld [vmem:[%s4 + $0x78] sm:$0xff]
      %v839 = vld [vmem:[%s4 + $0x80] sm:$0xff]
      %v840 = vld [vmem:[%s4 + $0x88] sm:$0xff]
      %v841 = vld [vmem:[%s4 + $0x90] sm:$0xff]
      %v842 = vld [vmem:[%s4 + $0x98] sm:$0xff]
      %v843 = vld [vmem:[%s4 + $0xa0] sm:$0xff]
      %v844 = vld [vmem:[%s4 + $0xa8] sm:$0xff]
      %v845 = vld [vmem:[%s4 + $0xb0] sm:$0xff]
      %v846 = vld [vmem:[%s4 + $0xb8] sm:$0xff]
      %v847 = vld [vmem:[%s4 + $0xc0] sm:$0xff]
      %v848 = vld [vmem:[%s4 + $0xc8] sm:$0xff]
      %v849 = vld [vmem:[%s4 + $0xd0] sm:$0xff]
      %v850 = vld [vmem:[%s4 + $0xd8] sm:$0xff]
      %v851 = vld [vmem:[%s4 + $0xe0] sm:$0xff]
      %v852 = vld [vmem:[%s4 + $0xe8] sm:$0xff]
      %v853 = vld [vmem:[%s4 + $0xf0] sm:$0xff]
      %v854 = vld [vmem:[%s4 + $0xf8] sm:$0xff]
      %v855 = vld [vmem:[%s4 + $0x100] sm:$0xff]
      %v856 = vld [vmem:[%s4 + $0x108] sm:$0xff]
      %v857 = vld [vmem:[%s4 + $0x110] sm:$0xff]
      %v858 = vld [vmem:[%s4 + $0x118] sm:$0xff]
      %v859 = vld [vmem:[%s4 + $0x120] sm:$0xff]
      %v860 = vld [vmem:[%s4 + $0x128] sm:$0xff]
      %v861 = vld [vmem:[%s4 + $0x130] sm:$0xff]
      %v862 = vld [vmem:[%s4 + $0x138] sm:$0xff]
      %v863 = vld [vmem:[%s4 + $0x140] sm:$0xff]
      %v864 = vld [vmem:[%s4 + $0x148] sm:$0xff]
      %v865 = vld [vmem:[%s4 + $0x150] sm:$0xff]
      %v866 = vld [vmem:[%s4 + $0x158] sm:$0xff]
      %v867 = vld [vmem:[%s4 + $0x160] sm:$0xff]
      %v868 = vld [vmem:[%s4 + $0x168] sm:$0xff]
      %v869 = vld [vmem:[%s4 + $0x170] sm:$0xff]
      %v870 = vld [vmem:[%s4 + $0x178] sm:$0xff]
      %v919 = vunpack.c.l.b16 %v823
      %v920 = vunpack.c.h.b16 %v823
      %v921 = vunpack.c.l.b16 %v824
      %v922 = vunpack.c.h.b16 %v824
      %v923 = vunpack.c.l.b16 %v825
      %v924 = vunpack.c.h.b16 %v825
      %v925 = vunpack.c.l.b16 %v826
      %v926 = vunpack.c.h.b16 %v826
      %v927 = vunpack.c.l.b16 %v827
      %v928 = vunpack.c.h.b16 %v827
      %v929 = vunpack.c.l.b16 %v828
      %v930 = vunpack.c.h.b16 %v828
      %v931 = vunpack.c.l.b16 %v829
      %v932 = vunpack.c.h.b16 %v829
      %v933 = vunpack.c.l.b16 %v830
      %v934 = vunpack.c.h.b16 %v830
      %v935 = vunpack.c.l.b16 %v831
      %v936 = vunpack.c.h.b16 %v831
      %v937 = vunpack.c.l.b16 %v832
      %v938 = vunpack.c.h.b16 %v832
      %v939 = vunpack.c.l.b16 %v833
      %v940 = vunpack.c.h.b16 %v833
      %v941 = vunpack.c.l.b16 %v834
      %v942 = vunpack.c.h.b16 %v834
      %v943 = vunpack.c.l.b16 %v835
      %v944 = vunpack.c.h.b16 %v835
      %v945 = vunpack.c.l.b16 %v836
      %v946 = vunpack.c.h.b16 %v836
      %v947 = vunpack.c.l.b16 %v837
      %v948 = vunpack.c.h.b16 %v837
      %v949 = vunpack.c.l.b16 %v838
      %v950 = vunpack.c.h.b16 %v838
      %v951 = vunpack.c.l.b16 %v839
      %v952 = vunpack.c.h.b16 %v839
      %v953 = vunpack.c.l.b16 %v840
      %v954 = vunpack.c.h.b16 %v840
      %v955 = vunpack.c.l.b16 %v841
      %v956 = vunpack.c.h.b16 %v841
      %v957 = vunpack.c.l.b16 %v842
      %v958 = vunpack.c.h.b16 %v842
      %v959 = vunpack.c.l.b16 %v843
      %v960 = vunpack.c.h.b16 %v843
      %v961 = vunpack.c.l.b16 %v844
      %v962 = vunpack.c.h.b16 %v844
      %v963 = vunpack.c.l.b16 %v845
      %v964 = vunpack.c.h.b16 %v845
      %v965 = vunpack.c.l.b16 %v846
      %v966 = vunpack.c.h.b16 %v846
      %v967 = vunpack.c.l.b16 %v847
      %v968 = vunpack.c.h.b16 %v847
      %v969 = vunpack.c.l.b16 %v848
      %v970 = vunpack.c.h.b16 %v848
      %v971 = vunpack.c.l.b16 %v849
      %v972 = vunpack.c.h.b16 %v849
      %v973 = vunpack.c.l.b16 %v850
      %v974 = vunpack.c.h.b16 %v850
      %v975 = vunpack.c.l.b16 %v851
      %v976 = vunpack.c.h.b16 %v851
      %v977 = vunpack.c.l.b16 %v852
      %v978 = vunpack.c.h.b16 %v852
      %v979 = vunpack.c.l.b16 %v853
      %v980 = vunpack.c.h.b16 %v853
      %v981 = vunpack.c.l.b16 %v854
      %v982 = vunpack.c.h.b16 %v854
      %v983 = vunpack.c.l.b16 %v855
      %v984 = vunpack.c.h.b16 %v855
      %v985 = vunpack.c.l.b16 %v856
      %v986 = vunpack.c.h.b16 %v856
      %v987 = vunpack.c.l.b16 %v857
      %v988 = vunpack.c.h.b16 %v857
      %v989 = vunpack.c.l.b16 %v858
      %v990 = vunpack.c.h.b16 %v858
      %v991 = vunpack.c.l.b16 %v859
      %v992 = vunpack.c.h.b16 %v859
      %v993 = vunpack.c.l.b16 %v860
      %v994 = vunpack.c.h.b16 %v860
      %v995 = vunpack.c.l.b16 %v861
      %v996 = vunpack.c.h.b16 %v861
      %v997 = vunpack.c.l.b16 %v862
      %v998 = vunpack.c.h.b16 %v862
      %v999 = vunpack.c.l.b16 %v863
      %v1000 = vunpack.c.h.b16 %v863
      %v1001 = vunpack.c.l.b16 %v864
      %v1002 = vunpack.c.h.b16 %v864
      %v1003 = vunpack.c.l.b16 %v865
      %v1004 = vunpack.c.h.b16 %v865
      %v1005 = vunpack.c.l.b16 %v866
      %v1006 = vunpack.c.h.b16 %v866
      %v1007 = vunpack.c.l.b16 %v867
      %v1008 = vunpack.c.h.b16 %v867
      %v1009 = vunpack.c.l.b16 %v868
      %v1010 = vunpack.c.h.b16 %v868
      %v1011 = vunpack.c.l.b16 %v869
      %v1012 = vunpack.c.h.b16 %v869
      %v1013 = vunpack.c.l.b16 %v870
      %v1014 = vunpack.c.h.b16 %v870
      %v1015 = vpack.c.b16 %v925, %v919
      %v1016 = vpack.c.b16 %v926, %v920
      %v1017 = vpack.c.b16 %v927, %v921
      %v1018 = vpack.c.b16 %v928, %v922
      %v1019 = vpack.c.b16 %v929, %v923
      %v1020 = vpack.c.b16 %v930, %v924
      %v1021 = vpack.c.b16 %v937, %v931
      %v1022 = vpack.c.b16 %v938, %v932
      %v1023 = vpack.c.b16 %v939, %v933
      %v1024 = vpack.c.b16 %v940, %v934
      %v1025 = vpack.c.b16 %v941, %v935
      %v1026 = vpack.c.b16 %v942, %v936
      %v1027 = vpack.c.b16 %v949, %v943
      %v1028 = vpack.c.b16 %v950, %v944
      %v1029 = vpack.c.b16 %v951, %v945
      %v1030 = vpack.c.b16 %v952, %v946
      %v1031 = vpack.c.b16 %v953, %v947
      %v1032 = vpack.c.b16 %v954, %v948
      %v1033 = vpack.c.b16 %v961, %v955
      %v1034 = vpack.c.b16 %v962, %v956
      %v1035 = vpack.c.b16 %v963, %v957
      %v1036 = vpack.c.b16 %v964, %v958
      %v1037 = vpack.c.b16 %v965, %v959
      %v1038 = vpack.c.b16 %v966, %v960
      %v1039 = vpack.c.b16 %v973, %v967
      %v1040 = vpack.c.b16 %v974, %v968
      %v1041 = vpack.c.b16 %v975, %v969
      %v1042 = vpack.c.b16 %v976, %v970
      %v1043 = vpack.c.b16 %v977, %v971
      %v1044 = vpack.c.b16 %v978, %v972
      %v1045 = vpack.c.b16 %v985, %v979
      %v1046 = vpack.c.b16 %v986, %v980
      %v1047 = vpack.c.b16 %v987, %v981
      %v1048 = vpack.c.b16 %v988, %v982
      %v1049 = vpack.c.b16 %v989, %v983
      %v1050 = vpack.c.b16 %v990, %v984
      %v1051 = vpack.c.b16 %v997, %v991
      %v1052 = vpack.c.b16 %v998, %v992
      %v1053 = vpack.c.b16 %v999, %v993
      %v1054 = vpack.c.b16 %v1000, %v994
      %v1055 = vpack.c.b16 %v1001, %v995
      %v1056 = vpack.c.b16 %v1002, %v996
      %v1057 = vpack.c.b16 %v1009, %v1003
      %v1058 = vpack.c.b16 %v1010, %v1004
      %v1059 = vpack.c.b16 %v1011, %v1005
      %v1060 = vpack.c.b16 %v1012, %v1006
      %v1061 = vpack.c.b16 %v1013, %v1007
      %v1062 = vpack.c.b16 %v1014, %v1008
      %1111 = vmatprep.subr.bf16.mxu0 %v1058
      %1112 = vmatpush1.bf16.msra.mxu0 %v1057
      %1113 = vmatprep.subr.bf16.mxu0 %v1052
      %1114 = vmatpush1.bf16.msra.mxu0 %v1051
      %1115 = vmatprep.subr.bf16.mxu0 %v1046
      %1116 = vmatpush1.bf16.msra.mxu0 %v1045
      %1117 = vmatprep.subr.bf16.mxu0 %v1040
      %1118 = vmatpush1.bf16.msra.mxu0 %v1039
      %1119 = vmatprep.subr.bf16.mxu0 %v1034
      %1120 = vmatpush1.bf16.msra.mxu0 %v1033
      %1121 = vmatprep.subr.bf16.mxu0 %v1028
      %1122 = vmatpush1.bf16.msra.mxu0 %v1027
      %1123 = vmatprep.subr.bf16.mxu0 %v1022
      %1124 = vmatpush1.bf16.msra.mxu0 %v1021
      %1125 = vmatprep.subr.bf16.mxu0 %v1016
      %1126 = vmatpush1.bf16.msra.mxu0 %v1015
      %1127 = vmatprep.subr.bf16.mxu0 0
      %1128 = vmatpush2.bf16.msra.mxu0 0
      %1129 = vmatprep.subr.bf16.mxu0 0
      %1130 = vmatpush2.bf16.msra.mxu0 0
      %1131 = vmatprep.subr.bf16.mxu0 0
      %1132 = vmatpush2.bf16.msra.mxu0 0
      %1133 = vmatprep.subr.bf16.mxu0 0
      %1134 = vmatpush2.bf16.msra.mxu0 0
      %1135 = vmatprep.subr.bf16.mxu0 0
      %1136 = vmatpush2.bf16.msra.mxu0 0
      %1137 = vmatprep.subr.bf16.mxu0 0
      %1138 = vmatpush2.bf16.msra.mxu0 0
      %1139 = vmatprep.subr.bf16.mxu0 0
      %1140 = vmatpush2.bf16.msra.mxu0 0
      %1141 = vmatprep.subr.bf16.mxu0 0
      %1142 = vmatpush2.bf16.msra.mxu0 0
      %1143 = vmatprep.mubr.bf16.mxu0 0
      %1144 = vmatmul.mubr.bf16.gmra.mxu0 %v807
      %v1145 = vpop.f32.mrf.mxu0
      %v1146 = vadd.f32 0.0, %v1145
      %v1147 = vpop.f32.mrf.mxu0
      %v1148 = vadd.f32 0.0, %v1147
      %v1149 = vpop.f32.mrf.mxu0
      %v1150 = vadd.f32 0.0, %v1149
      %v1151 = vpop.f32.mrf.mxu0
      %v1152 = vadd.f32 0.0, %v1151
      %1153 = vmatprep.mubr.bf16.mxu0 0
      %1154 = vmatmul.mubr.bf16.gmra.mxu0 %v808
      %v1155 = vpop.f32.mrf.mxu0
      %v1156 = vadd.f32 0.0, %v1155
      %v1157 = vpop.f32.mrf.mxu0
      %v1158 = vadd.f32 0.0, %v1157
      %v1159 = vpop.f32.mrf.mxu0
      %v1160 = vadd.f32 0.0, %v1159
      %v1161 = vpop.f32.mrf.mxu0
      %v1162 = vadd.f32 0.0, %v1161
      %1163 = vmatprep.mubr.bf16.mxu0 0
      %1164 = vmatmul.mubr.bf16.gmra.mxu0 %v809
      %v1165 = vpop.f32.mrf.mxu0
      %v1166 = vadd.f32 0.0, %v1165
      %v1167 = vpop.f32.mrf.mxu0
      %v1168 = vadd.f32 0.0, %v1167
      %v1169 = vpop.f32.mrf.mxu0
      %v1170 = vadd.f32 0.0, %v1169
      %v1171 = vpop.f32.mrf.mxu0
      %v1172 = vadd.f32 0.0, %v1171
      %1173 = vmatprep.mubr.bf16.mxu0 0
      %1174 = vmatmul.mubr.bf16.gmra.mxu0 %v810
      %v1175 = vpop.f32.mrf.mxu0
      %v1176 = vadd.f32 0.0, %v1175
      %v1177 = vpop.f32.mrf.mxu0
      %v1178 = vadd.f32 0.0, %v1177
      %v1179 = vpop.f32.mrf.mxu0
      %v1180 = vadd.f32 0.0, %v1179
      %v1181 = vpop.f32.mrf.mxu0
      %v1182 = vadd.f32 0.0, %v1181
      %1183 = vmatprep.mubr.bf16.mxu0 0
      %1184 = vmatmul.mubr.bf16.gmra.mxu0 %v811
      %v1185 = vpop.f32.mrf.mxu0
      %v1186 = vadd.f32 0.0, %v1185
      %v1187 = vpop.f32.mrf.mxu0
      %v1188 = vadd.f32 0.0, %v1187
      %v1189 = vpop.f32.mrf.mxu0
      %v1190 = vadd.f32 0.0, %v1189
      %v1191 = vpop.f32.mrf.mxu0
      %v1192 = vadd.f32 0.0, %v1191
      %1193 = vmatprep.mubr.bf16.mxu0 0
      %1194 = vmatmul.mubr.bf16.gmra.mxu0 %v812
      %v1195 = vpop.f32.mrf.mxu0
      %v1196 = vadd.f32 0.0, %v1195
      %v1197 = vpop.f32.mrf.mxu0
      %v1198 = vadd.f32 0.0, %v1197
      %v1199 = vpop.f32.mrf.mxu0
      %v1200 = vadd.f32 0.0, %v1199
      %v1201 = vpop.f32.mrf.mxu0
      %v1202 = vadd.f32 0.0, %v1201
      %1203 = vmatprep.mubr.bf16.mxu0 0
      %1204 = vmatmul.mubr.bf16.gmra.mxu0 %v813
      %v1205 = vpop.f32.mrf.mxu0
      %v1206 = vadd.f32 0.0, %v1205
      %v1207 = vpop.f32.mrf.mxu0
      %v1208 = vadd.f32 0.0, %v1207
      %v1209 = vpop.f32.mrf.mxu0
      %v1210 = vadd.f32 0.0, %v1209
      %v1211 = vpop.f32.mrf.mxu0
      %v1212 = vadd.f32 0.0, %v1211
      %1213 = vmatprep.mubr.bf16.mxu0 0
      %1214 = vmatmul.mubr.bf16.gmra.mxu0 %v814
      %v1215 = vpop.f32.mrf.mxu0
      %v1216 = vadd.f32 0.0, %v1215
      %v1217 = vpop.f32.mrf.mxu0
      %v1218 = vadd.f32 0.0, %v1217
      %v1219 = vpop.f32.mrf.mxu0
      %v1220 = vadd.f32 0.0, %v1219
      %v1221 = vpop.f32.mrf.mxu0
      %v1222 = vadd.f32 0.0, %v1221
      %1223 = vmatprep.mubr.bf16.mxu0 0
      %1224 = vmatmul.mubr.bf16.gmra.mxu0 %v815
      %v1225 = vpop.f32.mrf.mxu0
      %v1226 = vadd.f32 0.0, %v1225
      %v1227 = vpop.f32.mrf.mxu0
      %v1228 = vadd.f32 0.0, %v1227
      %v1229 = vpop.f32.mrf.mxu0
      %v1230 = vadd.f32 0.0, %v1229
      %v1231 = vpop.f32.mrf.mxu0
      %v1232 = vadd.f32 0.0, %v1231
      %1233 = vmatprep.mubr.bf16.mxu0 0
      %1234 = vmatmul.mubr.bf16.gmra.mxu0 %v816
      %v1235 = vpop.f32.mrf.mxu0
      %v1236 = vadd.f32 0.0, %v1235
      %v1237 = vpop.f32.mrf.mxu0
      %v1238 = vadd.f32 0.0, %v1237
      %v1239 = vpop.f32.mrf.mxu0
      %v1240 = vadd.f32 0.0, %v1239
      %v1241 = vpop.f32.mrf.mxu0
      %v1242 = vadd.f32 0.0, %v1241
      %1243 = vmatprep.mubr.bf16.mxu0 0
      %1244 = vmatmul.mubr.bf16.gmra.mxu0 %v817
      %v1245 = vpop.f32.mrf.mxu0
      %v1246 = vadd.f32 0.0, %v1245
      %v1247 = vpop.f32.mrf.mxu0
      %v1248 = vadd.f32 0.0, %v1247
      %v1249 = vpop.f32.mrf.mxu0
      %v1250 = vadd.f32 0.0, %v1249
      %v1251 = vpop.f32.mrf.mxu0
      %v1252 = vadd.f32 0.0, %v1251
      %1253 = vmatprep.mubr.bf16.mxu0 0
      %1254 = vmatmul.mubr.bf16.gmra.mxu0 %v818
      %v1255 = vpop.f32.mrf.mxu0
      %v1256 = vadd.f32 0.0, %v1255
      %v1257 = vpop.f32.mrf.mxu0
      %v1258 = vadd.f32 0.0, %v1257
      %v1259 = vpop.f32.mrf.mxu0
      %v1260 = vadd.f32 0.0, %v1259
      %v1261 = vpop.f32.mrf.mxu0
      %v1262 = vadd.f32 0.0, %v1261
      %1263 = vmatprep.mubr.bf16.mxu0 0
      %1264 = vmatmul.mubr.bf16.gmra.mxu0 %v819
      %v1265 = vpop.f32.mrf.mxu0
      %v1266 = vadd.f32 0.0, %v1265
      %v1267 = vpop.f32.mrf.mxu0
      %v1268 = vadd.f32 0.0, %v1267
      %v1269 = vpop.f32.mrf.mxu0
      %v1270 = vadd.f32 0.0, %v1269
      %v1271 = vpop.f32.mrf.mxu0
      %v1272 = vadd.f32 0.0, %v1271
      %1273 = vmatprep.mubr.bf16.mxu0 0
      %1274 = vmatmul.mubr.bf16.gmra.mxu0 %v820
      %v1275 = vpop.f32.mrf.mxu0
      %v1276 = vadd.f32 0.0, %v1275
      %v1277 = vpop.f32.mrf.mxu0
      %v1278 = vadd.f32 0.0, %v1277
      %v1279 = vpop.f32.mrf.mxu0
      %v1280 = vadd.f32 0.0, %v1279
      %v1281 = vpop.f32.mrf.mxu0
      %v1282 = vadd.f32 0.0, %v1281
      %1283 = vmatprep.mubr.bf16.mxu0 0
      %1284 = vmatmul.mubr.bf16.gmra.mxu0 %v821
      %v1285 = vpop.f32.mrf.mxu0
      %v1286 = vadd.f32 0.0, %v1285
      %v1287 = vpop.f32.mrf.mxu0
      %v1288 = vadd.f32 0.0, %v1287
      %v1289 = vpop.f32.mrf.mxu0
      %v1290 = vadd.f32 0.0, %v1289
      %v1291 = vpop.f32.mrf.mxu0
      %v1292 = vadd.f32 0.0, %v1291
      %1293 = vmatprep.mubr.bf16.mxu0 0
      %1294 = vmatmul.mubr.bf16.gmra.mxu0 %v822
      %v1295 = vpop.f32.mrf.mxu0
      %v1296 = vadd.f32 0.0, %v1295
      %v1297 = vpop.f32.mrf.mxu0
      %v1298 = vadd.f32 0.0, %v1297
      %v1299 = vpop.f32.mrf.mxu0
      %v1300 = vadd.f32 0.0, %v1299
      %v1301 = vpop.f32.mrf.mxu0
      %v1302 = vadd.f32 0.0, %v1301
      %1303 = vdwg.mxu0
      %1304 = vmatprep.subr.bf16.mxu0 %v1060
      %1305 = vmatpush1.bf16.msra.mxu0 %v1059
      %1306 = vmatprep.subr.bf16.mxu0 %v1054
      %1307 = vmatpush1.bf16.msra.mxu0 %v1053
      %1308 = vmatprep.subr.bf16.mxu0 %v1048
      %1309 = vmatpush1.bf16.msra.mxu0 %v1047
      %1310 = vmatprep.subr.bf16.mxu0 %v1042
      %1311 = vmatpush1.bf16.msra.mxu0 %v1041
      %1312 = vmatprep.subr.bf16.mxu0 %v1036
      %1313 = vmatpush1.bf16.msra.mxu0 %v1035
      %1314 = vmatprep.subr.bf16.mxu0 %v1030
      %1315 = vmatpush1.bf16.msra.mxu0 %v1029
      %1316 = vmatprep.subr.bf16.mxu0 %v1024
      %1317 = vmatpush1.bf16.msra.mxu0 %v1023
      %1318 = vmatprep.subr.bf16.mxu0 %v1018
      %1319 = vmatpush1.bf16.msra.mxu0 %v1017
      %1320 = vmatprep.subr.bf16.mxu0 0
      %1321 = vmatpush2.bf16.msra.mxu0 0
      %1322 = vmatprep.subr.bf16.mxu0 0
      %1323 = vmatpush2.bf16.msra.mxu0 0
      %1324 = vmatprep.subr.bf16.mxu0 0
      %1325 = vmatpush2.bf16.msra.mxu0 0
      %1326 = vmatprep.subr.bf16.mxu0 0
      %1327 = vmatpush2.bf16.msra.mxu0 0
      %1328 = vmatprep.subr.bf16.mxu0 0
      %1329 = vmatpush2.bf16.msra.mxu0 0
      %1330 = vmatprep.subr.bf16.mxu0 0
      %1331 = vmatpush2.bf16.msra.mxu0 0
      %1332 = vmatprep.subr.bf16.mxu0 0
      %1333 = vmatpush2.bf16.msra.mxu0 0
      %1334 = vmatprep.subr.bf16.mxu0 0
      %1335 = vmatpush2.bf16.msra.mxu0 0
      %1336 = vmatprep.mubr.bf16.mxu0 0
      %1337 = vmatmul.mubr.bf16.gmra.mxu0 %v807
      %v1338 = vpop.f32.mrf.mxu0
      %v1339 = vadd.f32 0.0, %v1338
      %v1340 = vpop.f32.mrf.mxu0
      %v1341 = vadd.f32 0.0, %v1340
      %v1342 = vpop.f32.mrf.mxu0
      %v1343 = vadd.f32 0.0, %v1342
      %v1344 = vpop.f32.mrf.mxu0
      %v1345 = vadd.f32 0.0, %v1344
      %1346 = vmatprep.mubr.bf16.mxu0 0
      %1347 = vmatmul.mubr.bf16.gmra.mxu0 %v808
      %v1348 = vpop.f32.mrf.mxu0
      %v1349 = vadd.f32 0.0, %v1348
      %v1350 = vpop.f32.mrf.mxu0
      %v1351 = vadd.f32 0.0, %v1350
      %v1352 = vpop.f32.mrf.mxu0
      %v1353 = vadd.f32 0.0, %v1352
      %v1354 = vpop.f32.mrf.mxu0
      %v1355 = vadd.f32 0.0, %v1354
      %1356 = vmatprep.mubr.bf16.mxu0 0
      %1357 = vmatmul.mubr.bf16.gmra.mxu0 %v809
      %v1358 = vpop.f32.mrf.mxu0
      %v1359 = vadd.f32 0.0, %v1358
      %v1360 = vpop.f32.mrf.mxu0
      %v1361 = vadd.f32 0.0, %v1360
      %v1362 = vpop.f32.mrf.mxu0
      %v1363 = vadd.f32 0.0, %v1362
      %v1364 = vpop.f32.mrf.mxu0
      %v1365 = vadd.f32 0.0, %v1364
      %1366 = vmatprep.mubr.bf16.mxu0 0
      %1367 = vmatmul.mubr.bf16.gmra.mxu0 %v810
      %v1368 = vpop.f32.mrf.mxu0
      %v1369 = vadd.f32 0.0, %v1368
      %v1370 = vpop.f32.mrf.mxu0
      %v1371 = vadd.f32 0.0, %v1370
      %v1372 = vpop.f32.mrf.mxu0
      %v1373 = vadd.f32 0.0, %v1372
      %v1374 = vpop.f32.mrf.mxu0
      %v1375 = vadd.f32 0.0, %v1374
      %1376 = vmatprep.mubr.bf16.mxu0 0
      %1377 = vmatmul.mubr.bf16.gmra.mxu0 %v811
      %v1378 = vpop.f32.mrf.mxu0
      %v1379 = vadd.f32 0.0, %v1378
      %v1380 = vpop.f32.mrf.mxu0
      %v1381 = vadd.f32 0.0, %v1380
      %v1382 = vpop.f32.mrf.mxu0
      %v1383 = vadd.f32 0.0, %v1382
      %v1384 = vpop.f32.mrf.mxu0
      %v1385 = vadd.f32 0.0, %v1384
      %1386 = vmatprep.mubr.bf16.mxu0 0
      %1387 = vmatmul.mubr.bf16.gmra.mxu0 %v812
      %v1388 = vpop.f32.mrf.mxu0
      %v1389 = vadd.f32 0.0, %v1388
      %v1390 = vpop.f32.mrf.mxu0
      %v1391 = vadd.f32 0.0, %v1390
      %v1392 = vpop.f32.mrf.mxu0
      %v1393 = vadd.f32 0.0, %v1392
      %v1394 = vpop.f32.mrf.mxu0
      %v1395 = vadd.f32 0.0, %v1394
      %1396 = vmatprep.mubr.bf16.mxu0 0
      %1397 = vmatmul.mubr.bf16.gmra.mxu0 %v813
      %v1398 = vpop.f32.mrf.mxu0
      %v1399 = vadd.f32 0.0, %v1398
      %v1400 = vpop.f32.mrf.mxu0
      %v1401 = vadd.f32 0.0, %v1400
      %v1402 = vpop.f32.mrf.mxu0
      %v1403 = vadd.f32 0.0, %v1402
      %v1404 = vpop.f32.mrf.mxu0
      %v1405 = vadd.f32 0.0, %v1404
      %1406 = vmatprep.mubr.bf16.mxu0 0
      %1407 = vmatmul.mubr.bf16.gmra.mxu0 %v814
      %v1408 = vpop.f32.mrf.mxu0
      %v1409 = vadd.f32 0.0, %v1408
      %v1410 = vpop.f32.mrf.mxu0
      %v1411 = vadd.f32 0.0, %v1410
      %v1412 = vpop.f32.mrf.mxu0
      %v1413 = vadd.f32 0.0, %v1412
      %v1414 = vpop.f32.mrf.mxu0
      %v1415 = vadd.f32 0.0, %v1414
      %1416 = vmatprep.mubr.bf16.mxu0 0
      %1417 = vmatmul.mubr.bf16.gmra.mxu0 %v815
      %v1418 = vpop.f32.mrf.mxu0
      %v1419 = vadd.f32 0.0, %v1418
      %v1420 = vpop.f32.mrf.mxu0
      %v1421 = vadd.f32 0.0, %v1420
      %v1422 = vpop.f32.mrf.mxu0
      %v1423 = vadd.f32 0.0, %v1422
      %v1424 = vpop.f32.mrf.mxu0
      %v1425 = vadd.f32 0.0, %v1424
      %1426 = vmatprep.mubr.bf16.mxu0 0
      %1427 = vmatmul.mubr.bf16.gmra.mxu0 %v816
      %v1428 = vpop.f32.mrf.mxu0
      %v1429 = vadd.f32 0.0, %v1428
      %v1430 = vpop.f32.mrf.mxu0
      %v1431 = vadd.f32 0.0, %v1430
      %v1432 = vpop.f32.mrf.mxu0
      %v1433 = vadd.f32 0.0, %v1432
      %v1434 = vpop.f32.mrf.mxu0
      %v1435 = vadd.f32 0.0, %v1434
      %1436 = vmatprep.mubr.bf16.mxu0 0
      %1437 = vmatmul.mubr.bf16.gmra.mxu0 %v817
      %v1438 = vpop.f32.mrf.mxu0
      %v1439 = vadd.f32 0.0, %v1438
      %v1440 = vpop.f32.mrf.mxu0
      %v1441 = vadd.f32 0.0, %v1440
      %v1442 = vpop.f32.mrf.mxu0
      %v1443 = vadd.f32 0.0, %v1442
      %v1444 = vpop.f32.mrf.mxu0
      %v1445 = vadd.f32 0.0, %v1444
      %1446 = vmatprep.mubr.bf16.mxu0 0
      %1447 = vmatmul.mubr.bf16.gmra.mxu0 %v818
      %v1448 = vpop.f32.mrf.mxu0
      %v1449 = vadd.f32 0.0, %v1448
      %v1450 = vpop.f32.mrf.mxu0
      %v1451 = vadd.f32 0.0, %v1450
      %v1452 = vpop.f32.mrf.mxu0
      %v1453 = vadd.f32 0.0, %v1452
      %v1454 = vpop.f32.mrf.mxu0
      %v1455 = vadd.f32 0.0, %v1454
      %1456 = vmatprep.mubr.bf16.mxu0 0
      %1457 = vmatmul.mubr.bf16.gmra.mxu0 %v819
      %v1458 = vpop.f32.mrf.mxu0
      %v1459 = vadd.f32 0.0, %v1458
      %v1460 = vpop.f32.mrf.mxu0
      %v1461 = vadd.f32 0.0, %v1460
      %v1462 = vpop.f32.mrf.mxu0
      %v1463 = vadd.f32 0.0, %v1462
      %v1464 = vpop.f32.mrf.mxu0
      %v1465 = vadd.f32 0.0, %v1464
      %1466 = vmatprep.mubr.bf16.mxu0 0
      %1467 = vmatmul.mubr.bf16.gmra.mxu0 %v820
      %v1468 = vpop.f32.mrf.mxu0
      %v1469 = vadd.f32 0.0, %v1468
      %v1470 = vpop.f32.mrf.mxu0
      %v1471 = vadd.f32 0.0, %v1470
      %v1472 = vpop.f32.mrf.mxu0
      %v1473 = vadd.f32 0.0, %v1472
      %v1474 = vpop.f32.mrf.mxu0
      %v1475 = vadd.f32 0.0, %v1474
      %1476 = vmatprep.mubr.bf16.mxu0 0
      %1477 = vmatmul.mubr.bf16.gmra.mxu0 %v821
      %v1478 = vpop.f32.mrf.mxu0
      %v1479 = vadd.f32 0.0, %v1478
      %v1480 = vpop.f32.mrf.mxu0
      %v1481 = vadd.f32 0.0, %v1480
      %v1482 = vpop.f32.mrf.mxu0
      %v1483 = vadd.f32 0.0, %v1482
      %v1484 = vpop.f32.mrf.mxu0
      %v1485 = vadd.f32 0.0, %v1484
      %1486 = vmatprep.mubr.bf16.mxu0 0
      %1487 = vmatmul.mubr.bf16.gmra.mxu0 %v822
      %v1488 = vpop.f32.mrf.mxu0
      %v1489 = vadd.f32 0.0, %v1488
      %v1490 = vpop.f32.mrf.mxu0
      %v1491 = vadd.f32 0.0, %v1490
      %v1492 = vpop.f32.mrf.mxu0
      %v1493 = vadd.f32 0.0, %v1492
      %v1494 = vpop.f32.mrf.mxu0
      %v1495 = vadd.f32 0.0, %v1494
      %1496 = vdwg.mxu0
      %1497 = vmatprep.subr.bf16.mxu0 %v1062
      %1498 = vmatpush1.bf16.msra.mxu0 %v1061
      %1499 = vmatprep.subr.bf16.mxu0 %v1056
      %1500 = vmatpush1.bf16.msra.mxu0 %v1055
      %1501 = vmatprep.subr.bf16.mxu0 %v1050
      %1502 = vmatpush1.bf16.msra.mxu0 %v1049
      %1503 = vmatprep.subr.bf16.mxu0 %v1044
      %1504 = vmatpush1.bf16.msra.mxu0 %v1043
      %1505 = vmatprep.subr.bf16.mxu0 %v1038
      %1506 = vmatpush1.bf16.msra.mxu0 %v1037
      %1507 = vmatprep.subr.bf16.mxu0 %v1032
      %1508 = vmatpush1.bf16.msra.mxu0 %v1031
      %1509 = vmatprep.subr.bf16.mxu0 %v1026
      %1510 = vmatpush1.bf16.msra.mxu0 %v1025
      %1511 = vmatprep.subr.bf16.mxu0 %v1020
      %1512 = vmatpush1.bf16.msra.mxu0 %v1019
      %1513 = vmatprep.subr.bf16.mxu0 0
      %1514 = vmatpush2.bf16.msra.mxu0 0
      %1515 = vmatprep.subr.bf16.mxu0 0
      %1516 = vmatpush2.bf16.msra.mxu0 0
      %1517 = vmatprep.subr.bf16.mxu0 0
      %1518 = vmatpush2.bf16.msra.mxu0 0
      %1519 = vmatprep.subr.bf16.mxu0 0
      %1520 = vmatpush2.bf16.msra.mxu0 0
      %1521 = vmatprep.subr.bf16.mxu0 0
      %1522 = vmatpush2.bf16.msra.mxu0 0
      %1523 = vmatprep.subr.bf16.mxu0 0
      %1524 = vmatpush2.bf16.msra.mxu0 0
      %1525 = vmatprep.subr.bf16.mxu0 0
      %1526 = vmatpush2.bf16.msra.mxu0 0
      %1527 = vmatprep.subr.bf16.mxu0 0
      %1528 = vmatpush2.bf16.msra.mxu0 0
      %1529 = vmatprep.mubr.bf16.mxu0 0
      %1530 = vmatmul.mubr.bf16.gmra.mxu0 %v807
      %v1531 = vpop.f32.mrf.mxu0
      %v1532 = vadd.f32 0.0, %v1531
      %v1533 = vpop.f32.mrf.mxu0
      %v1534 = vadd.f32 0.0, %v1533
      %v1535 = vpop.f32.mrf.mxu0
      %v1536 = vadd.f32 0.0, %v1535
      %v1537 = vpop.f32.mrf.mxu0
      %v1538 = vadd.f32 0.0, %v1537
      %1539 = vmatprep.mubr.bf16.mxu0 0
      %1540 = vmatmul.mubr.bf16.gmra.mxu0 %v808
      %v1541 = vpop.f32.mrf.mxu0
      %v1542 = vadd.f32 0.0, %v1541
      %v1543 = vpop.f32.mrf.mxu0
      %v1544 = vadd.f32 0.0, %v1543
      %v1545 = vpop.f32.mrf.mxu0
      %v1546 = vadd.f32 0.0, %v1545
      %v1547 = vpop.f32.mrf.mxu0
      %v1548 = vadd.f32 0.0, %v1547
      %1549 = vmatprep.mubr.bf16.mxu0 0
      %1550 = vmatmul.mubr.bf16.gmra.mxu0 %v809
      %v1551 = vpop.f32.mrf.mxu0
      %v1552 = vadd.f32 0.0, %v1551
      %v1553 = vpop.f32.mrf.mxu0
      %v1554 = vadd.f32 0.0, %v1553
      %v1555 = vpop.f32.mrf.mxu0
      %v1556 = vadd.f32 0.0, %v1555
      %v1557 = vpop.f32.mrf.mxu0
      %v1558 = vadd.f32 0.0, %v1557
      %1559 = vmatprep.mubr.bf16.mxu0 0
      %1560 = vmatmul.mubr.bf16.gmra.mxu0 %v810
      %v1561 = vpop.f32.mrf.mxu0
      %v1562 = vadd.f32 0.0, %v1561
      %v1563 = vpop.f32.mrf.mxu0
      %v1564 = vadd.f32 0.0, %v1563
      %v1565 = vpop.f32.mrf.mxu0
      %v1566 = vadd.f32 0.0, %v1565
      %v1567 = vpop.f32.mrf.mxu0
      %v1568 = vadd.f32 0.0, %v1567
      %1569 = vmatprep.mubr.bf16.mxu0 0
      %1570 = vmatmul.mubr.bf16.gmra.mxu0 %v811
      %v1571 = vpop.f32.mrf.mxu0
      %v1572 = vadd.f32 0.0, %v1571
      %v1573 = vpop.f32.mrf.mxu0
      %v1574 = vadd.f32 0.0, %v1573
      %v1575 = vpop.f32.mrf.mxu0
      %v1576 = vadd.f32 0.0, %v1575
      %v1577 = vpop.f32.mrf.mxu0
      %v1578 = vadd.f32 0.0, %v1577
      %1579 = vmatprep.mubr.bf16.mxu0 0
      %1580 = vmatmul.mubr.bf16.gmra.mxu0 %v812
      %v1581 = vpop.f32.mrf.mxu0
      %v1582 = vadd.f32 0.0, %v1581
      %v1583 = vpop.f32.mrf.mxu0
      %v1584 = vadd.f32 0.0, %v1583
      %v1585 = vpop.f32.mrf.mxu0
      %v1586 = vadd.f32 0.0, %v1585
      %v1587 = vpop.f32.mrf.mxu0
      %v1588 = vadd.f32 0.0, %v1587
      %1589 = vmatprep.mubr.bf16.mxu0 0
      %1590 = vmatmul.mubr.bf16.gmra.mxu0 %v813
      %v1591 = vpop.f32.mrf.mxu0
      %v1592 = vadd.f32 0.0, %v1591
      %v1593 = vpop.f32.mrf.mxu0
      %v1594 = vadd.f32 0.0, %v1593
      %v1595 = vpop.f32.mrf.mxu0
      %v1596 = vadd.f32 0.0, %v1595
      %v1597 = vpop.f32.mrf.mxu0
      %v1598 = vadd.f32 0.0, %v1597
      %1599 = vmatprep.mubr.bf16.mxu0 0
      %1600 = vmatmul.mubr.bf16.gmra.mxu0 %v814
      %v1601 = vpop.f32.mrf.mxu0
      %v1602 = vadd.f32 0.0, %v1601
      %v1603 = vpop.f32.mrf.mxu0
      %v1604 = vadd.f32 0.0, %v1603
      %v1605 = vpop.f32.mrf.mxu0
      %v1606 = vadd.f32 0.0, %v1605
      %v1607 = vpop.f32.mrf.mxu0
      %v1608 = vadd.f32 0.0, %v1607
      %1609 = vmatprep.mubr.bf16.mxu0 0
      %1610 = vmatmul.mubr.bf16.gmra.mxu0 %v815
      %v1611 = vpop.f32.mrf.mxu0
      %v1612 = vadd.f32 0.0, %v1611
      %v1613 = vpop.f32.mrf.mxu0
      %v1614 = vadd.f32 0.0, %v1613
      %v1615 = vpop.f32.mrf.mxu0
      %v1616 = vadd.f32 0.0, %v1615
      %v1617 = vpop.f32.mrf.mxu0
      %v1618 = vadd.f32 0.0, %v1617
      %1619 = vmatprep.mubr.bf16.mxu0 0
      %1620 = vmatmul.mubr.bf16.gmra.mxu0 %v816
      %v1621 = vpop.f32.mrf.mxu0
      %v1622 = vadd.f32 0.0, %v1621
      %v1623 = vpop.f32.mrf.mxu0
      %v1624 = vadd.f32 0.0, %v1623
      %v1625 = vpop.f32.mrf.mxu0
      %v1626 = vadd.f32 0.0, %v1625
      %v1627 = vpop.f32.mrf.mxu0
      %v1628 = vadd.f32 0.0, %v1627
      %1629 = vmatprep.mubr.bf16.mxu0 0
      %1630 = vmatmul.mubr.bf16.gmra.mxu0 %v817
      %v1631 = vpop.f32.mrf.mxu0
      %v1632 = vadd.f32 0.0, %v1631
      %v1633 = vpop.f32.mrf.mxu0
      %v1634 = vadd.f32 0.0, %v1633
      %v1635 = vpop.f32.mrf.mxu0
      %v1636 = vadd.f32 0.0, %v1635
      %v1637 = vpop.f32.mrf.mxu0
      %v1638 = vadd.f32 0.0, %v1637
      %1639 = vmatprep.mubr.bf16.mxu0 0
      %1640 = vmatmul.mubr.bf16.gmra.mxu0 %v818
      %v1641 = vpop.f32.mrf.mxu0
      %v1642 = vadd.f32 0.0, %v1641
      %v1643 = vpop.f32.mrf.mxu0
      %v1644 = vadd.f32 0.0, %v1643
      %v1645 = vpop.f32.mrf.mxu0
      %v1646 = vadd.f32 0.0, %v1645
      %v1647 = vpop.f32.mrf.mxu0
      %v1648 = vadd.f32 0.0, %v1647
      %1649 = vmatprep.mubr.bf16.mxu0 0
      %1650 = vmatmul.mubr.bf16.gmra.mxu0 %v819
      %v1651 = vpop.f32.mrf.mxu0
      %v1652 = vadd.f32 0.0, %v1651
      %v1653 = vpop.f32.mrf.mxu0
      %v1654 = vadd.f32 0.0, %v1653
      %v1655 = vpop.f32.mrf.mxu0
      %v1656 = vadd.f32 0.0, %v1655
      %v1657 = vpop.f32.mrf.mxu0
      %v1658 = vadd.f32 0.0, %v1657
      %1659 = vmatprep.mubr.bf16.mxu0 0
      %1660 = vmatmul.mubr.bf16.gmra.mxu0 %v820
      %v1661 = vpop.f32.mrf.mxu0
      %v1662 = vadd.f32 0.0, %v1661
      %v1663 = vpop.f32.mrf.mxu0
      %v1664 = vadd.f32 0.0, %v1663
      %v1665 = vpop.f32.mrf.mxu0
      %v1666 = vadd.f32 0.0, %v1665
      %v1667 = vpop.f32.mrf.mxu0
      %v1668 = vadd.f32 0.0, %v1667
      %1669 = vmatprep.mubr.bf16.mxu0 0
      %1670 = vmatmul.mubr.bf16.gmra.mxu0 %v821
      %v1671 = vpop.f32.mrf.mxu0
      %v1672 = vadd.f32 0.0, %v1671
      %v1673 = vpop.f32.mrf.mxu0
      %v1674 = vadd.f32 0.0, %v1673
      %v1675 = vpop.f32.mrf.mxu0
      %v1676 = vadd.f32 0.0, %v1675
      %v1677 = vpop.f32.mrf.mxu0
      %v1678 = vadd.f32 0.0, %v1677
      %1679 = vmatprep.mubr.bf16.mxu0 0
      %1680 = vmatmul.mubr.bf16.gmra.mxu0 %v822
      %v1681 = vpop.f32.mrf.mxu0
      %v1682 = vadd.f32 0.0, %v1681
      %v1683 = vpop.f32.mrf.mxu0
      %v1684 = vadd.f32 0.0, %v1683
      %v1685 = vpop.f32.mrf.mxu0
      %v1686 = vadd.f32 0.0, %v1685
      %v1687 = vpop.f32.mrf.mxu0
      %v1688 = vadd.f32 0.0, %v1687
      %1689 = vdwg.mxu0
      %v1690 = vadd.f32 %v1146, %v1150
      %v1691 = vadd.f32 %v1690, %v1156
      %v1692 = vadd.f32 %v1691, %v1160
      %v1693 = vadd.f32 %v1692, %v1166
      %v1694 = vadd.f32 %v1693, %v1170
      %v1695 = vadd.f32 %v1694, %v1176
      %v1696 = vadd.f32 %v1695, %v1180
      %v1697 = vadd.f32 %v1696, %v1186
      %v1698 = vadd.f32 %v1697, %v1190
      %v1699 = vadd.f32 %v1698, %v1196
      %v1700 = vadd.f32 %v1699, %v1200
      %v1701 = vadd.f32 %v1700, %v1206
      %v1702 = vadd.f32 %v1701, %v1210
      %v1703 = vadd.f32 %v1702, %v1216
      %v1704 = vadd.f32 %v1703, %v1220
      %v1705 = vadd.f32 %v1704, %v1226
      %v1706 = vadd.f32 %v1705, %v1230
      %v1707 = vadd.f32 %v1706, %v1236
      %v1708 = vadd.f32 %v1707, %v1240
      %v1709 = vadd.f32 %v1708, %v1246
      %v1710 = vadd.f32 %v1709, %v1250
      %v1711 = vadd.f32 %v1710, %v1256
      %v1712 = vadd.f32 %v1711, %v1260
      %v1713 = vadd.f32 %v1712, %v1266
      %v1714 = vadd.f32 %v1713, %v1270
      %v1715 = vadd.f32 %v1714, %v1276
      %v1716 = vadd.f32 %v1715, %v1280
      %v1717 = vadd.f32 %v1716, %v1286
      %v1718 = vadd.f32 %v1717, %v1290
      %v1719 = vadd.f32 %v1718, %v1296
      %v1720 = vadd.f32 %v1719, %v1300
      %v1721 = vrot.slane %v1720, 4
      %v1722 = vadd.f32 %v1720, %v1721
      %v1723 = vrot.slane %v1722, 2
      %v1724 = vadd.f32 %v1722, %v1723
      %v1725 = vrot.slane %v1724, 1
      %v1726 = vadd.f32 %v1724, %v1725
      %v1727 = vadd.f32 %v1148, %v1152
      %v1728 = vadd.f32 %v1727, %v1158
      %v1729 = vadd.f32 %v1728, %v1162
      %v1730 = vadd.f32 %v1729, %v1168
      %v1731 = vadd.f32 %v1730, %v1172
      %v1732 = vadd.f32 %v1731, %v1178
      %v1733 = vadd.f32 %v1732, %v1182
      %v1734 = vadd.f32 %v1733, %v1188
      %v1735 = vadd.f32 %v1734, %v1192
      %v1736 = vadd.f32 %v1735, %v1198
      %v1737 = vadd.f32 %v1736, %v1202
      %v1738 = vadd.f32 %v1737, %v1208
      %v1739 = vadd.f32 %v1738, %v1212
      %v1740 = vadd.f32 %v1739, %v1218
      %v1741 = vadd.f32 %v1740, %v1222
      %v1742 = vadd.f32 %v1741, %v1228
      %v1743 = vadd.f32 %v1742, %v1232
      %v1744 = vadd.f32 %v1743, %v1238
      %v1745 = vadd.f32 %v1744, %v1242
      %v1746 = vadd.f32 %v1745, %v1248
      %v1747 = vadd.f32 %v1746, %v1252
      %v1748 = vadd.f32 %v1747, %v1258
      %v1749 = vadd.f32 %v1748, %v1262
      %v1750 = vadd.f32 %v1749, %v1268
      %v1751 = vadd.f32 %v1750, %v1272
      %v1752 = vadd.f32 %v1751, %v1278
      %v1753 = vadd.f32 %v1752, %v1282
      %v1754 = vadd.f32 %v1753, %v1288
      %v1755 = vadd.f32 %v1754, %v1292
      %v1756 = vadd.f32 %v1755, %v1298
      %v1757 = vadd.f32 %v1756, %v1302
      %v1758 = vrot.slane %v1757, 4
      %v1759 = vadd.f32 %v1757, %v1758
      %v1760 = vrot.slane %v1759, 2
      %v1761 = vadd.f32 %v1759, %v1760
      %v1762 = vrot.slane %v1761, 1
      %v1763 = vadd.f32 %v1761, %v1762
      %v1764 = vadd.f32 %v1339, %v1343
      %v1765 = vadd.f32 %v1764, %v1349
      %v1766 = vadd.f32 %v1765, %v1353
      %v1767 = vadd.f32 %v1766, %v1359
      %v1768 = vadd.f32 %v1767, %v1363
      %v1769 = vadd.f32 %v1768, %v1369
      %v1770 = vadd.f32 %v1769, %v1373
      %v1771 = vadd.f32 %v1770, %v1379
      %v1772 = vadd.f32 %v1771, %v1383
      %v1773 = vadd.f32 %v1772, %v1389
      %v1774 = vadd.f32 %v1773, %v1393
      %v1775 = vadd.f32 %v1774, %v1399
      %v1776 = vadd.f32 %v1775, %v1403
      %v1777 = vadd.f32 %v1776, %v1409
      %v1778 = vadd.f32 %v1777, %v1413
      %v1779 = vadd.f32 %v1778, %v1419
      %v1780 = vadd.f32 %v1779, %v1423
      %v1781 = vadd.f32 %v1780, %v1429
      %v1782 = vadd.f32 %v1781, %v1433
      %v1783 = vadd.f32 %v1782, %v1439
      %v1784 = vadd.f32 %v1783, %v1443
      %v1785 = vadd.f32 %v1784, %v1449
      %v1786 = vadd.f32 %v1785, %v1453
      %v1787 = vadd.f32 %v1786, %v1459
      %v1788 = vadd.f32 %v1787, %v1463
      %v1789 = vadd.f32 %v1788, %v1469
      %v1790 = vadd.f32 %v1789, %v1473
      %v1791 = vadd.f32 %v1790, %v1479
      %v1792 = vadd.f32 %v1791, %v1483
      %v1793 = vadd.f32 %v1792, %v1489
      %v1794 = vadd.f32 %v1793, %v1493
      %v1795 = vrot.slane %v1794, 4
      %v1796 = vadd.f32 %v1794, %v1795
      %v1797 = vrot.slane %v1796, 2
      %v1798 = vadd.f32 %v1796, %v1797
      %v1799 = vrot.slane %v1798, 1
      %v1800 = vadd.f32 %v1798, %v1799
      %v1801 = vadd.f32 %v1341, %v1345
      %v1802 = vadd.f32 %v1801, %v1351
      %v1803 = vadd.f32 %v1802, %v1355
      %v1804 = vadd.f32 %v1803, %v1361
      %v1805 = vadd.f32 %v1804, %v1365
      %v1806 = vadd.f32 %v1805, %v1371
      %v1807 = vadd.f32 %v1806, %v1375
      %v1808 = vadd.f32 %v1807, %v1381
      %v1809 = vadd.f32 %v1808, %v1385
      %v1810 = vadd.f32 %v1809, %v1391
      %v1811 = vadd.f32 %v1810, %v1395
      %v1812 = vadd.f32 %v1811, %v1401
      %v1813 = vadd.f32 %v1812, %v1405
      %v1814 = vadd.f32 %v1813, %v1411
      %v1815 = vadd.f32 %v1814, %v1415
      %v1816 = vadd.f32 %v1815, %v1421
      %v1817 = vadd.f32 %v1816, %v1425
      %v1818 = vadd.f32 %v1817, %v1431
      %v1819 = vadd.f32 %v1818, %v1435
      %v1820 = vadd.f32 %v1819, %v1441
      %v1821 = vadd.f32 %v1820, %v1445
      %v1822 = vadd.f32 %v1821, %v1451
      %v1823 = vadd.f32 %v1822, %v1455
      %v1824 = vadd.f32 %v1823, %v1461
      %v1825 = vadd.f32 %v1824, %v1465
      %v1826 = vadd.f32 %v1825, %v1471
      %v1827 = vadd.f32 %v1826, %v1475
      %v1828 = vadd.f32 %v1827, %v1481
      %v1829 = vadd.f32 %v1828, %v1485
      %v1830 = vadd.f32 %v1829, %v1491
      %v1831 = vadd.f32 %v1830, %v1495
      %v1832 = vrot.slane %v1831, 4
      %v1833 = vadd.f32 %v1831, %v1832
      %v1834 = vrot.slane %v1833, 2
      %v1835 = vadd.f32 %v1833, %v1834
      %v1836 = vrot.slane %v1835, 1
      %v1837 = vadd.f32 %v1835, %v1836
      %v1838 = vadd.f32 %v1532, %v1536
      %v1839 = vadd.f32 %v1838, %v1542
      %v1840 = vadd.f32 %v1839, %v1546
      %v1841 = vadd.f32 %v1840, %v1552
      %v1842 = vadd.f32 %v1841, %v1556
      %v1843 = vadd.f32 %v1842, %v1562
      %v1844 = vadd.f32 %v1843, %v1566
      %v1845 = vadd.f32 %v1844, %v1572
      %v1846 = vadd.f32 %v1845, %v1576
      %v1847 = vadd.f32 %v1846, %v1582
      %v1848 = vadd.f32 %v1847, %v1586
      %v1849 = vadd.f32 %v1848, %v1592
      %v1850 = vadd.f32 %v1849, %v1596
      %v1851 = vadd.f32 %v1850, %v1602
      %v1852 = vadd.f32 %v1851, %v1606
      %v1853 = vadd.f32 %v1852, %v1612
      %v1854 = vadd.f32 %v1853, %v1616
      %v1855 = vadd.f32 %v1854, %v1622
      %v1856 = vadd.f32 %v1855, %v1626
      %v1857 = vadd.f32 %v1856, %v1632
      %v1858 = vadd.f32 %v1857, %v1636
      %v1859 = vadd.f32 %v1858, %v1642
      %v1860 = vadd.f32 %v1859, %v1646
      %v1861 = vadd.f32 %v1860, %v1652
      %v1862 = vadd.f32 %v1861, %v1656
      %v1863 = vadd.f32 %v1862, %v1662
      %v1864 = vadd.f32 %v1863, %v1666
      %v1865 = vadd.f32 %v1864, %v1672
      %v1866 = vadd.f32 %v1865, %v1676
      %v1867 = vadd.f32 %v1866, %v1682
      %v1868 = vadd.f32 %v1867, %v1686
      %v1869 = vrot.slane %v1868, 4
      %v1870 = vadd.f32 %v1868, %v1869
      %v1871 = vrot.slane %v1870, 2
      %v1872 = vadd.f32 %v1870, %v1871
      %v1873 = vrot.slane %v1872, 1
      %v1874 = vadd.f32 %v1872, %v1873
      %v1875 = vadd.f32 %v1534, %v1538
      %v1876 = vadd.f32 %v1875, %v1544
      %v1877 = vadd.f32 %v1876, %v1548
      %v1878 = vadd.f32 %v1877, %v1554
      %v1879 = vadd.f32 %v1878, %v1558
      %v1880 = vadd.f32 %v1879, %v1564
      %v1881 = vadd.f32 %v1880, %v1568
      %v1882 = vadd.f32 %v1881, %v1574
      %v1883 = vadd.f32 %v1882, %v1578
      %v1884 = vadd.f32 %v1883, %v1584
      %v1885 = vadd.f32 %v1884, %v1588
      %v1886 = vadd.f32 %v1885, %v1594
      %v1887 = vadd.f32 %v1886, %v1598
      %v1888 = vadd.f32 %v1887, %v1604
      %v1889 = vadd.f32 %v1888, %v1608
      %v1890 = vadd.f32 %v1889, %v1614
      %v1891 = vadd.f32 %v1890, %v1618
      %v1892 = vadd.f32 %v1891, %v1624
      %v1893 = vadd.f32 %v1892, %v1628
      %v1894 = vadd.f32 %v1893, %v1634
      %v1895 = vadd.f32 %v1894, %v1638
      %v1896 = vadd.f32 %v1895, %v1644
      %v1897 = vadd.f32 %v1896, %v1648
      %v1898 = vadd.f32 %v1897, %v1654
      %v1899 = vadd.f32 %v1898, %v1658
      %v1900 = vadd.f32 %v1899, %v1664
      %v1901 = vadd.f32 %v1900, %v1668
      %v1902 = vadd.f32 %v1901, %v1674
      %v1903 = vadd.f32 %v1902, %v1678
      %v1904 = vadd.f32 %v1903, %v1684
      %v1905 = vadd.f32 %v1904, %v1688
      %v1906 = vrot.slane %v1905, 4
      %v1907 = vadd.f32 %v1905, %v1906
      %v1908 = vrot.slane %v1907, 2
      %v1909 = vadd.f32 %v1907, %v1908
      %v1910 = vrot.slane %v1909, 1
      %v1911 = vadd.f32 %v1909, %v1910
      %v1912 = vmul.f32 %v1146, %v1146
      %v1913 = vmul.f32 %v1148, %v1148
      %v1914 = vmul.f32 %v1339, %v1339
      %v1915 = vmul.f32 %v1341, %v1341
      %v1916 = vmul.f32 %v1532, %v1532
      %v1917 = vmul.f32 %v1534, %v1534
      %v1918 = vmul.f32 %v1150, %v1150
      %v1919 = vmul.f32 %v1152, %v1152
      %v1920 = vmul.f32 %v1343, %v1343
      %v1921 = vmul.f32 %v1345, %v1345
      %v1922 = vmul.f32 %v1536, %v1536
      %v1923 = vmul.f32 %v1538, %v1538
      %v1924 = vmul.f32 %v1156, %v1156
      %v1925 = vmul.f32 %v1158, %v1158
      %v1926 = vmul.f32 %v1349, %v1349
      %v1927 = vmul.f32 %v1351, %v1351
      %v1928 = vmul.f32 %v1542, %v1542
      %v1929 = vmul.f32 %v1544, %v1544
      %v1930 = vmul.f32 %v1160, %v1160
      %v1931 = vmul.f32 %v1162, %v1162
      %v1932 = vmul.f32 %v1353, %v1353
      %v1933 = vmul.f32 %v1355, %v1355
      %v1934 = vmul.f32 %v1546, %v1546
      %v1935 = vmul.f32 %v1548, %v1548
      %v1936 = vmul.f32 %v1166, %v1166
      %v1937 = vmul.f32 %v1168, %v1168
      %v1938 = vmul.f32 %v1359, %v1359
      %v1939 = vmul.f32 %v1361, %v1361
      %v1940 = vmul.f32 %v1552, %v1552
      %v1941 = vmul.f32 %v1554, %v1554
      %v1942 = vmul.f32 %v1170, %v1170
      %v1943 = vmul.f32 %v1172, %v1172
      %v1944 = vmul.f32 %v1363, %v1363
      %v1945 = vmul.f32 %v1365, %v1365
      %v1946 = vmul.f32 %v1556, %v1556
      %v1947 = vmul.f32 %v1558, %v1558
      %v1948 = vmul.f32 %v1176, %v1176
      %v1949 = vmul.f32 %v1178, %v1178
      %v1950 = vmul.f32 %v1369, %v1369
      %v1951 = vmul.f32 %v1371, %v1371
      %v1952 = vmul.f32 %v1562, %v1562
      %v1953 = vmul.f32 %v1564, %v1564
      %v1954 = vmul.f32 %v1180, %v1180
      %v1955 = vmul.f32 %v1182, %v1182
      %v1956 = vmul.f32 %v1373, %v1373
      %v1957 = vmul.f32 %v1375, %v1375
      %v1958 = vmul.f32 %v1566, %v1566
      %v1959 = vmul.f32 %v1568, %v1568
      %v1960 = vmul.f32 %v1186, %v1186
      %v1961 = vmul.f32 %v1188, %v1188
      %v1962 = vmul.f32 %v1379, %v1379
      %v1963 = vmul.f32 %v1381, %v1381
      %v1964 = vmul.f32 %v1572, %v1572
      %v1965 = vmul.f32 %v1574, %v1574
      %v1966 = vmul.f32 %v1190, %v1190
      %v1967 = vmul.f32 %v1192, %v1192
      %v1968 = vmul.f32 %v1383, %v1383
      %v1969 = vmul.f32 %v1385, %v1385
      %v1970 = vmul.f32 %v1576, %v1576
      %v1971 = vmul.f32 %v1578, %v1578
      %v1972 = vmul.f32 %v1196, %v1196
      %v1973 = vmul.f32 %v1198, %v1198
      %v1974 = vmul.f32 %v1389, %v1389
      %v1975 = vmul.f32 %v1391, %v1391
      %v1976 = vmul.f32 %v1582, %v1582
      %v1977 = vmul.f32 %v1584, %v1584
      %v1978 = vmul.f32 %v1200, %v1200
      %v1979 = vmul.f32 %v1202, %v1202
      %v1980 = vmul.f32 %v1393, %v1393
      %v1981 = vmul.f32 %v1395, %v1395
      %v1982 = vmul.f32 %v1586, %v1586
      %v1983 = vmul.f32 %v1588, %v1588
      %v1984 = vmul.f32 %v1206, %v1206
      %v1985 = vmul.f32 %v1208, %v1208
      %v1986 = vmul.f32 %v1399, %v1399
      %v1987 = vmul.f32 %v1401, %v1401
      %v1988 = vmul.f32 %v1592, %v1592
      %v1989 = vmul.f32 %v1594, %v1594
      %v1990 = vmul.f32 %v1210, %v1210
      %v1991 = vmul.f32 %v1212, %v1212
      %v1992 = vmul.f32 %v1403, %v1403
      %v1993 = vmul.f32 %v1405, %v1405
      %v1994 = vmul.f32 %v1596, %v1596
      %v1995 = vmul.f32 %v1598, %v1598
      %v1996 = vmul.f32 %v1216, %v1216
      %v1997 = vmul.f32 %v1218, %v1218
      %v1998 = vmul.f32 %v1409, %v1409
      %v1999 = vmul.f32 %v1411, %v1411
      %v2000 = vmul.f32 %v1602, %v1602
      %v2001 = vmul.f32 %v1604, %v1604
      %v2002 = vmul.f32 %v1220, %v1220
      %v2003 = vmul.f32 %v1222, %v1222
      %v2004 = vmul.f32 %v1413, %v1413
      %v2005 = vmul.f32 %v1415, %v1415
      %v2006 = vmul.f32 %v1606, %v1606
      %v2007 = vmul.f32 %v1608, %v1608
      %v2008 = vmul.f32 %v1226, %v1226
      %v2009 = vmul.f32 %v1228, %v1228
      %v2010 = vmul.f32 %v1419, %v1419
      %v2011 = vmul.f32 %v1421, %v1421
      %v2012 = vmul.f32 %v1612, %v1612
      %v2013 = vmul.f32 %v1614, %v1614
      %v2014 = vmul.f32 %v1230, %v1230
      %v2015 = vmul.f32 %v1232, %v1232
      %v2016 = vmul.f32 %v1423, %v1423
      %v2017 = vmul.f32 %v1425, %v1425
      %v2018 = vmul.f32 %v1616, %v1616
      %v2019 = vmul.f32 %v1618, %v1618
      %v2020 = vmul.f32 %v1236, %v1236
      %v2021 = vmul.f32 %v1238, %v1238
      %v2022 = vmul.f32 %v1429, %v1429
      %v2023 = vmul.f32 %v1431, %v1431
      %v2024 = vmul.f32 %v1622, %v1622
      %v2025 = vmul.f32 %v1624, %v1624
      %v2026 = vmul.f32 %v1240, %v1240
      %v2027 = vmul.f32 %v1242, %v1242
      %v2028 = vmul.f32 %v1433, %v1433
      %v2029 = vmul.f32 %v1435, %v1435
      %v2030 = vmul.f32 %v1626, %v1626
      %v2031 = vmul.f32 %v1628, %v1628
      %v2032 = vmul.f32 %v1246, %v1246
      %v2033 = vmul.f32 %v1248, %v1248
      %v2034 = vmul.f32 %v1439, %v1439
      %v2035 = vmul.f32 %v1441, %v1441
      %v2036 = vmul.f32 %v1632, %v1632
      %v2037 = vmul.f32 %v1634, %v1634
      %v2038 = vmul.f32 %v1250, %v1250
      %v2039 = vmul.f32 %v1252, %v1252
      %v2040 = vmul.f32 %v1443, %v1443
      %v2041 = vmul.f32 %v1445, %v1445
      %v2042 = vmul.f32 %v1636, %v1636
      %v2043 = vmul.f32 %v1638, %v1638
      %v2044 = vmul.f32 %v1256, %v1256
      %v2045 = vmul.f32 %v1258, %v1258
      %v2046 = vmul.f32 %v1449, %v1449
      %v2047 = vmul.f32 %v1451, %v1451
      %v2048 = vmul.f32 %v1642, %v1642
      %v2049 = vmul.f32 %v1644, %v1644
      %v2050 = vmul.f32 %v1260, %v1260
      %v2051 = vmul.f32 %v1262, %v1262
      %v2052 = vmul.f32 %v1453, %v1453
      %v2053 = vmul.f32 %v1455, %v1455
      %v2054 = vmul.f32 %v1646, %v1646
      %v2055 = vmul.f32 %v1648, %v1648
      %v2056 = vmul.f32 %v1266, %v1266
      %v2057 = vmul.f32 %v1268, %v1268
      %v2058 = vmul.f32 %v1459, %v1459
      %v2059 = vmul.f32 %v1461, %v1461
      %v2060 = vmul.f32 %v1652, %v1652
      %v2061 = vmul.f32 %v1654, %v1654
      %v2062 = vmul.f32 %v1270, %v1270
      %v2063 = vmul.f32 %v1272, %v1272
      %v2064 = vmul.f32 %v1463, %v1463
      %v2065 = vmul.f32 %v1465, %v1465
      %v2066 = vmul.f32 %v1656, %v1656
      %v2067 = vmul.f32 %v1658, %v1658
      %v2068 = vmul.f32 %v1276, %v1276
      %v2069 = vmul.f32 %v1278, %v1278
      %v2070 = vmul.f32 %v1469, %v1469
      %v2071 = vmul.f32 %v1471, %v1471
      %v2072 = vmul.f32 %v1662, %v1662
      %v2073 = vmul.f32 %v1664, %v1664
      %v2074 = vmul.f32 %v1280, %v1280
      %v2075 = vmul.f32 %v1282, %v1282
      %v2076 = vmul.f32 %v1473, %v1473
      %v2077 = vmul.f32 %v1475, %v1475
      %v2078 = vmul.f32 %v1666, %v1666
      %v2079 = vmul.f32 %v1668, %v1668
      %v2080 = vmul.f32 %v1286, %v1286
      %v2081 = vmul.f32 %v1288, %v1288
      %v2082 = vmul.f32 %v1479, %v1479
      %v2083 = vmul.f32 %v1481, %v1481
      %v2084 = vmul.f32 %v1672, %v1672
      %v2085 = vmul.f32 %v1674, %v1674
      %v2086 = vmul.f32 %v1290, %v1290
      %v2087 = vmul.f32 %v1292, %v1292
      %v2088 = vmul.f32 %v1483, %v1483
      %v2089 = vmul.f32 %v1485, %v1485
      %v2090 = vmul.f32 %v1676, %v1676
      %v2091 = vmul.f32 %v1678, %v1678
      %v2092 = vmul.f32 %v1296, %v1296
      %v2093 = vmul.f32 %v1298, %v1298
      %v2094 = vmul.f32 %v1489, %v1489
      %v2095 = vmul.f32 %v1491, %v1491
      %v2096 = vmul.f32 %v1682, %v1682
      %v2097 = vmul.f32 %v1684, %v1684
      %v2098 = vmul.f32 %v1300, %v1300
      %v2099 = vmul.f32 %v1302, %v1302
      %v2100 = vmul.f32 %v1493, %v1493
      %v2101 = vmul.f32 %v1495, %v1495
      %v2102 = vmul.f32 %v1686, %v1686
      %v2103 = vmul.f32 %v1688, %v1688
      %v2104 = vadd.f32 %v1912, %v1918
      %v2105 = vadd.f32 %v2104, %v1924
      %v2106 = vadd.f32 %v2105, %v1930
      %v2107 = vadd.f32 %v2106, %v1936
      %v2108 = vadd.f32 %v2107, %v1942
      %v2109 = vadd.f32 %v2108, %v1948
      %v2110 = vadd.f32 %v2109, %v1954
      %v2111 = vadd.f32 %v2110, %v1960
      %v2112 = vadd.f32 %v2111, %v1966
      %v2113 = vadd.f32 %v2112, %v1972
      %v2114 = vadd.f32 %v2113, %v1978
      %v2115 = vadd.f32 %v2114, %v1984
      %v2116 = vadd.f32 %v2115, %v1990
      %v2117 = vadd.f32 %v2116, %v1996
      %v2118 = vadd.f32 %v2117, %v2002
      %v2119 = vadd.f32 %v2118, %v2008
      %v2120 = vadd.f32 %v2119, %v2014
      %v2121 = vadd.f32 %v2120, %v2020
      %v2122 = vadd.f32 %v2121, %v2026
      %v2123 = vadd.f32 %v2122, %v2032
      %v2124 = vadd.f32 %v2123, %v2038
      %v2125 = vadd.f32 %v2124, %v2044
      %v2126 = vadd.f32 %v2125, %v2050
      %v2127 = vadd.f32 %v2126, %v2056
      %v2128 = vadd.f32 %v2127, %v2062
      %v2129 = vadd.f32 %v2128, %v2068
      %v2130 = vadd.f32 %v2129, %v2074
      %v2131 = vadd.f32 %v2130, %v2080
      %v2132 = vadd.f32 %v2131, %v2086
      %v2133 = vadd.f32 %v2132, %v2092
      %v2134 = vadd.f32 %v2133, %v2098
      %v2135 = vrot.slane %v2134, 4
      %v2136 = vadd.f32 %v2134, %v2135
      %v2137 = vrot.slane %v2136, 2
      %v2138 = vadd.f32 %v2136, %v2137
      %v2139 = vrot.slane %v2138, 1
      %v2140 = vadd.f32 %v2138, %v2139
      %v2141 = vadd.f32 %v1913, %v1919
      %v2142 = vadd.f32 %v2141, %v1925
      %v2143 = vadd.f32 %v2142, %v1931
      %v2144 = vadd.f32 %v2143, %v1937
      %v2145 = vadd.f32 %v2144, %v1943
      %v2146 = vadd.f32 %v2145, %v1949
      %v2147 = vadd.f32 %v2146, %v1955
      %v2148 = vadd.f32 %v2147, %v1961
      %v2149 = vadd.f32 %v2148, %v1967
      %v2150 = vadd.f32 %v2149, %v1973
      %v2151 = vadd.f32 %v2150, %v1979
      %v2152 = vadd.f32 %v2151, %v1985
      %v2153 = vadd.f32 %v2152, %v1991
      %v2154 = vadd.f32 %v2153, %v1997
      %v2155 = vadd.f32 %v2154, %v2003
      %v2156 = vadd.f32 %v2155, %v2009
      %v2157 = vadd.f32 %v2156, %v2015
      %v2158 = vadd.f32 %v2157, %v2021
      %v2159 = vadd.f32 %v2158, %v2027
      %v2160 = vadd.f32 %v2159, %v2033
      %v2161 = vadd.f32 %v2160, %v2039
      %v2162 = vadd.f32 %v2161, %v2045
      %v2163 = vadd.f32 %v2162, %v2051
      %v2164 = vadd.f32 %v2163, %v2057
      %v2165 = vadd.f32 %v2164, %v2063
      %v2166 = vadd.f32 %v2165, %v2069
      %v2167 = vadd.f32 %v2166, %v2075
      %v2168 = vadd.f32 %v2167, %v2081
      %v2169 = vadd.f32 %v2168, %v2087
      %v2170 = vadd.f32 %v2169, %v2093
      %v2171 = vadd.f32 %v2170, %v2099
      %v2172 = vrot.slane %v2171, 4
      %v2173 = vadd.f32 %v2171, %v2172
      %v2174 = vrot.slane %v2173, 2
      %v2175 = vadd.f32 %v2173, %v2174
      %v2176 = vrot.slane %v2175, 1
      %v2177 = vadd.f32 %v2175, %v2176
      %v2178 = vadd.f32 %v1914, %v1920
      %v2179 = vadd.f32 %v2178, %v1926
      %v2180 = vadd.f32 %v2179, %v1932
      %v2181 = vadd.f32 %v2180, %v1938
      %v2182 = vadd.f32 %v2181, %v1944
      %v2183 = vadd.f32 %v2182, %v1950
      %v2184 = vadd.f32 %v2183, %v1956
      %v2185 = vadd.f32 %v2184, %v1962
      %v2186 = vadd.f32 %v2185, %v1968
      %v2187 = vadd.f32 %v2186, %v1974
      %v2188 = vadd.f32 %v2187, %v1980
      %v2189 = vadd.f32 %v2188, %v1986
      %v2190 = vadd.f32 %v2189, %v1992
      %v2191 = vadd.f32 %v2190, %v1998
      %v2192 = vadd.f32 %v2191, %v2004
      %v2193 = vadd.f32 %v2192, %v2010
      %v2194 = vadd.f32 %v2193, %v2016
      %v2195 = vadd.f32 %v2194, %v2022
      %v2196 = vadd.f32 %v2195, %v2028
      %v2197 = vadd.f32 %v2196, %v2034
      %v2198 = vadd.f32 %v2197, %v2040
      %v2199 = vadd.f32 %v2198, %v2046
      %v2200 = vadd.f32 %v2199, %v2052
      %v2201 = vadd.f32 %v2200, %v2058
      %v2202 = vadd.f32 %v2201, %v2064
      %v2203 = vadd.f32 %v2202, %v2070
      %v2204 = vadd.f32 %v2203, %v2076
      %v2205 = vadd.f32 %v2204, %v2082
      %v2206 = vadd.f32 %v2205, %v2088
      %v2207 = vadd.f32 %v2206, %v2094
      %v2208 = vadd.f32 %v2207, %v2100
      %v2209 = vrot.slane %v2208, 4
      %v2210 = vadd.f32 %v2208, %v2209
      %v2211 = vrot.slane %v2210, 2
      %v2212 = vadd.f32 %v2210, %v2211
      %v2213 = vrot.slane %v2212, 1
      %v2214 = vadd.f32 %v2212, %v2213
      %v2215 = vadd.f32 %v1915, %v1921
      %v2216 = vadd.f32 %v2215, %v1927
      %v2217 = vadd.f32 %v2216, %v1933
      %v2218 = vadd.f32 %v2217, %v1939
      %v2219 = vadd.f32 %v2218, %v1945
      %v2220 = vadd.f32 %v2219, %v1951
      %v2221 = vadd.f32 %v2220, %v1957
      %v2222 = vadd.f32 %v2221, %v1963
      %v2223 = vadd.f32 %v2222, %v1969
      %v2224 = vadd.f32 %v2223, %v1975
      %v2225 = vadd.f32 %v2224, %v1981
      %v2226 = vadd.f32 %v2225, %v1987
      %v2227 = vadd.f32 %v2226, %v1993
      %v2228 = vadd.f32 %v2227, %v1999
      %v2229 = vadd.f32 %v2228, %v2005
      %v2230 = vadd.f32 %v2229, %v2011
      %v2231 = vadd.f32 %v2230, %v2017
      %v2232 = vadd.f32 %v2231, %v2023
      %v2233 = vadd.f32 %v2232, %v2029
      %v2234 = vadd.f32 %v2233, %v2035
      %v2235 = vadd.f32 %v2234, %v2041
      %v2236 = vadd.f32 %v2235, %v2047
      %v2237 = vadd.f32 %v2236, %v2053
      %v2238 = vadd.f32 %v2237, %v2059
      %v2239 = vadd.f32 %v2238, %v2065
      %v2240 = vadd.f32 %v2239, %v2071
      %v2241 = vadd.f32 %v2240, %v2077
      %v2242 = vadd.f32 %v2241, %v2083
      %v2243 = vadd.f32 %v2242, %v2089
      %v2244 = vadd.f32 %v2243, %v2095
      %v2245 = vadd.f32 %v2244, %v2101
      %v2246 = vrot.slane %v2245, 4
      %v2247 = vadd.f32 %v2245, %v2246
      %v2248 = vrot.slane %v2247, 2
      %v2249 = vadd.f32 %v2247, %v2248
      %v2250 = vrot.slane %v2249, 1
      %v2251 = vadd.f32 %v2249, %v2250
      %v2252 = vadd.f32 %v1916, %v1922
      %v2253 = vadd.f32 %v2252, %v1928
      %v2254 = vadd.f32 %v2253, %v1934
      %v2255 = vadd.f32 %v2254, %v1940
      %v2256 = vadd.f32 %v2255, %v1946
      %v2257 = vadd.f32 %v2256, %v1952
      %v2258 = vadd.f32 %v2257, %v1958
      %v2259 = vadd.f32 %v2258, %v1964
      %v2260 = vadd.f32 %v2259, %v1970
      %v2261 = vadd.f32 %v2260, %v1976
      %v2262 = vadd.f32 %v2261, %v1982
      %v2263 = vadd.f32 %v2262, %v1988
      %v2264 = vadd.f32 %v2263, %v1994
      %v2265 = vadd.f32 %v2264, %v2000
      %v2266 = vadd.f32 %v2265, %v2006
      %v2267 = vadd.f32 %v2266, %v2012
      %v2268 = vadd.f32 %v2267, %v2018
      %v2269 = vadd.f32 %v2268, %v2024
      %v2270 = vadd.f32 %v2269, %v2030
      %v2271 = vadd.f32 %v2270, %v2036
      %v2272 = vadd.f32 %v2271, %v2042
      %v2273 = vadd.f32 %v2272, %v2048
      %v2274 = vadd.f32 %v2273, %v2054
      %v2275 = vadd.f32 %v2274, %v2060
      %v2276 = vadd.f32 %v2275, %v2066
      %v2277 = vadd.f32 %v2276, %v2072
      %v2278 = vadd.f32 %v2277, %v2078
      %v2279 = vadd.f32 %v2278, %v2084
      %v2280 = vadd.f32 %v2279, %v2090
      %v2281 = vadd.f32 %v2280, %v2096
      %v2282 = vadd.f32 %v2281, %v2102
      %v2283 = vrot.slane %v2282, 4
      %v2284 = vadd.f32 %v2282, %v2283
      %v2285 = vrot.slane %v2284, 2
      %v2286 = vadd.f32 %v2284, %v2285
      %v2287 = vrot.slane %v2286, 1
      %v2288 = vadd.f32 %v2286, %v2287
      %v2289 = vadd.f32 %v1917, %v1923
      %v2290 = vadd.f32 %v2289, %v1929
      %v2291 = vadd.f32 %v2290, %v1935
      %v2292 = vadd.f32 %v2291, %v1941
      %v2293 = vadd.f32 %v2292, %v1947
      %v2294 = vadd.f32 %v2293, %v1953
      %v2295 = vadd.f32 %v2294, %v1959
      %v2296 = vadd.f32 %v2295, %v1965
      %v2297 = vadd.f32 %v2296, %v1971
      %v2298 = vadd.f32 %v2297, %v1977
      %v2299 = vadd.f32 %v2298, %v1983
      %v2300 = vadd.f32 %v2299, %v1989
      %v2301 = vadd.f32 %v2300, %v1995
      %v2302 = vadd.f32 %v2301, %v2001
      %v2303 = vadd.f32 %v2302, %v2007
      %v2304 = vadd.f32 %v2303, %v2013
      %v2305 = vadd.f32 %v2304, %v2019
      %v2306 = vadd.f32 %v2305, %v2025
      %v2307 = vadd.f32 %v2306, %v2031
      %v2308 = vadd.f32 %v2307, %v2037
      %v2309 = vadd.f32 %v2308, %v2043
      %v2310 = vadd.f32 %v2309, %v2049
      %v2311 = vadd.f32 %v2310, %v2055
      %v2312 = vadd.f32 %v2311, %v2061
      %v2313 = vadd.f32 %v2312, %v2067
      %v2314 = vadd.f32 %v2313, %v2073
      %v2315 = vadd.f32 %v2314, %v2079
      %v2316 = vadd.f32 %v2315, %v2085
      %v2317 = vadd.f32 %v2316, %v2091
      %v2318 = vadd.f32 %v2317, %v2097
      %v2319 = vadd.f32 %v2318, %v2103
      %v2320 = vrot.slane %v2319, 4
      %v2321 = vadd.f32 %v2319, %v2320
      %v2322 = vrot.slane %v2321, 2
      %v2323 = vadd.f32 %v2321, %v2322
      %v2324 = vrot.slane %v2323, 1
      %v2325 = vadd.f32 %v2323, %v2324
      %vm2326 = vcmask 1040384
      %v2327 = vsel %vm2326, %v1726, %v2140
      %v2328 = vsel %vm2326, %v1763, %v2177
      %v2329 = vsel %vm2326, %v1800, %v2214
      %v2330 = vsel %vm2326, %v1837, %v2251
      %v2331 = vsel %vm2326, %v1874, %v2288
      %v2332 = vsel %vm2326, %v1911, %v2325
      %v2339 = vcombine.low %v2327, %v2328
      %v2340 = vcombine.low %v2329, %v2330
      %v2342 = vunpack.c.l.s4 1983009808
      %v2343 = vunpack.c.0.s8 %v2342
      %v2344 = vlaneseq
      %v2345 = vshrl.u32 %v2344, 7
      %v2346 = vsub.s32 %v2343, %v2345
      %v2347 = vrot.slane %v2339, %v2346
      %v2349 = vunpack.c.l.s4 1983009808
      %v2350 = vunpack.c.0.s8 %v2349
      %v2351 = vlaneseq
      %v2352 = vshrl.u32 %v2351, 7
      %v2353 = vsub.s32 %v2350, %v2352
      %v2354 = vrot.slane %v2340, %v2353
      %v2355 = vcombine.low %v2347, %v2354
      %v2356 = vcombine.low %v2331, %v2332
      %v2358 = vunpack.c.l.s4 1983009808
      %v2359 = vunpack.c.0.s8 %v2358
      %v2360 = vlaneseq
      %v2361 = vshrl.u32 %v2360, 7
      %v2362 = vsub.s32 %v2359, %v2361
      %v2363 = vrot.slane %v2356, %v2362
      %2366 = vst [vmem:[%s226] sm:$0xff] %v2355
      %2367 = vst [vmem:[%s226 + $0x8] sm:$0xf] %v2363
      %p2368 = scmp.lt.s32.totalorder %s16, 2
      %s2369 = scalar_select %p2368, %s16, 2
      %s2370 = smul.addr %s2369, 6
      %s2371 = smul.addr %s2370, 2
      %s2372 = scalar_lea.vmem %s5, %s2371
      // Predicated region
      $region41: #{auxiliary_head_ppi.4} parent=39 // pred_check
        %p2373 = pneg %p144
      $region42: #{auxiliary_head_ppi.4} parent=39 // pred_check_branch
        %2375 = sbr.rel (%p2373) target = $region44
      $region43: #{auxiliary_head_ppi.4} parent=39 // pred_region
        _
      $region44: #{auxiliary_head_ppi.4} parent=39 // pred_fallthru
        _
    $region40: #{auxiliary_head_ppi.4} parent=5 // pred_fallthru
      _
    %p2376 = scmp.le.s32.totalorder 2, %s11
    // Predicated region
    $region45: #{auxiliary_head_ppi.4} parent=5 // pred_check
      %p2377 = pneg %p2376
    $region46: #{auxiliary_head_ppi.4} parent=5 // pred_check_branch
      %2379 = sbr.rel (%p2377) target = $region48
    $region47: #{auxiliary_head_ppi.4} parent=5 // pred_region
      %s2380 = ssub.s32 %s11, 2
      // Predicated region
      $region49: #{auxiliary_head_ppi.4} parent=47 // pred_check
        %p2381 = pneg %p150
      $region50: #{auxiliary_head_ppi.4} parent=47 // pred_check_branch
        %2383 = sbr.rel (%p2381) target = $region52
      $region51: #{auxiliary_head_ppi.4} parent=47 // pred_region
        %p2384 = scmp.lt.s32.totalorder %s17, 2
        %s2385 = scalar_select %p2384, %s17, 2
        %s2386 = smul.addr %s2385, 6
        %s2387 = smul.addr %s2386, 2
        %s2388 = scalar_lea.vmem %s5, %s2387
      $region52: #{auxiliary_head_ppi.4} parent=47 // pred_fallthru
        _
    $region48: #{auxiliary_head_ppi.4} parent=5 // pred_fallthru
      _
  $region6: #{auxiliary_head_ppi.4} parent=0 // loop_footer
    %s15 = sadd.s32 1, %s11
  $region7: #{auxiliary_head_ppi.4} parent=0 // loop_footer_branch
    %10 = sbr.rel target = $region3
  $region8: #{auxiliary_head_ppi.4} parent=0 // loop_exit
    _

// kernel: auxiliary_head_ppi.5
$region0: #{auxiliary_head_ppi.5}
  #allocation0 [shape = 'u32[]', space=smem, size = 0x4, offset = 0x4, fixed_abs, tag = 'smem constant byte address 0x4 - core index']
  #allocation1 [shape = 'u32[144,128]{1,0:T(1,128)}', space=vmem, size = 0x12000, scoped, tag = 'internal scratch']
  %s0 = inlined_call_operand.vmem [shape: bf16[768,32], index: 0, kind: input, shape index: {}]
  %s1 = inlined_call_operand.vmem [shape: bf16[32,128], index: 1, kind: input, shape index: {}]
  %s2 = inlined_call_operand.vmem [shape: f32[1,128], index: 2, kind: input, shape index: {}]
  %s3 = inlined_call_operand.vmem [shape: f32[1,128], index: 3, kind: input, shape index: {}]
  %s4 = inlined_call_operand.vmem [shape: bf16[128,768], index: 4, kind: input, shape index: {}]
  %s5 = inlined_call_operand.vmem [shape: f32[1,768], index: 5, kind: input, shape index: {}]
  %s6 = inlined_call_operand.vmem [shape: f32[1,768], index: 6, kind: input, shape index: {}]
  %s7 = inlined_call_operand.vmem [shape: bf16[768,128], index: 7, kind: input, shape index: {}]
  %s8 = inlined_call_operand.vmem [shape: f32[1,128], index: 8, kind: input, shape index: {}]
  %s9 = inlined_call_operand.vmem [shape: f32[768,128], index: 9, kind: output, shape index: {}]
  %s10 = sld [smem:[#allocation0]]
  $region69: #{auxiliary_head_ppi.5} parent=0
    _
  %s12 = ssub.s32 1, %s10
  %s13 = scalar_select 0, %s12, %s10
  loop: start=0, step=1, limit=5
  $region2: #{auxiliary_head_ppi.5} parent=0 // loop_pre_header
    _
  $region3: #{auxiliary_head_ppi.5} parent=0 // loop_header
    %s15 = sphi 0, %s19
    %p16 = scmp.ge.s32.totalorder %s15, 5
    %s25 = sphi 0, %s27
    %s28 = sphi 0, %s25
    %s29 = sphi 0, %s28
    %s45 = sphi 0, %s29
    %s49 = sphi 0, %s49
    %s51 = sphi 0, %s49
    %s52 = sphi 0, %s51
    %s66 = sphi 0, %s52
    %s70 = sphi 0, %s70
    %s72 = sphi 0, %s70
    %s73 = sphi 0, %s72
    %s87 = sphi 0, %s73
    %s91 = sphi 0, %s91
    %s93 = sphi 0, %s91
    %s94 = sphi 0, %s93
    %s108 = sphi 0, %s94
    %s112 = sphi 0, %s112
    %s114 = sphi 0, %s112
    %s115 = sphi 0, %s114
    %s129 = sphi 0, %s115
    %s133 = sphi 0, %s133
    %s135 = sphi 0, %s133
    %s136 = sphi 0, %s135
    %s150 = sphi 0, %s136
    %s154 = sphi 0, %s154
    %s156 = sphi 0, %s154
    %s157 = sphi 0, %s156
    %s171 = sphi 0, %s157
    %s175 = sphi 0, %s175
    %s177 = sphi 0, %s175
    %s178 = sphi 0, %s177
    %s192 = sphi 0, %s178
    %s196 = sphi 0, %s196
    %s198 = sphi 0, %s196
    %s199 = sphi 0, %s198
    %s213 = sphi 0, %s199
    %s219 = sphi 0, %s221
    %s222 = sphi 0, %s219
    %s223 = sphi 0, %s222
    %s239 = sphi 0, %s223
  $region4: #{auxiliary_head_ppi.5} parent=0 // loop_header_branch
    %18 = sbr.rel (%p16) target = $region8
  $region5: #{auxiliary_head_ppi.5} parent=0 // loop_body
    %s20 = ssub.s32 %s15, 1
    %s21 = ssub.s32 %s15, 2
    %s22 = sadd.s32 %s15, 1
    %s23 = ssub.s32 %s15, %s22
    %p24 = scmp.eq.s32.totalorder %s23, 0
    %s26 = sadd.s32 %s25, 1
    %s27 = scalar_select %p24, %s25, %s26
    %p30 = pneg %p24
    %p31 = scmp.eq.s32.totalorder %s15, 2
    %p32 = por %p30, %p31
    %p33 = scmp.ne.s32.totalorder %s25, %s28
    %p34 = scmp.eq.s32.totalorder %s15, 0
    %p35 = por %p33, %p34
    %p36 = scmp.ne.s32.totalorder %s25, %s28
    %p37 = scmp.eq.s32.totalorder %s20, 2
    %p38 = por %p36, %p37
    %p39 = scmp.ne.s32.totalorder %s28, %s29
    %p40 = scmp.eq.s32.totalorder %s20, 0
    %p41 = por %p39, %p40
    %p42 = scmp.ne.s32.totalorder %s28, %s29
    %p43 = scmp.eq.s32.totalorder %s21, 2
    %p44 = por %p42, %p43
    %p46 = scmp.ne.s32.totalorder %s29, %s45
    %p47 = scmp.eq.s32.totalorder %s21, 0
    %p48 = por %p46, %p47
    %s50 = sadd.s32 %s49, 1
    %p53 = scmp.eq.s32.totalorder %s15, 2
    %p54 = scmp.ne.s32.totalorder %s49, %s51
    %p55 = scmp.eq.s32.totalorder %s15, 0
    %p56 = por %p54, %p55
    %p57 = scmp.ne.s32.totalorder %s49, %s51
    %p58 = scmp.eq.s32.totalorder %s20, 2
    %p59 = por %p57, %p58
    %p60 = scmp.ne.s32.totalorder %s51, %s52
    %p61 = scmp.eq.s32.totalorder %s20, 0
    %p62 = por %p60, %p61
    %p63 = scmp.ne.s32.totalorder %s51, %s52
    %p64 = scmp.eq.s32.totalorder %s21, 2
    %p65 = por %p63, %p64
    %p67 = scmp.ne.s32.totalorder %s52, %s66
    %p68 = scmp.eq.s32.totalorder %s21, 0
    %p69 = por %p67, %p68
    %s71 = sadd.s32 %s70, 1
    %p74 = scmp.eq.s32.totalorder %s15, 2
    %p75 = scmp.ne.s32.totalorder %s70, %s72
    %p76 = scmp.eq.s32.totalorder %s15, 0
    %p77 = por %p75, %p76
    %p78 = scmp.ne.s32.totalorder %s70, %s72
    %p79 = scmp.eq.s32.totalorder %s20, 2
    %p80 = por %p78, %p79
    %p81 = scmp.ne.s32.totalorder %s72, %s73
    %p82 = scmp.eq.s32.totalorder %s20, 0
    %p83 = por %p81, %p82
    %p84 = scmp.ne.s32.totalorder %s72, %s73
    %p85 = scmp.eq.s32.totalorder %s21, 2
    %p86 = por %p84, %p85
    %p88 = scmp.ne.s32.totalorder %s73, %s87
    %p89 = scmp.eq.s32.totalorder %s21, 0
    %p90 = por %p88, %p89
    %s92 = sadd.s32 %s91, 1
    %p95 = scmp.eq.s32.totalorder %s15, 2
    %p96 = scmp.ne.s32.totalorder %s91, %s93
    %p97 = scmp.eq.s32.totalorder %s15, 0
    %p98 = por %p96, %p97
    %p99 = scmp.ne.s32.totalorder %s91, %s93
    %p100 = scmp.eq.s32.totalorder %s20, 2
    %p101 = por %p99, %p100
    %p102 = scmp.ne.s32.totalorder %s93, %s94
    %p103 = scmp.eq.s32.totalorder %s20, 0
    %p104 = por %p102, %p103
    %p105 = scmp.ne.s32.totalorder %s93, %s94
    %p106 = scmp.eq.s32.totalorder %s21, 2
    %p107 = por %p105, %p106
    %p109 = scmp.ne.s32.totalorder %s94, %s108
    %p110 = scmp.eq.s32.totalorder %s21, 0
    %p111 = por %p109, %p110
    %s113 = sadd.s32 %s112, 1
    %p116 = scmp.eq.s32.totalorder %s15, 2
    %p117 = scmp.ne.s32.totalorder %s112, %s114
    %p118 = scmp.eq.s32.totalorder %s15, 0
    %p119 = por %p117, %p118
    %p120 = scmp.ne.s32.totalorder %s112, %s114
    %p121 = scmp.eq.s32.totalorder %s20, 2
    %p122 = por %p120, %p121
    %p123 = scmp.ne.s32.totalorder %s114, %s115
    %p124 = scmp.eq.s32.totalorder %s20, 0
    %p125 = por %p123, %p124
    %p126 = scmp.ne.s32.totalorder %s114, %s115
    %p127 = scmp.eq.s32.totalorder %s21, 2
    %p128 = por %p126, %p127
    %p130 = scmp.ne.s32.totalorder %s115, %s129
    %p131 = scmp.eq.s32.totalorder %s21, 0
    %p132 = por %p130, %p131
    %s134 = sadd.s32 %s133, 1
    %p137 = scmp.eq.s32.totalorder %s15, 2
    %p138 = scmp.ne.s32.totalorder %s133, %s135
    %p139 = scmp.eq.s32.totalorder %s15, 0
    %p140 = por %p138, %p139
    %p141 = scmp.ne.s32.totalorder %s133, %s135
    %p142 = scmp.eq.s32.totalorder %s20, 2
    %p143 = por %p141, %p142
    %p144 = scmp.ne.s32.totalorder %s135, %s136
    %p145 = scmp.eq.s32.totalorder %s20, 0
    %p146 = por %p144, %p145
    %p147 = scmp.ne.s32.totalorder %s135, %s136
    %p148 = scmp.eq.s32.totalorder %s21, 2
    %p149 = por %p147, %p148
    %p151 = scmp.ne.s32.totalorder %s136, %s150
    %p152 = scmp.eq.s32.totalorder %s21, 0
    %p153 = por %p151, %p152
    %s155 = sadd.s32 %s154, 1
    %p158 = scmp.eq.s32.totalorder %s15, 2
    %p159 = scmp.ne.s32.totalorder %s154, %s156
    %p160 = scmp.eq.s32.totalorder %s15, 0
    %p161 = por %p159, %p160
    %p162 = scmp.ne.s32.totalorder %s154, %s156
    %p163 = scmp.eq.s32.totalorder %s20, 2
    %p164 = por %p162, %p163
    %p165 = scmp.ne.s32.totalorder %s156, %s157
    %p166 = scmp.eq.s32.totalorder %s20, 0
    %p167 = por %p165, %p166
    %p168 = scmp.ne.s32.totalorder %s156, %s157
    %p169 = scmp.eq.s32.totalorder %s21, 2
    %p170 = por %p168, %p169
    %p172 = scmp.ne.s32.totalorder %s157, %s171
    %p173 = scmp.eq.s32.totalorder %s21, 0
    %p174 = por %p172, %p173
    %s176 = sadd.s32 %s175, 1
    %p179 = scmp.eq.s32.totalorder %s15, 2
    %p180 = scmp.ne.s32.totalorder %s175, %s177
    %p181 = scmp.eq.s32.totalorder %s15, 0
    %p182 = por %p180, %p181
    %p183 = scmp.ne.s32.totalorder %s175, %s177
    %p184 = scmp.eq.s32.totalorder %s20, 2
    %p185 = por %p183, %p184
    %p186 = scmp.ne.s32.totalorder %s177, %s178
    %p187 = scmp.eq.s32.totalorder %s20, 0
    %p188 = por %p186, %p187
    %p189 = scmp.ne.s32.totalorder %s177, %s178
    %p190 = scmp.eq.s32.totalorder %s21, 2
    %p191 = por %p189, %p190
    %p193 = scmp.ne.s32.totalorder %s178, %s192
    %p194 = scmp.eq.s32.totalorder %s21, 0
    %p195 = por %p193, %p194
    %s197 = sadd.s32 %s196, 1
    %p200 = scmp.eq.s32.totalorder %s15, 2
    %p201 = scmp.ne.s32.totalorder %s196, %s198
    %p202 = scmp.eq.s32.totalorder %s15, 0
    %p203 = por %p201, %p202
    %p204 = scmp.ne.s32.totalorder %s196, %s198
    %p205 = scmp.eq.s32.totalorder %s20, 2
    %p206 = por %p204, %p205
    %p207 = scmp.ne.s32.totalorder %s198, %s199
    %p208 = scmp.eq.s32.totalorder %s20, 0
    %p209 = por %p207, %p208
    %p210 = scmp.ne.s32.totalorder %s198, %s199
    %p211 = scmp.eq.s32.totalorder %s21, 2
    %p212 = por %p210, %p211
    %p214 = scmp.ne.s32.totalorder %s199, %s213
    %p215 = scmp.eq.s32.totalorder %s21, 0
    %p216 = por %p214, %p215
    %s217 = ssub.s32 %s15, %s22
    %p218 = scmp.eq.s32.totalorder %s217, 0
    %s220 = sadd.s32 %s219, 1
    %s221 = scalar_select %p218, %s219, %s220
    %p224 = pneg %p218
    %p225 = scmp.eq.s32.totalorder %s15, 2
    %p226 = por %p224, %p225
    %p227 = scmp.ne.s32.totalorder %s219, %s222
    %p228 = scmp.eq.s32.totalorder %s15, 0
    %p229 = por %p227, %p228
    %p230 = scmp.ne.s32.totalorder %s219, %s222
    %p231 = scmp.eq.s32.totalorder %s20, 2
    %p232 = por %p230, %p231
    %p233 = scmp.ne.s32.totalorder %s222, %s223
    %p234 = scmp.eq.s32.totalorder %s20, 0
    %p235 = por %p233, %p234
    %p236 = scmp.ne.s32.totalorder %s222, %s223
    %p237 = scmp.eq.s32.totalorder %s21, 2
    %p238 = por %p236, %p237
    %p240 = scmp.ne.s32.totalorder %s223, %s239
    %p241 = scmp.eq.s32.totalorder %s21, 0
    %p242 = por %p240, %p241
    %p243 = scmp.le.s32.totalorder 1, %s15
    %p244 = scmp.lt.s32.totalorder %s15, 4
    %p245 = pnand %p243, %p244
    %p246 = pneg %p245
    // Predicated region
    $region9: #{auxiliary_head_ppi.5} parent=5 // pred_check
      _
    $region10: #{auxiliary_head_ppi.5} parent=5 // pred_check_branch
      %248 = sbr.rel (%p245) target = $region12
    $region11: #{auxiliary_head_ppi.5} parent=5 // pred_region
      %s249 = ssub.s32 %s15, 1
      // Predicated region
      $region13: #{auxiliary_head_ppi.5} parent=11 // pred_check
        %p250 = pneg %p62
      $region14: #{auxiliary_head_ppi.5} parent=11 // pred_check_branch
        %252 = sbr.rel (%p250) target = $region16
      $region15: #{auxiliary_head_ppi.5} parent=11 // pred_region
        _
      $region16: #{auxiliary_head_ppi.5} parent=11 // pred_fallthru
        _
      // Predicated region
      $region17: #{auxiliary_head_ppi.5} parent=11 // pred_check
        %p253 = pneg %p83
      $region18: #{auxiliary_head_ppi.5} parent=11 // pred_check_branch
        %255 = sbr.rel (%p253) target = $region20
      $region19: #{auxiliary_head_ppi.5} parent=11 // pred_region
        _
      $region20: #{auxiliary_head_ppi.5} parent=11 // pred_fallthru
        _
      // Predicated region
      $region21: #{auxiliary_head_ppi.5} parent=11 // pred_check
        %p256 = pneg %p104
      $region22: #{auxiliary_head_ppi.5} parent=11 // pred_check_branch
        %258 = sbr.rel (%p256) target = $region24
      $region23: #{auxiliary_head_ppi.5} parent=11 // pred_region
        _
      $region24: #{auxiliary_head_ppi.5} parent=11 // pred_fallthru
        _
      // Predicated region
      $region25: #{auxiliary_head_ppi.5} parent=11 // pred_check
        %p259 = pneg %p125
      $region26: #{auxiliary_head_ppi.5} parent=11 // pred_check_branch
        %261 = sbr.rel (%p259) target = $region28
      $region27: #{auxiliary_head_ppi.5} parent=11 // pred_region
        _
      $region28: #{auxiliary_head_ppi.5} parent=11 // pred_fallthru
        _
      // Predicated region
      $region29: #{auxiliary_head_ppi.5} parent=11 // pred_check
        %p262 = pneg %p146
      $region30: #{auxiliary_head_ppi.5} parent=11 // pred_check_branch
        %264 = sbr.rel (%p262) target = $region32
      $region31: #{auxiliary_head_ppi.5} parent=11 // pred_region
        _
      $region32: #{auxiliary_head_ppi.5} parent=11 // pred_fallthru
        _
      // Predicated region
      $region33: #{auxiliary_head_ppi.5} parent=11 // pred_check
        %p265 = pneg %p167
      $region34: #{auxiliary_head_ppi.5} parent=11 // pred_check_branch
        %267 = sbr.rel (%p265) target = $region36
      $region35: #{auxiliary_head_ppi.5} parent=11 // pred_region
        _
      $region36: #{auxiliary_head_ppi.5} parent=11 // pred_fallthru
        _
      // Predicated region
      $region37: #{auxiliary_head_ppi.5} parent=11 // pred_check
        %p268 = pneg %p188
      $region38: #{auxiliary_head_ppi.5} parent=11 // pred_check_branch
        %270 = sbr.rel (%p268) target = $region40
      $region39: #{auxiliary_head_ppi.5} parent=11 // pred_region
        _
      $region40: #{auxiliary_head_ppi.5} parent=11 // pred_fallthru
        _
      // Predicated region
      $region41: #{auxiliary_head_ppi.5} parent=11 // pred_check
        %p271 = pneg %p209
      $region42: #{auxiliary_head_ppi.5} parent=11 // pred_check_branch
        %273 = sbr.rel (%p271) target = $region44
      $region43: #{auxiliary_head_ppi.5} parent=11 // pred_region
        _
      $region44: #{auxiliary_head_ppi.5} parent=11 // pred_fallthru
        _
    $region12: #{auxiliary_head_ppi.5} parent=5 // pred_fallthru
      _
    %p274 = scmp.lt.s32.totalorder %s15, 3
    // Predicated region
    $region45: #{auxiliary_head_ppi.5} parent=5 // pred_check
      %p275 = pneg %p274
    $region46: #{auxiliary_head_ppi.5} parent=5 // pred_check_branch
      %277 = sbr.rel (%p275) target = $region48
    $region47: #{auxiliary_head_ppi.5} parent=5 // pred_region
      // Predicated region
      $region49: #{auxiliary_head_ppi.5} parent=47 // pred_check
        %p278 = pneg %p35
      $region50: #{auxiliary_head_ppi.5} parent=47 // pred_check_branch
        %280 = sbr.rel (%p278) target = $region52
      $region51: #{auxiliary_head_ppi.5} parent=47 // pred_region
        %s281 = smul.u32 32, %s15
        %p282 = scmp.lt.s32.totalorder %s281, 95
        %s283 = scalar_select %p282, %s281, 95
        %s284 = smul.addr %s283, 4
        %s285 = scalar_lea.vmem %s0, %s284
        %s286 = smul.u32 32, %s15
      $region52: #{auxiliary_head_ppi.5} parent=47 // pred_fallthru
        _
    $region48: #{auxiliary_head_ppi.5} parent=5 // pred_fallthru
      _
    %p287 = scmp.le.s32.totalorder 1, %s15
    %p288 = scmp.lt.s32.totalorder %s15, 4
    %p289 = pnand %p287, %p288
    %p290 = pneg %p289
    // Predicated region
    $region53: #{auxiliary_head_ppi.5} parent=5 // pred_check
      _
    $region54: #{auxiliary_head_ppi.5} parent=5 // pred_check_branch
      %292 = sbr.rel (%p289) target = $region56
    $region55: #{auxiliary_head_ppi.5} parent=5 // pred_region
      %s293 = ssub.s32 %s15, 1
      %s294 = smul.u32 32, %s20
      %p295 = scmp.lt.s32.totalorder %s294, 95
      %s296 = scalar_select %p295, %s294, 95
      %s297 = smul.addr %s296, 4
      %s298 = scalar_lea.vmem %s0, %s297
      %p299 = pneg %p41
      %p300 = pneg %p38
      %p301 = pneg %p62
      %p302 = pneg %p59
      %p303 = pneg %p83
      %p304 = pneg %p80
      %p305 = pneg %p104
      %p306 = pneg %p101
      %p307 = pneg %p125
      %p308 = pneg %p122
      %p309 = pneg %p146
      %p310 = pneg %p143
      %p311 = pneg %p167
      %p312 = pneg %p164
      %p313 = pneg %p188
      %p314 = pneg %p185
      %p315 = pneg %p209
      %p316 = pneg %p206
      %p317 = pneg %p235
      %p318 = pneg %p232
      %s319 = smul.u32 32, %s20
      %p320 = scmp.lt.s32.totalorder %s319, 95
      %s321 = scalar_select %p320, %s319, 95
      %s322 = smul.addr %s321, 8
      %s323 = scalar_lea.vmem %s9, %s322
      %s324 = smul.u32 32, %s20
      %p325 = scmp.lt.s32.totalorder %s324, 95
      %s326 = scalar_select %p325, %s324, 95
      %s327 = smul.addr %s326, 4
      %s328 = scalar_lea.vmem %s0, %s327
      %s329 = smul.u32 32, %s20
      %s330 = smul.u32 32, %s20
      %p331 = scmp.lt.s32.totalorder %s330, 95
      %s332 = scalar_select %p331, %s330, 95
      %s333 = smul.addr %s332, 8
      %s334 = scalar_lea.vmem %s9, %s333
      %s335 = smul.u32 32, %s20
      %v337 = vld [vmem:[%s328] sm:$0xf]
      %v338 = vld [vmem:[%s328 + $0x4] sm:$0xf]
      %v339 = vld [vmem:[%s328 + $0x8] sm:$0xf]
      %v340 = vld [vmem:[%s328 + $0xc] sm:$0xf]
      %v341 = vld [vmem:[%s328 + $0x10] sm:$0xf]
      %v342 = vld [vmem:[%s328 + $0x14] sm:$0xf]
      %v343 = vld [vmem:[%s328 + $0x18] sm:$0xf]
      %v344 = vld [vmem:[%s328 + $0x1c] sm:$0xf]
      %v345 = vld [vmem:[%s328 + $0x20] sm:$0xf]
      %v346 = vld [vmem:[%s328 + $0x24] sm:$0xf]
      %v347 = vld [vmem:[%s328 + $0x28] sm:$0xf]
      %v348 = vld [vmem:[%s328 + $0x2c] sm:$0xf]
      %v349 = vld [vmem:[%s328 + $0x30] sm:$0xf]
      %v350 = vld [vmem:[%s328 + $0x34] sm:$0xf]
      %v351 = vld [vmem:[%s328 + $0x38] sm:$0xf]
      %v352 = vld [vmem:[%s328 + $0x3c] sm:$0xf]
      %v353 = vld [vmem:[%s328 + $0x40] sm:$0xf]
      %v354 = vld [vmem:[%s328 + $0x44] sm:$0xf]
      %v355 = vld [vmem:[%s328 + $0x48] sm:$0xf]
      %v356 = vld [vmem:[%s328 + $0x4c] sm:$0xf]
      %v357 = vld [vmem:[%s328 + $0x50] sm:$0xf]
      %v358 = vld [vmem:[%s328 + $0x54] sm:$0xf]
      %v359 = vld [vmem:[%s328 + $0x58] sm:$0xf]
      %v360 = vld [vmem:[%s328 + $0x5c] sm:$0xf]
      %v361 = vld [vmem:[%s328 + $0x60] sm:$0xf]
      %v362 = vld [vmem:[%s328 + $0x64] sm:$0xf]
      %v363 = vld [vmem:[%s328 + $0x68] sm:$0xf]
      %v364 = vld [vmem:[%s328 + $0x6c] sm:$0xf]
      %v365 = vld [vmem:[%s328 + $0x70] sm:$0xf]
      %v366 = vld [vmem:[%s328 + $0x74] sm:$0xf]
      %v367 = vld [vmem:[%s328 + $0x78] sm:$0xf]
      %v368 = vld [vmem:[%s328 + $0x7c] sm:$0xf]
      %v369 = vld [vmem:[%s1] sm:$0xf]
      %v370 = vld [vmem:[%s1 + $0x4] sm:$0xf]
      %v371 = vld [vmem:[%s1 + $0x8] sm:$0xf]
      %v372 = vld [vmem:[%s1 + $0xc] sm:$0xf]
      %v405 = vunpack.c.l.b16 %v337
      %v406 = vunpack.c.l.b16 %v338
      %v407 = vunpack.c.l.b16 %v339
      %v408 = vunpack.c.l.b16 %v340
      %v409 = vunpack.c.l.b16 %v341
      %v410 = vunpack.c.l.b16 %v342
      %v411 = vunpack.c.l.b16 %v343
      %v412 = vunpack.c.l.b16 %v344
      %v413 = vunpack.c.l.b16 %v345
      %v414 = vunpack.c.l.b16 %v346
      %v415 = vunpack.c.l.b16 %v347
      %v416 = vunpack.c.l.b16 %v348
      %v417 = vunpack.c.l.b16 %v349
      %v418 = vunpack.c.l.b16 %v350
      %v419 = vunpack.c.l.b16 %v351
      %v420 = vunpack.c.l.b16 %v352
      %v421 = vunpack.c.l.b16 %v353
      %v422 = vunpack.c.l.b16 %v354
      %v423 = vunpack.c.l.b16 %v355
      %v424 = vunpack.c.l.b16 %v356
      %v425 = vunpack.c.l.b16 %v357
      %v426 = vunpack.c.l.b16 %v358
      %v427 = vunpack.c.l.b16 %v359
      %v428 = vunpack.c.l.b16 %v360
      %v429 = vunpack.c.l.b16 %v361
      %v430 = vunpack.c.l.b16 %v362
      %v431 = vunpack.c.l.b16 %v363
      %v432 = vunpack.c.l.b16 %v364
      %v433 = vunpack.c.l.b16 %v365
      %v434 = vunpack.c.l.b16 %v366
      %v435 = vunpack.c.l.b16 %v367
      %v436 = vunpack.c.l.b16 %v368
      %v437 = vpack.c.b16 %v406, %v405
      %v438 = vpack.c.b16 %v408, %v407
      %v439 = vpack.c.b16 %v410, %v409
      %v440 = vpack.c.b16 %v412, %v411
      %v441 = vpack.c.b16 %v414, %v413
      %v442 = vpack.c.b16 %v416, %v415
      %v443 = vpack.c.b16 %v418, %v417
      %v444 = vpack.c.b16 %v420, %v419
      %v445 = vpack.c.b16 %v422, %v421
      %v446 = vpack.c.b16 %v424, %v423
      %v447 = vpack.c.b16 %v426, %v425
      %v448 = vpack.c.b16 %v428, %v427
      %v449 = vpack.c.b16 %v430, %v429
      %v450 = vpack.c.b16 %v432, %v431
      %v451 = vpack.c.b16 %v434, %v433
      %v452 = vpack.c.b16 %v436, %v435
      %v457 = vunpack.c.l.b16 %v369
      %v458 = vunpack.c.l.b16 %v370
      %v459 = vunpack.c.l.b16 %v371
      %v460 = vunpack.c.l.b16 %v372
      %v461 = vpack.c.b16 %v458, %v457
      %v462 = vpack.c.b16 %v460, %v459
      %vm465 = vcmask 261120
      %v467 = vsel %vm465, %v437, 0
      %v470 = vsel %vm465, %v438, 0
      %v473 = vsel %vm465, %v439, 0
      %v476 = vsel %vm465, %v440, 0
      %v479 = vsel %vm465, %v441, 0
      %v482 = vsel %vm465, %v442, 0
      %v485 = vsel %vm465, %v443, 0
      %v488 = vsel %vm465, %v444, 0
      %v491 = vsel %vm465, %v445, 0
      %v494 = vsel %vm465, %v446, 0
      %v497 = vsel %vm465, %v447, 0
      %v500 = vsel %vm465, %v448, 0
      %v503 = vsel %vm465, %v449, 0
      %v506 = vsel %vm465, %v450, 0
      %v509 = vsel %vm465, %v451, 0
      %v512 = vsel %vm465, %v452, 0
      %514 = vmatprep.subr.bf16.mxu0 0
      %515 = vmatpush1.bf16.msra.mxu0 0
      %516 = vmatprep.subr.bf16.mxu0 0
      %517 = vmatpush1.bf16.msra.mxu0 0
      %518 = vmatprep.subr.bf16.mxu0 0
      %519 = vmatpush1.bf16.msra.mxu0 0
      %520 = vmatprep.subr.bf16.mxu0 0
      %521 = vmatpush1.bf16.msra.mxu0 0
      %522 = vmatprep.subr.bf16.mxu0 0
      %523 = vmatpush1.bf16.msra.mxu0 0
      %524 = vmatprep.subr.bf16.mxu0 0
      %525 = vmatpush1.bf16.msra.mxu0 0
      %526 = vmatprep.subr.bf16.mxu0 0
      %527 = vmatpush1.bf16.msra.mxu0 %v462
      %528 = vmatprep.subr.bf16.mxu0 0
      %529 = vmatpush1.bf16.msra.mxu0 %v461
      %530 = vmatprep.subr.bf16.mxu0 0
      %531 = vmatpush2.bf16.msra.mxu0 0
      %532 = vmatprep.subr.bf16.mxu0 0
      %533 = vmatpush2.bf16.msra.mxu0 0
      %534 = vmatprep.subr.bf16.mxu0 0
      %535 = vmatpush2.bf16.msra.mxu0 0
      %536 = vmatprep.subr.bf16.mxu0 0
      %537 = vmatpush2.bf16.msra.mxu0 0
      %538 = vmatprep.subr.bf16.mxu0 0
      %539 = vmatpush2.bf16.msra.mxu0 0
      %540 = vmatprep.subr.bf16.mxu0 0
      %541 = vmatpush2.bf16.msra.mxu0 0
      %542 = vmatprep.subr.bf16.mxu0 0
      %543 = vmatpush2.bf16.msra.mxu0 0
      %544 = vmatprep.subr.bf16.mxu0 0
      %545 = vmatpush2.bf16.msra.mxu0 0
      %546 = vmatprep.mubr.bf16.mxu0 0
      %547 = vmatmul.mubr.bf16.gmra.mxu0 %v467
      %v548 = vpop.f32.mrf.mxu0
      %v549 = vadd.f32 0.0, %v548
      %v550 = vpop.f32.mrf.mxu0
      %v551 = vpop.f32.mrf.mxu0
      %v552 = vadd.f32 0.0, %v551
      %v553 = vpop.f32.mrf.mxu0
      %554 = vmatprep.mubr.bf16.mxu0 0
      %555 = vmatmul.mubr.bf16.gmra.mxu0 %v470
      %v556 = vpop.f32.mrf.mxu0
      %v557 = vadd.f32 0.0, %v556
      %v558 = vpop.f32.mrf.mxu0
      %v559 = vpop.f32.mrf.mxu0
      %v560 = vadd.f32 0.0, %v559
      %v561 = vpop.f32.mrf.mxu0
      %562 = vmatprep.mubr.bf16.mxu0 0
      %563 = vmatmul.mubr.bf16.gmra.mxu0 %v473
      %v564 = vpop.f32.mrf.mxu0
      %v565 = vadd.f32 0.0, %v564
      %v566 = vpop.f32.mrf.mxu0
      %v567 = vpop.f32.mrf.mxu0
      %v568 = vadd.f32 0.0, %v567
      %v569 = vpop.f32.mrf.mxu0
      %570 = vmatprep.mubr.bf16.mxu0 0
      %571 = vmatmul.mubr.bf16.gmra.mxu0 %v476
      %v572 = vpop.f32.mrf.mxu0
      %v573 = vadd.f32 0.0, %v572
      %v574 = vpop.f32.mrf.mxu0
      %v575 = vpop.f32.mrf.mxu0
      %v576 = vadd.f32 0.0, %v575
      %v577 = vpop.f32.mrf.mxu0
      %578 = vmatprep.mubr.bf16.mxu0 0
      %579 = vmatmul.mubr.bf16.gmra.mxu0 %v479
      %v580 = vpop.f32.mrf.mxu0
      %v581 = vadd.f32 0.0, %v580
      %v582 = vpop.f32.mrf.mxu0
      %v583 = vpop.f32.mrf.mxu0
      %v584 = vadd.f32 0.0, %v583
      %v585 = vpop.f32.mrf.mxu0
      %586 = vmatprep.mubr.bf16.mxu0 0
      %587 = vmatmul.mubr.bf16.gmra.mxu0 %v482
      %v588 = vpop.f32.mrf.mxu0
      %v589 = vadd.f32 0.0, %v588
      %v590 = vpop.f32.mrf.mxu0
      %v591 = vpop.f32.mrf.mxu0
      %v592 = vadd.f32 0.0, %v591
      %v593 = vpop.f32.mrf.mxu0
      %594 = vmatprep.mubr.bf16.mxu0 0
      %595 = vmatmul.mubr.bf16.gmra.mxu0 %v485
      %v596 = vpop.f32.mrf.mxu0
      %v597 = vadd.f32 0.0, %v596
      %v598 = vpop.f32.mrf.mxu0
      %v599 = vpop.f32.mrf.mxu0
      %v600 = vadd.f32 0.0, %v599
      %v601 = vpop.f32.mrf.mxu0
      %602 = vmatprep.mubr.bf16.mxu0 0
      %603 = vmatmul.mubr.bf16.gmra.mxu0 %v488
      %v604 = vpop.f32.mrf.mxu0
      %v605 = vadd.f32 0.0, %v604
      %v606 = vpop.f32.mrf.mxu0
      %v607 = vpop.f32.mrf.mxu0
      %v608 = vadd.f32 0.0, %v607
      %v609 = vpop.f32.mrf.mxu0
      %610 = vmatprep.mubr.bf16.mxu0 0
      %611 = vmatmul.mubr.bf16.gmra.mxu0 %v491
      %v612 = vpop.f32.mrf.mxu0
      %v613 = vadd.f32 0.0, %v612
      %v614 = vpop.f32.mrf.mxu0
      %v615 = vpop.f32.mrf.mxu0
      %v616 = vadd.f32 0.0, %v615
      %v617 = vpop.f32.mrf.mxu0
      %618 = vmatprep.mubr.bf16.mxu0 0
      %619 = vmatmul.mubr.bf16.gmra.mxu0 %v494
      %v620 = vpop.f32.mrf.mxu0
      %v621 = vadd.f32 0.0, %v620
      %v622 = vpop.f32.mrf.mxu0
      %v623 = vpop.f32.mrf.mxu0
      %v624 = vadd.f32 0.0, %v623
      %v625 = vpop.f32.mrf.mxu0
      %626 = vmatprep.mubr.bf16.mxu0 0
      %627 = vmatmul.mubr.bf16.gmra.mxu0 %v497
      %v628 = vpop.f32.mrf.mxu0
      %v629 = vadd.f32 0.0, %v628
      %v630 = vpop.f32.mrf.mxu0
      %v631 = vpop.f32.mrf.mxu0
      %v632 = vadd.f32 0.0, %v631
      %v633 = vpop.f32.mrf.mxu0
      %634 = vmatprep.mubr.bf16.mxu0 0
      %635 = vmatmul.mubr.bf16.gmra.mxu0 %v500
      %v636 = vpop.f32.mrf.mxu0
      %v637 = vadd.f32 0.0, %v636
      %v638 = vpop.f32.mrf.mxu0
      %v639 = vpop.f32.mrf.mxu0
      %v640 = vadd.f32 0.0, %v639
      %v641 = vpop.f32.mrf.mxu0
      %642 = vmatprep.mubr.bf16.mxu0 0
      %643 = vmatmul.mubr.bf16.gmra.mxu0 %v503
      %v644 = vpop.f32.mrf.mxu0
      %v645 = vadd.f32 0.0, %v644
      %v646 = vpop.f32.mrf.mxu0
      %v647 = vpop.f32.mrf.mxu0
      %v648 = vadd.f32 0.0, %v647
      %v649 = vpop.f32.mrf.mxu0
      %650 = vmatprep.mubr.bf16.mxu0 0
      %651 = vmatmul.mubr.bf16.gmra.mxu0 %v506
      %v652 = vpop.f32.mrf.mxu0
      %v653 = vadd.f32 0.0, %v652
      %v654 = vpop.f32.mrf.mxu0
      %v655 = vpop.f32.mrf.mxu0
      %v656 = vadd.f32 0.0, %v655
      %v657 = vpop.f32.mrf.mxu0
      %658 = vmatprep.mubr.bf16.mxu0 0
      %659 = vmatmul.mubr.bf16.gmra.mxu0 %v509
      %v660 = vpop.f32.mrf.mxu0
      %v661 = vadd.f32 0.0, %v660
      %v662 = vpop.f32.mrf.mxu0
      %v663 = vpop.f32.mrf.mxu0
      %v664 = vadd.f32 0.0, %v663
      %v665 = vpop.f32.mrf.mxu0
      %666 = vmatprep.mubr.bf16.mxu0 0
      %667 = vmatmul.mubr.bf16.gmra.mxu0 %v512
      %v668 = vpop.f32.mrf.mxu0
      %v669 = vadd.f32 0.0, %v668
      %v670 = vpop.f32.mrf.mxu0
      %v671 = vpop.f32.mrf.mxu0
      %v672 = vadd.f32 0.0, %v671
      %v673 = vpop.f32.mrf.mxu0
      %674 = vdwg.mxu0
      %v675 = vld [vmem:[%s2] sm:$0x1]
      %v677 = vlaneseq
      %v678 = vshrl.u32 %v677, 7
      %v679 = vsub.s32 0, %v678
      %v680 = vrot.slane %v675, %v679
      %v682 = vmul.f32 %v549, %v680
      %v683 = vmul.f32 %v552, %v680
      %v684 = vmul.f32 %v557, %v680
      %v685 = vmul.f32 %v560, %v680
      %v686 = vmul.f32 %v565, %v680
      %v687 = vmul.f32 %v568, %v680
      %v688 = vmul.f32 %v573, %v680
      %v689 = vmul.f32 %v576, %v680
      %v690 = vmul.f32 %v581, %v680
      %v691 = vmul.f32 %v584, %v680
      %v692 = vmul.f32 %v589, %v680
      %v693 = vmul.f32 %v592, %v680
      %v694 = vmul.f32 %v597, %v680
      %v695 = vmul.f32 %v600, %v680
      %v696 = vmul.f32 %v605, %v680
      %v697 = vmul.f32 %v608, %v680
      %v698 = vmul.f32 %v613, %v680
      %v699 = vmul.f32 %v616, %v680
      %v700 = vmul.f32 %v621, %v680
      %v701 = vmul.f32 %v624, %v680
      %v702 = vmul.f32 %v629, %v680
      %v703 = vmul.f32 %v632, %v680
      %v704 = vmul.f32 %v637, %v680
      %v705 = vmul.f32 %v640, %v680
      %v706 = vmul.f32 %v645, %v680
      %v707 = vmul.f32 %v648, %v680
      %v708 = vmul.f32 %v653, %v680
      %v709 = vmul.f32 %v656, %v680
      %v710 = vmul.f32 %v661, %v680
      %v711 = vmul.f32 %v664, %v680
      %v712 = vmul.f32 %v669, %v680
      %v713 = vmul.f32 %v672, %v680
      %v714 = vld [vmem:[%s3] sm:$0x1]
      %v716 = vlaneseq
      %v717 = vshrl.u32 %v716, 7
      %v718 = vsub.s32 0, %v717
      %v719 = vrot.slane %v714, %v718
      %v721 = vadd.f32 %v682, %v719
      %v722 = vadd.f32 %v683, %v719
      %v723 = vadd.f32 %v684, %v719
      %v724 = vadd.f32 %v685, %v719
      %v725 = vadd.f32 %v686, %v719
      %v726 = vadd.f32 %v687, %v719
      %v727 = vadd.f32 %v688, %v719
      %v728 = vadd.f32 %v689, %v719
      %v729 = vadd.f32 %v690, %v719
      %v730 = vadd.f32 %v691, %v719
      %v731 = vadd.f32 %v692, %v719
      %v732 = vadd.f32 %v693, %v719
      %v733 = vadd.f32 %v694, %v719
      %v734 = vadd.f32 %v695, %v719
      %v735 = vadd.f32 %v696, %v719
      %v736 = vadd.f32 %v697, %v719
      %v737 = vadd.f32 %v698, %v719
      %v738 = vadd.f32 %v699, %v719
      %v739 = vadd.f32 %v700, %v719
      %v740 = vadd.f32 %v701, %v719
      %v741 = vadd.f32 %v702, %v719
      %v742 = vadd.f32 %v703, %v719
      %v743 = vadd.f32 %v704, %v719
      %v744 = vadd.f32 %v705, %v719
      %v745 = vadd.f32 %v706, %v719
      %v746 = vadd.f32 %v707, %v719
      %v747 = vadd.f32 %v708, %v719
      %v748 = vadd.f32 %v709, %v719
      %v749 = vadd.f32 %v710, %v719
      %v750 = vadd.f32 %v711, %v719
      %v751 = vadd.f32 %v712, %v719
      %v752 = vadd.f32 %v713, %v719
      %v753 = vmax.f32 %v721, 0.0
      %v754 = vmax.f32 %v722, 0.0
      %v755 = vmax.f32 %v723, 0.0
      %v756 = vmax.f32 %v724, 0.0
      %v757 = vmax.f32 %v725, 0.0
      %v758 = vmax.f32 %v726, 0.0
      %v759 = vmax.f32 %v727, 0.0
      %v760 = vmax.f32 %v728, 0.0
      %v761 = vmax.f32 %v729, 0.0
      %v762 = vmax.f32 %v730, 0.0
      %v763 = vmax.f32 %v731, 0.0
      %v764 = vmax.f32 %v732, 0.0
      %v765 = vmax.f32 %v733, 0.0
      %v766 = vmax.f32 %v734, 0.0
      %v767 = vmax.f32 %v735, 0.0
      %v768 = vmax.f32 %v736, 0.0
      %v769 = vmax.f32 %v737, 0.0
      %v770 = vmax.f32 %v738, 0.0
      %v771 = vmax.f32 %v739, 0.0
      %v772 = vmax.f32 %v740, 0.0
      %v773 = vmax.f32 %v741, 0.0
      %v774 = vmax.f32 %v742, 0.0
      %v775 = vmax.f32 %v743, 0.0
      %v776 = vmax.f32 %v744, 0.0
      %v777 = vmax.f32 %v745, 0.0
      %v778 = vmax.f32 %v746, 0.0
      %v779 = vmax.f32 %v747, 0.0
      %v780 = vmax.f32 %v748, 0.0
      %v781 = vmax.f32 %v749, 0.0
      %v782 = vmax.f32 %v750, 0.0
      %v783 = vmax.f32 %v751, 0.0
      %v784 = vmax.f32 %v752, 0.0
      %v785 = vpack.c.bf16 %v754, %v753
      %v786 = vpack.c.bf16 %v756, %v755
      %v787 = vpack.c.bf16 %v758, %v757
      %v788 = vpack.c.bf16 %v760, %v759
      %v789 = vpack.c.bf16 %v762, %v761
      %v790 = vpack.c.bf16 %v764, %v763
      %v791 = vpack.c.bf16 %v766, %v765
      %v792 = vpack.c.bf16 %v768, %v767
      %v793 = vpack.c.bf16 %v770, %v769
      %v794 = vpack.c.bf16 %v772, %v771
      %v795 = vpack.c.bf16 %v774, %v773
      %v796 = vpack.c.bf16 %v776, %v775
      %v797 = vpack.c.bf16 %v778, %v777
      %v798 = vpack.c.bf16 %v780, %v779
      %v799 = vpack.c.bf16 %v782, %v781
      %v800 = vpack.c.bf16 %v784, %v783
      %v801 = vld [vmem:[%s4] sm:$0xff]
      %v802 = vld [vmem:[%s4 + $0x8] sm:$0xff]
      %v803 = vld [vmem:[%s4 + $0x10] sm:$0xff]
      %v804 = vld [vmem:[%s4 + $0x18] sm:$0xff]
      %v805 = vld [vmem:[%s4 + $0x20] sm:$0xff]
      %v806 = vld [vmem:[%s4 + $0x28] sm:$0xff]
      %v807 = vld [vmem:[%s4 + $0x30] sm:$0xff]
      %v808 = vld [vmem:[%s4 + $0x38] sm:$0xff]
      %v809 = vld [vmem:[%s4 + $0x40] sm:$0xff]
      %v810 = vld [vmem:[%s4 + $0x48] sm:$0xff]
      %v811 = vld [vmem:[%s4 + $0x50] sm:$0xff]
      %v812 = vld [vmem:[%s4 + $0x58] sm:$0xff]
      %v813 = vld [vmem:[%s4 + $0x60] sm:$0xff]
      %v814 = vld [vmem:[%s4 + $0x68] sm:$0xff]
      %v815 = vld [vmem:[%s4 + $0x70] sm:$0xff]
      %v816 = vld [vmem:[%s4 + $0x78] sm:$0xff]
      %v817 = vld [vmem:[%s4 + $0x80] sm:$0xff]
      %v818 = vld [vmem:[%s4 + $0x88] sm:$0xff]
      %v819 = vld [vmem:[%s4 + $0x90] sm:$0xff]
      %v820 = vld [vmem:[%s4 + $0x98] sm:$0xff]
      %v821 = vld [vmem:[%s4 + $0xa0] sm:$0xff]
      %v822 = vld [vmem:[%s4 + $0xa8] sm:$0xff]
      %v823 = vld [vmem:[%s4 + $0xb0] sm:$0xff]
      %v824 = vld [vmem:[%s4 + $0xb8] sm:$0xff]
      %v825 = vld [vmem:[%s4 + $0xc0] sm:$0xff]
      %v826 = vld [vmem:[%s4 + $0xc8] sm:$0xff]
      %v827 = vld [vmem:[%s4 + $0xd0] sm:$0xff]
      %v828 = vld [vmem:[%s4 + $0xd8] sm:$0xff]
      %v829 = vld [vmem:[%s4 + $0xe0] sm:$0xff]
      %v830 = vld [vmem:[%s4 + $0xe8] sm:$0xff]
      %v831 = vld [vmem:[%s4 + $0xf0] sm:$0xff]
      %v832 = vld [vmem:[%s4 + $0xf8] sm:$0xff]
      %v833 = vld [vmem:[%s4 + $0x100] sm:$0xff]
      %v834 = vld [vmem:[%s4 + $0x108] sm:$0xff]
      %v835 = vld [vmem:[%s4 + $0x110] sm:$0xff]
      %v836 = vld [vmem:[%s4 + $0x118] sm:$0xff]
      %v837 = vld [vmem:[%s4 + $0x120] sm:$0xff]
      %v838 = vld [vmem:[%s4 + $0x128] sm:$0xff]
      %v839 = vld [vmem:[%s4 + $0x130] sm:$0xff]
      %v840 = vld [vmem:[%s4 + $0x138] sm:$0xff]
      %v841 = vld [vmem:[%s4 + $0x140] sm:$0xff]
      %v842 = vld [vmem:[%s4 + $0x148] sm:$0xff]
      %v843 = vld [vmem:[%s4 + $0x150] sm:$0xff]
      %v844 = vld [vmem:[%s4 + $0x158] sm:$0xff]
      %v845 = vld [vmem:[%s4 + $0x160] sm:$0xff]
      %v846 = vld [vmem:[%s4 + $0x168] sm:$0xff]
      %v847 = vld [vmem:[%s4 + $0x170] sm:$0xff]
      %v848 = vld [vmem:[%s4 + $0x178] sm:$0xff]
      %v897 = vunpack.c.l.b16 %v801
      %v898 = vunpack.c.h.b16 %v801
      %v899 = vunpack.c.l.b16 %v802
      %v900 = vunpack.c.h.b16 %v802
      %v901 = vunpack.c.l.b16 %v803
      %v902 = vunpack.c.h.b16 %v803
      %v903 = vunpack.c.l.b16 %v804
      %v904 = vunpack.c.h.b16 %v804
      %v905 = vunpack.c.l.b16 %v805
      %v906 = vunpack.c.h.b16 %v805
      %v907 = vunpack.c.l.b16 %v806
      %v908 = vunpack.c.h.b16 %v806
      %v909 = vunpack.c.l.b16 %v807
      %v910 = vunpack.c.h.b16 %v807
      %v911 = vunpack.c.l.b16 %v808
      %v912 = vunpack.c.h.b16 %v808
      %v913 = vunpack.c.l.b16 %v809
      %v914 = vunpack.c.h.b16 %v809
      %v915 = vunpack.c.l.b16 %v810
      %v916 = vunpack.c.h.b16 %v810
      %v917 = vunpack.c.l.b16 %v811
      %v918 = vunpack.c.h.b16 %v811
      %v919 = vunpack.c.l.b16 %v812
      %v920 = vunpack.c.h.b16 %v812
      %v921 = vunpack.c.l.b16 %v813
      %v922 = vunpack.c.h.b16 %v813
      %v923 = vunpack.c.l.b16 %v814
      %v924 = vunpack.c.h.b16 %v814
      %v925 = vunpack.c.l.b16 %v815
      %v926 = vunpack.c.h.b16 %v815
      %v927 = vunpack.c.l.b16 %v816
      %v928 = vunpack.c.h.b16 %v816
      %v929 = vunpack.c.l.b16 %v817
      %v930 = vunpack.c.h.b16 %v817
      %v931 = vunpack.c.l.b16 %v818
      %v932 = vunpack.c.h.b16 %v818
      %v933 = vunpack.c.l.b16 %v819
      %v934 = vunpack.c.h.b16 %v819
      %v935 = vunpack.c.l.b16 %v820
      %v936 = vunpack.c.h.b16 %v820
      %v937 = vunpack.c.l.b16 %v821
      %v938 = vunpack.c.h.b16 %v821
      %v939 = vunpack.c.l.b16 %v822
      %v940 = vunpack.c.h.b16 %v822
      %v941 = vunpack.c.l.b16 %v823
      %v942 = vunpack.c.h.b16 %v823
      %v943 = vunpack.c.l.b16 %v824
      %v944 = vunpack.c.h.b16 %v824
      %v945 = vunpack.c.l.b16 %v825
      %v946 = vunpack.c.h.b16 %v825
      %v947 = vunpack.c.l.b16 %v826
      %v948 = vunpack.c.h.b16 %v826
      %v949 = vunpack.c.l.b16 %v827
      %v950 = vunpack.c.h.b16 %v827
      %v951 = vunpack.c.l.b16 %v828
      %v952 = vunpack.c.h.b16 %v828
      %v953 = vunpack.c.l.b16 %v829
      %v954 = vunpack.c.h.b16 %v829
      %v955 = vunpack.c.l.b16 %v830
      %v956 = vunpack.c.h.b16 %v830
      %v957 = vunpack.c.l.b16 %v831
      %v958 = vunpack.c.h.b16 %v831
      %v959 = vunpack.c.l.b16 %v832
      %v960 = vunpack.c.h.b16 %v832
      %v961 = vunpack.c.l.b16 %v833
      %v962 = vunpack.c.h.b16 %v833
      %v963 = vunpack.c.l.b16 %v834
      %v964 = vunpack.c.h.b16 %v834
      %v965 = vunpack.c.l.b16 %v835
      %v966 = vunpack.c.h.b16 %v835
      %v967 = vunpack.c.l.b16 %v836
      %v968 = vunpack.c.h.b16 %v836
      %v969 = vunpack.c.l.b16 %v837
      %v970 = vunpack.c.h.b16 %v837
      %v971 = vunpack.c.l.b16 %v838
      %v972 = vunpack.c.h.b16 %v838
      %v973 = vunpack.c.l.b16 %v839
      %v974 = vunpack.c.h.b16 %v839
      %v975 = vunpack.c.l.b16 %v840
      %v976 = vunpack.c.h.b16 %v840
      %v977 = vunpack.c.l.b16 %v841
      %v978 = vunpack.c.h.b16 %v841
      %v979 = vunpack.c.l.b16 %v842
      %v980 = vunpack.c.h.b16 %v842
      %v981 = vunpack.c.l.b16 %v843
      %v982 = vunpack.c.h.b16 %v843
      %v983 = vunpack.c.l.b16 %v844
      %v984 = vunpack.c.h.b16 %v844
      %v985 = vunpack.c.l.b16 %v845
      %v986 = vunpack.c.h.b16 %v845
      %v987 = vunpack.c.l.b16 %v846
      %v988 = vunpack.c.h.b16 %v846
      %v989 = vunpack.c.l.b16 %v847
      %v990 = vunpack.c.h.b16 %v847
      %v991 = vunpack.c.l.b16 %v848
      %v992 = vunpack.c.h.b16 %v848
      %v993 = vpack.c.b16 %v903, %v897
      %v994 = vpack.c.b16 %v904, %v898
      %v995 = vpack.c.b16 %v905, %v899
      %v996 = vpack.c.b16 %v906, %v900
      %v997 = vpack.c.b16 %v907, %v901
      %v998 = vpack.c.b16 %v908, %v902
      %v999 = vpack.c.b16 %v915, %v909
      %v1000 = vpack.c.b16 %v916, %v910
      %v1001 = vpack.c.b16 %v917, %v911
      %v1002 = vpack.c.b16 %v918, %v912
      %v1003 = vpack.c.b16 %v919, %v913
      %v1004 = vpack.c.b16 %v920, %v914
      %v1005 = vpack.c.b16 %v927, %v921
      %v1006 = vpack.c.b16 %v928, %v922
      %v1007 = vpack.c.b16 %v929, %v923
      %v1008 = vpack.c.b16 %v930, %v924
      %v1009 = vpack.c.b16 %v931, %v925
      %v1010 = vpack.c.b16 %v932, %v926
      %v1011 = vpack.c.b16 %v939, %v933
      %v1012 = vpack.c.b16 %v940, %v934
      %v1013 = vpack.c.b16 %v941, %v935
      %v1014 = vpack.c.b16 %v942, %v936
      %v1015 = vpack.c.b16 %v943, %v937
      %v1016 = vpack.c.b16 %v944, %v938
      %v1017 = vpack.c.b16 %v951, %v945
      %v1018 = vpack.c.b16 %v952, %v946
      %v1019 = vpack.c.b16 %v953, %v947
      %v1020 = vpack.c.b16 %v954, %v948
      %v1021 = vpack.c.b16 %v955, %v949
      %v1022 = vpack.c.b16 %v956, %v950
      %v1023 = vpack.c.b16 %v963, %v957
      %v1024 = vpack.c.b16 %v964, %v958
      %v1025 = vpack.c.b16 %v965, %v959
      %v1026 = vpack.c.b16 %v966, %v960
      %v1027 = vpack.c.b16 %v967, %v961
      %v1028 = vpack.c.b16 %v968, %v962
      %v1029 = vpack.c.b16 %v975, %v969
      %v1030 = vpack.c.b16 %v976, %v970
      %v1031 = vpack.c.b16 %v977, %v971
      %v1032 = vpack.c.b16 %v978, %v972
      %v1033 = vpack.c.b16 %v979, %v973
      %v1034 = vpack.c.b16 %v980, %v974
      %v1035 = vpack.c.b16 %v987, %v981
      %v1036 = vpack.c.b16 %v988, %v982
      %v1037 = vpack.c.b16 %v989, %v983
      %v1038 = vpack.c.b16 %v990, %v984
      %v1039 = vpack.c.b16 %v991, %v985
      %v1040 = vpack.c.b16 %v992, %v986
      %1089 = vmatprep.subr.bf16.mxu0 %v1036
      %1090 = vmatpush1.bf16.msra.mxu0 %v1035
      %1091 = vmatprep.subr.bf16.mxu0 %v1030
      %1092 = vmatpush1.bf16.msra.mxu0 %v1029
      %1093 = vmatprep.subr.bf16.mxu0 %v1024
      %1094 = vmatpush1.bf16.msra.mxu0 %v1023
      %1095 = vmatprep.subr.bf16.mxu0 %v1018
      %1096 = vmatpush1.bf16.msra.mxu0 %v1017
      %1097 = vmatprep.subr.bf16.mxu0 %v1012
      %1098 = vmatpush1.bf16.msra.mxu0 %v1011
      %1099 = vmatprep.subr.bf16.mxu0 %v1006
      %1100 = vmatpush1.bf16.msra.mxu0 %v1005
      %1101 = vmatprep.subr.bf16.mxu0 %v1000
      %1102 = vmatpush1.bf16.msra.mxu0 %v999
      %1103 = vmatprep.subr.bf16.mxu0 %v994
      %1104 = vmatpush1.bf16.msra.mxu0 %v993
      %1105 = vmatprep.subr.bf16.mxu0 0
      %1106 = vmatpush2.bf16.msra.mxu0 0
      %1107 = vmatprep.subr.bf16.mxu0 0
      %1108 = vmatpush2.bf16.msra.mxu0 0
      %1109 = vmatprep.subr.bf16.mxu0 0
      %1110 = vmatpush2.bf16.msra.mxu0 0
      %1111 = vmatprep.subr.bf16.mxu0 0
      %1112 = vmatpush2.bf16.msra.mxu0 0
      %1113 = vmatprep.subr.bf16.mxu0 0
      %1114 = vmatpush2.bf16.msra.mxu0 0
      %1115 = vmatprep.subr.bf16.mxu0 0
      %1116 = vmatpush2.bf16.msra.mxu0 0
      %1117 = vmatprep.subr.bf16.mxu0 0
      %1118 = vmatpush2.bf16.msra.mxu0 0
      %1119 = vmatprep.subr.bf16.mxu0 0
      %1120 = vmatpush2.bf16.msra.mxu0 0
      %1121 = vmatprep.mubr.bf16.mxu0 0
      %1122 = vmatmul.mubr.bf16.gmra.mxu0 %v785
      %v1123 = vpop.f32.mrf.mxu0
      %v1124 = vadd.f32 0.0, %v1123
      %v1125 = vpop.f32.mrf.mxu0
      %v1126 = vadd.f32 0.0, %v1125
      %v1127 = vpop.f32.mrf.mxu0
      %v1128 = vadd.f32 0.0, %v1127
      %v1129 = vpop.f32.mrf.mxu0
      %v1130 = vadd.f32 0.0, %v1129
      %1131 = vmatprep.mubr.bf16.mxu0 0
      %1132 = vmatmul.mubr.bf16.gmra.mxu0 %v786
      %v1133 = vpop.f32.mrf.mxu0
      %v1134 = vadd.f32 0.0, %v1133
      %v1135 = vpop.f32.mrf.mxu0
      %v1136 = vadd.f32 0.0, %v1135
      %v1137 = vpop.f32.mrf.mxu0
      %v1138 = vadd.f32 0.0, %v1137
      %v1139 = vpop.f32.mrf.mxu0
      %v1140 = vadd.f32 0.0, %v1139
      %1141 = vmatprep.mubr.bf16.mxu0 0
      %1142 = vmatmul.mubr.bf16.gmra.mxu0 %v787
      %v1143 = vpop.f32.mrf.mxu0
      %v1144 = vadd.f32 0.0, %v1143
      %v1145 = vpop.f32.mrf.mxu0
      %v1146 = vadd.f32 0.0, %v1145
      %v1147 = vpop.f32.mrf.mxu0
      %v1148 = vadd.f32 0.0, %v1147
      %v1149 = vpop.f32.mrf.mxu0
      %v1150 = vadd.f32 0.0, %v1149
      %1151 = vmatprep.mubr.bf16.mxu0 0
      %1152 = vmatmul.mubr.bf16.gmra.mxu0 %v788
      %v1153 = vpop.f32.mrf.mxu0
      %v1154 = vadd.f32 0.0, %v1153
      %v1155 = vpop.f32.mrf.mxu0
      %v1156 = vadd.f32 0.0, %v1155
      %v1157 = vpop.f32.mrf.mxu0
      %v1158 = vadd.f32 0.0, %v1157
      %v1159 = vpop.f32.mrf.mxu0
      %v1160 = vadd.f32 0.0, %v1159
      %1161 = vmatprep.mubr.bf16.mxu0 0
      %1162 = vmatmul.mubr.bf16.gmra.mxu0 %v789
      %v1163 = vpop.f32.mrf.mxu0
      %v1164 = vadd.f32 0.0, %v1163
      %v1165 = vpop.f32.mrf.mxu0
      %v1166 = vadd.f32 0.0, %v1165
      %v1167 = vpop.f32.mrf.mxu0
      %v1168 = vadd.f32 0.0, %v1167
      %v1169 = vpop.f32.mrf.mxu0
      %v1170 = vadd.f32 0.0, %v1169
      %1171 = vmatprep.mubr.bf16.mxu0 0
      %1172 = vmatmul.mubr.bf16.gmra.mxu0 %v790
      %v1173 = vpop.f32.mrf.mxu0
      %v1174 = vadd.f32 0.0, %v1173
      %v1175 = vpop.f32.mrf.mxu0
      %v1176 = vadd.f32 0.0, %v1175
      %v1177 = vpop.f32.mrf.mxu0
      %v1178 = vadd.f32 0.0, %v1177
      %v1179 = vpop.f32.mrf.mxu0
      %v1180 = vadd.f32 0.0, %v1179
      %1181 = vmatprep.mubr.bf16.mxu0 0
      %1182 = vmatmul.mubr.bf16.gmra.mxu0 %v791
      %v1183 = vpop.f32.mrf.mxu0
      %v1184 = vadd.f32 0.0, %v1183
      %v1185 = vpop.f32.mrf.mxu0
      %v1186 = vadd.f32 0.0, %v1185
      %v1187 = vpop.f32.mrf.mxu0
      %v1188 = vadd.f32 0.0, %v1187
      %v1189 = vpop.f32.mrf.mxu0
      %v1190 = vadd.f32 0.0, %v1189
      %1191 = vmatprep.mubr.bf16.mxu0 0
      %1192 = vmatmul.mubr.bf16.gmra.mxu0 %v792
      %v1193 = vpop.f32.mrf.mxu0
      %v1194 = vadd.f32 0.0, %v1193
      %v1195 = vpop.f32.mrf.mxu0
      %v1196 = vadd.f32 0.0, %v1195
      %v1197 = vpop.f32.mrf.mxu0
      %v1198 = vadd.f32 0.0, %v1197
      %v1199 = vpop.f32.mrf.mxu0
      %v1200 = vadd.f32 0.0, %v1199
      %1201 = vmatprep.mubr.bf16.mxu0 0
      %1202 = vmatmul.mubr.bf16.gmra.mxu0 %v793
      %v1203 = vpop.f32.mrf.mxu0
      %v1204 = vadd.f32 0.0, %v1203
      %v1205 = vpop.f32.mrf.mxu0
      %v1206 = vadd.f32 0.0, %v1205
      %v1207 = vpop.f32.mrf.mxu0
      %v1208 = vadd.f32 0.0, %v1207
      %v1209 = vpop.f32.mrf.mxu0
      %v1210 = vadd.f32 0.0, %v1209
      %1211 = vmatprep.mubr.bf16.mxu0 0
      %1212 = vmatmul.mubr.bf16.gmra.mxu0 %v794
      %v1213 = vpop.f32.mrf.mxu0
      %v1214 = vadd.f32 0.0, %v1213
      %v1215 = vpop.f32.mrf.mxu0
      %v1216 = vadd.f32 0.0, %v1215
      %v1217 = vpop.f32.mrf.mxu0
      %v1218 = vadd.f32 0.0, %v1217
      %v1219 = vpop.f32.mrf.mxu0
      %v1220 = vadd.f32 0.0, %v1219
      %1221 = vmatprep.mubr.bf16.mxu0 0
      %1222 = vmatmul.mubr.bf16.gmra.mxu0 %v795
      %v1223 = vpop.f32.mrf.mxu0
      %v1224 = vadd.f32 0.0, %v1223
      %v1225 = vpop.f32.mrf.mxu0
      %v1226 = vadd.f32 0.0, %v1225
      %v1227 = vpop.f32.mrf.mxu0
      %v1228 = vadd.f32 0.0, %v1227
      %v1229 = vpop.f32.mrf.mxu0
      %v1230 = vadd.f32 0.0, %v1229
      %1231 = vmatprep.mubr.bf16.mxu0 0
      %1232 = vmatmul.mubr.bf16.gmra.mxu0 %v796
      %v1233 = vpop.f32.mrf.mxu0
      %v1234 = vadd.f32 0.0, %v1233
      %v1235 = vpop.f32.mrf.mxu0
      %v1236 = vadd.f32 0.0, %v1235
      %v1237 = vpop.f32.mrf.mxu0
      %v1238 = vadd.f32 0.0, %v1237
      %v1239 = vpop.f32.mrf.mxu0
      %v1240 = vadd.f32 0.0, %v1239
      %1241 = vmatprep.mubr.bf16.mxu0 0
      %1242 = vmatmul.mubr.bf16.gmra.mxu0 %v797
      %v1243 = vpop.f32.mrf.mxu0
      %v1244 = vadd.f32 0.0, %v1243
      %v1245 = vpop.f32.mrf.mxu0
      %v1246 = vadd.f32 0.0, %v1245
      %v1247 = vpop.f32.mrf.mxu0
      %v1248 = vadd.f32 0.0, %v1247
      %v1249 = vpop.f32.mrf.mxu0
      %v1250 = vadd.f32 0.0, %v1249
      %1251 = vmatprep.mubr.bf16.mxu0 0
      %1252 = vmatmul.mubr.bf16.gmra.mxu0 %v798
      %v1253 = vpop.f32.mrf.mxu0
      %v1254 = vadd.f32 0.0, %v1253
      %v1255 = vpop.f32.mrf.mxu0
      %v1256 = vadd.f32 0.0, %v1255
      %v1257 = vpop.f32.mrf.mxu0
      %v1258 = vadd.f32 0.0, %v1257
      %v1259 = vpop.f32.mrf.mxu0
      %v1260 = vadd.f32 0.0, %v1259
      %1261 = vmatprep.mubr.bf16.mxu0 0
      %1262 = vmatmul.mubr.bf16.gmra.mxu0 %v799
      %v1263 = vpop.f32.mrf.mxu0
      %v1264 = vadd.f32 0.0, %v1263
      %v1265 = vpop.f32.mrf.mxu0
      %v1266 = vadd.f32 0.0, %v1265
      %v1267 = vpop.f32.mrf.mxu0
      %v1268 = vadd.f32 0.0, %v1267
      %v1269 = vpop.f32.mrf.mxu0
      %v1270 = vadd.f32 0.0, %v1269
      %1271 = vmatprep.mubr.bf16.mxu0 0
      %1272 = vmatmul.mubr.bf16.gmra.mxu0 %v800
      %v1273 = vpop.f32.mrf.mxu0
      %v1274 = vadd.f32 0.0, %v1273
      %v1275 = vpop.f32.mrf.mxu0
      %v1276 = vadd.f32 0.0, %v1275
      %v1277 = vpop.f32.mrf.mxu0
      %v1278 = vadd.f32 0.0, %v1277
      %v1279 = vpop.f32.mrf.mxu0
      %v1280 = vadd.f32 0.0, %v1279
      %1281 = vdwg.mxu0
      %1282 = vmatprep.subr.bf16.mxu0 %v1038
      %1283 = vmatpush1.bf16.msra.mxu0 %v1037
      %1284 = vmatprep.subr.bf16.mxu0 %v1032
      %1285 = vmatpush1.bf16.msra.mxu0 %v1031
      %1286 = vmatprep.subr.bf16.mxu0 %v1026
      %1287 = vmatpush1.bf16.msra.mxu0 %v1025
      %1288 = vmatprep.subr.bf16.mxu0 %v1020
      %1289 = vmatpush1.bf16.msra.mxu0 %v1019
      %1290 = vmatprep.subr.bf16.mxu0 %v1014
      %1291 = vmatpush1.bf16.msra.mxu0 %v1013
      %1292 = vmatprep.subr.bf16.mxu0 %v1008
      %1293 = vmatpush1.bf16.msra.mxu0 %v1007
      %1294 = vmatprep.subr.bf16.mxu0 %v1002
      %1295 = vmatpush1.bf16.msra.mxu0 %v1001
      %1296 = vmatprep.subr.bf16.mxu0 %v996
      %1297 = vmatpush1.bf16.msra.mxu0 %v995
      %1298 = vmatprep.subr.bf16.mxu0 0
      %1299 = vmatpush2.bf16.msra.mxu0 0
      %1300 = vmatprep.subr.bf16.mxu0 0
      %1301 = vmatpush2.bf16.msra.mxu0 0
      %1302 = vmatprep.subr.bf16.mxu0 0
      %1303 = vmatpush2.bf16.msra.mxu0 0
      %1304 = vmatprep.subr.bf16.mxu0 0
      %1305 = vmatpush2.bf16.msra.mxu0 0
      %1306 = vmatprep.subr.bf16.mxu0 0
      %1307 = vmatpush2.bf16.msra.mxu0 0
      %1308 = vmatprep.subr.bf16.mxu0 0
      %1309 = vmatpush2.bf16.msra.mxu0 0
      %1310 = vmatprep.subr.bf16.mxu0 0
      %1311 = vmatpush2.bf16.msra.mxu0 0
      %1312 = vmatprep.subr.bf16.mxu0 0
      %1313 = vmatpush2.bf16.msra.mxu0 0
      %1314 = vmatprep.mubr.bf16.mxu0 0
      %1315 = vmatmul.mubr.bf16.gmra.mxu0 %v785
      %v1316 = vpop.f32.mrf.mxu0
      %v1317 = vadd.f32 0.0, %v1316
      %v1318 = vpop.f32.mrf.mxu0
      %v1319 = vadd.f32 0.0, %v1318
      %v1320 = vpop.f32.mrf.mxu0
      %v1321 = vadd.f32 0.0, %v1320
      %v1322 = vpop.f32.mrf.mxu0
      %v1323 = vadd.f32 0.0, %v1322
      %1324 = vmatprep.mubr.bf16.mxu0 0
      %1325 = vmatmul.mubr.bf16.gmra.mxu0 %v786
      %v1326 = vpop.f32.mrf.mxu0
      %v1327 = vadd.f32 0.0, %v1326
      %v1328 = vpop.f32.mrf.mxu0
      %v1329 = vadd.f32 0.0, %v1328
      %v1330 = vpop.f32.mrf.mxu0
      %v1331 = vadd.f32 0.0, %v1330
      %v1332 = vpop.f32.mrf.mxu0
      %v1333 = vadd.f32 0.0, %v1332
      %1334 = vmatprep.mubr.bf16.mxu0 0
      %1335 = vmatmul.mubr.bf16.gmra.mxu0 %v787
      %v1336 = vpop.f32.mrf.mxu0
      %v1337 = vadd.f32 0.0, %v1336
      %v1338 = vpop.f32.mrf.mxu0
      %v1339 = vadd.f32 0.0, %v1338
      %v1340 = vpop.f32.mrf.mxu0
      %v1341 = vadd.f32 0.0, %v1340
      %v1342 = vpop.f32.mrf.mxu0
      %v1343 = vadd.f32 0.0, %v1342
      %1344 = vmatprep.mubr.bf16.mxu0 0
      %1345 = vmatmul.mubr.bf16.gmra.mxu0 %v788
      %v1346 = vpop.f32.mrf.mxu0
      %v1347 = vadd.f32 0.0, %v1346
      %v1348 = vpop.f32.mrf.mxu0
      %v1349 = vadd.f32 0.0, %v1348
      %v1350 = vpop.f32.mrf.mxu0
      %v1351 = vadd.f32 0.0, %v1350
      %v1352 = vpop.f32.mrf.mxu0
      %v1353 = vadd.f32 0.0, %v1352
      %1354 = vmatprep.mubr.bf16.mxu0 0
      %1355 = vmatmul.mubr.bf16.gmra.mxu0 %v789
      %v1356 = vpop.f32.mrf.mxu0
      %v1357 = vadd.f32 0.0, %v1356
      %v1358 = vpop.f32.mrf.mxu0
      %v1359 = vadd.f32 0.0, %v1358
      %v1360 = vpop.f32.mrf.mxu0
      %v1361 = vadd.f32 0.0, %v1360
      %v1362 = vpop.f32.mrf.mxu0
      %v1363 = vadd.f32 0.0, %v1362
      %1364 = vmatprep.mubr.bf16.mxu0 0
      %1365 = vmatmul.mubr.bf16.gmra.mxu0 %v790
      %v1366 = vpop.f32.mrf.mxu0
      %v1367 = vadd.f32 0.0, %v1366
      %v1368 = vpop.f32.mrf.mxu0
      %v1369 = vadd.f32 0.0, %v1368
      %v1370 = vpop.f32.mrf.mxu0
      %v1371 = vadd.f32 0.0, %v1370
      %v1372 = vpop.f32.mrf.mxu0
      %v1373 = vadd.f32 0.0, %v1372
      %1374 = vmatprep.mubr.bf16.mxu0 0
      %1375 = vmatmul.mubr.bf16.gmra.mxu0 %v791
      %v1376 = vpop.f32.mrf.mxu0
      %v1377 = vadd.f32 0.0, %v1376
      %v1378 = vpop.f32.mrf.mxu0
      %v1379 = vadd.f32 0.0, %v1378
      %v1380 = vpop.f32.mrf.mxu0
      %v1381 = vadd.f32 0.0, %v1380
      %v1382 = vpop.f32.mrf.mxu0
      %v1383 = vadd.f32 0.0, %v1382
      %1384 = vmatprep.mubr.bf16.mxu0 0
      %1385 = vmatmul.mubr.bf16.gmra.mxu0 %v792
      %v1386 = vpop.f32.mrf.mxu0
      %v1387 = vadd.f32 0.0, %v1386
      %v1388 = vpop.f32.mrf.mxu0
      %v1389 = vadd.f32 0.0, %v1388
      %v1390 = vpop.f32.mrf.mxu0
      %v1391 = vadd.f32 0.0, %v1390
      %v1392 = vpop.f32.mrf.mxu0
      %v1393 = vadd.f32 0.0, %v1392
      %1394 = vmatprep.mubr.bf16.mxu0 0
      %1395 = vmatmul.mubr.bf16.gmra.mxu0 %v793
      %v1396 = vpop.f32.mrf.mxu0
      %v1397 = vadd.f32 0.0, %v1396
      %v1398 = vpop.f32.mrf.mxu0
      %v1399 = vadd.f32 0.0, %v1398
      %v1400 = vpop.f32.mrf.mxu0
      %v1401 = vadd.f32 0.0, %v1400
      %v1402 = vpop.f32.mrf.mxu0
      %v1403 = vadd.f32 0.0, %v1402
      %1404 = vmatprep.mubr.bf16.mxu0 0
      %1405 = vmatmul.mubr.bf16.gmra.mxu0 %v794
      %v1406 = vpop.f32.mrf.mxu0
      %v1407 = vadd.f32 0.0, %v1406
      %v1408 = vpop.f32.mrf.mxu0
      %v1409 = vadd.f32 0.0, %v1408
      %v1410 = vpop.f32.mrf.mxu0
      %v1411 = vadd.f32 0.0, %v1410
      %v1412 = vpop.f32.mrf.mxu0
      %v1413 = vadd.f32 0.0, %v1412
      %1414 = vmatprep.mubr.bf16.mxu0 0
      %1415 = vmatmul.mubr.bf16.gmra.mxu0 %v795
      %v1416 = vpop.f32.mrf.mxu0
      %v1417 = vadd.f32 0.0, %v1416
      %v1418 = vpop.f32.mrf.mxu0
      %v1419 = vadd.f32 0.0, %v1418
      %v1420 = vpop.f32.mrf.mxu0
      %v1421 = vadd.f32 0.0, %v1420
      %v1422 = vpop.f32.mrf.mxu0
      %v1423 = vadd.f32 0.0, %v1422
      %1424 = vmatprep.mubr.bf16.mxu0 0
      %1425 = vmatmul.mubr.bf16.gmra.mxu0 %v796
      %v1426 = vpop.f32.mrf.mxu0
      %v1427 = vadd.f32 0.0, %v1426
      %v1428 = vpop.f32.mrf.mxu0
      %v1429 = vadd.f32 0.0, %v1428
      %v1430 = vpop.f32.mrf.mxu0
      %v1431 = vadd.f32 0.0, %v1430
      %v1432 = vpop.f32.mrf.mxu0
      %v1433 = vadd.f32 0.0, %v1432
      %1434 = vmatprep.mubr.bf16.mxu0 0
      %1435 = vmatmul.mubr.bf16.gmra.mxu0 %v797
      %v1436 = vpop.f32.mrf.mxu0
      %v1437 = vadd.f32 0.0, %v1436
      %v1438 = vpop.f32.mrf.mxu0
      %v1439 = vadd.f32 0.0, %v1438
      %v1440 = vpop.f32.mrf.mxu0
      %v1441 = vadd.f32 0.0, %v1440
      %v1442 = vpop.f32.mrf.mxu0
      %v1443 = vadd.f32 0.0, %v1442
      %1444 = vmatprep.mubr.bf16.mxu0 0
      %1445 = vmatmul.mubr.bf16.gmra.mxu0 %v798
      %v1446 = vpop.f32.mrf.mxu0
      %v1447 = vadd.f32 0.0, %v1446
      %v1448 = vpop.f32.mrf.mxu0
      %v1449 = vadd.f32 0.0, %v1448
      %v1450 = vpop.f32.mrf.mxu0
      %v1451 = vadd.f32 0.0, %v1450
      %v1452 = vpop.f32.mrf.mxu0
      %v1453 = vadd.f32 0.0, %v1452
      %1454 = vmatprep.mubr.bf16.mxu0 0
      %1455 = vmatmul.mubr.bf16.gmra.mxu0 %v799
      %v1456 = vpop.f32.mrf.mxu0
      %v1457 = vadd.f32 0.0, %v1456
      %v1458 = vpop.f32.mrf.mxu0
      %v1459 = vadd.f32 0.0, %v1458
      %v1460 = vpop.f32.mrf.mxu0
      %v1461 = vadd.f32 0.0, %v1460
      %v1462 = vpop.f32.mrf.mxu0
      %v1463 = vadd.f32 0.0, %v1462
      %1464 = vmatprep.mubr.bf16.mxu0 0
      %1465 = vmatmul.mubr.bf16.gmra.mxu0 %v800
      %v1466 = vpop.f32.mrf.mxu0
      %v1467 = vadd.f32 0.0, %v1466
      %v1468 = vpop.f32.mrf.mxu0
      %v1469 = vadd.f32 0.0, %v1468
      %v1470 = vpop.f32.mrf.mxu0
      %v1471 = vadd.f32 0.0, %v1470
      %v1472 = vpop.f32.mrf.mxu0
      %v1473 = vadd.f32 0.0, %v1472
      %1474 = vdwg.mxu0
      %1475 = vmatprep.subr.bf16.mxu0 %v1040
      %1476 = vmatpush1.bf16.msra.mxu0 %v1039
      %1477 = vmatprep.subr.bf16.mxu0 %v1034
      %1478 = vmatpush1.bf16.msra.mxu0 %v1033
      %1479 = vmatprep.subr.bf16.mxu0 %v1028
      %1480 = vmatpush1.bf16.msra.mxu0 %v1027
      %1481 = vmatprep.subr.bf16.mxu0 %v1022
      %1482 = vmatpush1.bf16.msra.mxu0 %v1021
      %1483 = vmatprep.subr.bf16.mxu0 %v1016
      %1484 = vmatpush1.bf16.msra.mxu0 %v1015
      %1485 = vmatprep.subr.bf16.mxu0 %v1010
      %1486 = vmatpush1.bf16.msra.mxu0 %v1009
      %1487 = vmatprep.subr.bf16.mxu0 %v1004
      %1488 = vmatpush1.bf16.msra.mxu0 %v1003
      %1489 = vmatprep.subr.bf16.mxu0 %v998
      %1490 = vmatpush1.bf16.msra.mxu0 %v997
      %1491 = vmatprep.subr.bf16.mxu0 0
      %1492 = vmatpush2.bf16.msra.mxu0 0
      %1493 = vmatprep.subr.bf16.mxu0 0
      %1494 = vmatpush2.bf16.msra.mxu0 0
      %1495 = vmatprep.subr.bf16.mxu0 0
      %1496 = vmatpush2.bf16.msra.mxu0 0
      %1497 = vmatprep.subr.bf16.mxu0 0
      %1498 = vmatpush2.bf16.msra.mxu0 0
      %1499 = vmatprep.subr.bf16.mxu0 0
      %1500 = vmatpush2.bf16.msra.mxu0 0
      %1501 = vmatprep.subr.bf16.mxu0 0
      %1502 = vmatpush2.bf16.msra.mxu0 0
      %1503 = vmatprep.subr.bf16.mxu0 0
      %1504 = vmatpush2.bf16.msra.mxu0 0
      %1505 = vmatprep.subr.bf16.mxu0 0
      %1506 = vmatpush2.bf16.msra.mxu0 0
      %1507 = vmatprep.mubr.bf16.mxu0 0
      %1508 = vmatmul.mubr.bf16.gmra.mxu0 %v785
      %v1509 = vpop.f32.mrf.mxu0
      %v1510 = vadd.f32 0.0, %v1509
      %v1511 = vpop.f32.mrf.mxu0
      %v1512 = vadd.f32 0.0, %v1511
      %v1513 = vpop.f32.mrf.mxu0
      %v1514 = vadd.f32 0.0, %v1513
      %v1515 = vpop.f32.mrf.mxu0
      %v1516 = vadd.f32 0.0, %v1515
      %1517 = vmatprep.mubr.bf16.mxu0 0
      %1518 = vmatmul.mubr.bf16.gmra.mxu0 %v786
      %v1519 = vpop.f32.mrf.mxu0
      %v1520 = vadd.f32 0.0, %v1519
      %v1521 = vpop.f32.mrf.mxu0
      %v1522 = vadd.f32 0.0, %v1521
      %v1523 = vpop.f32.mrf.mxu0
      %v1524 = vadd.f32 0.0, %v1523
      %v1525 = vpop.f32.mrf.mxu0
      %v1526 = vadd.f32 0.0, %v1525
      %1527 = vmatprep.mubr.bf16.mxu0 0
      %1528 = vmatmul.mubr.bf16.gmra.mxu0 %v787
      %v1529 = vpop.f32.mrf.mxu0
      %v1530 = vadd.f32 0.0, %v1529
      %v1531 = vpop.f32.mrf.mxu0
      %v1532 = vadd.f32 0.0, %v1531
      %v1533 = vpop.f32.mrf.mxu0
      %v1534 = vadd.f32 0.0, %v1533
      %v1535 = vpop.f32.mrf.mxu0
      %v1536 = vadd.f32 0.0, %v1535
      %1537 = vmatprep.mubr.bf16.mxu0 0
      %1538 = vmatmul.mubr.bf16.gmra.mxu0 %v788
      %v1539 = vpop.f32.mrf.mxu0
      %v1540 = vadd.f32 0.0, %v1539
      %v1541 = vpop.f32.mrf.mxu0
      %v1542 = vadd.f32 0.0, %v1541
      %v1543 = vpop.f32.mrf.mxu0
      %v1544 = vadd.f32 0.0, %v1543
      %v1545 = vpop.f32.mrf.mxu0
      %v1546 = vadd.f32 0.0, %v1545
      %1547 = vmatprep.mubr.bf16.mxu0 0
      %1548 = vmatmul.mubr.bf16.gmra.mxu0 %v789
      %v1549 = vpop.f32.mrf.mxu0
      %v1550 = vadd.f32 0.0, %v1549
      %v1551 = vpop.f32.mrf.mxu0
      %v1552 = vadd.f32 0.0, %v1551
      %v1553 = vpop.f32.mrf.mxu0
      %v1554 = vadd.f32 0.0, %v1553
      %v1555 = vpop.f32.mrf.mxu0
      %v1556 = vadd.f32 0.0, %v1555
      %1557 = vmatprep.mubr.bf16.mxu0 0
      %1558 = vmatmul.mubr.bf16.gmra.mxu0 %v790
      %v1559 = vpop.f32.mrf.mxu0
      %v1560 = vadd.f32 0.0, %v1559
      %v1561 = vpop.f32.mrf.mxu0
      %v1562 = vadd.f32 0.0, %v1561
      %v1563 = vpop.f32.mrf.mxu0
      %v1564 = vadd.f32 0.0, %v1563
      %v1565 = vpop.f32.mrf.mxu0
      %v1566 = vadd.f32 0.0, %v1565
      %1567 = vmatprep.mubr.bf16.mxu0 0
      %1568 = vmatmul.mubr.bf16.gmra.mxu0 %v791
      %v1569 = vpop.f32.mrf.mxu0
      %v1570 = vadd.f32 0.0, %v1569
      %v1571 = vpop.f32.mrf.mxu0
      %v1572 = vadd.f32 0.0, %v1571
      %v1573 = vpop.f32.mrf.mxu0
      %v1574 = vadd.f32 0.0, %v1573
      %v1575 = vpop.f32.mrf.mxu0
      %v1576 = vadd.f32 0.0, %v1575
      %1577 = vmatprep.mubr.bf16.mxu0 0
      %1578 = vmatmul.mubr.bf16.gmra.mxu0 %v792
      %v1579 = vpop.f32.mrf.mxu0
      %v1580 = vadd.f32 0.0, %v1579
      %v1581 = vpop.f32.mrf.mxu0
      %v1582 = vadd.f32 0.0, %v1581
      %v1583 = vpop.f32.mrf.mxu0
      %v1584 = vadd.f32 0.0, %v1583
      %v1585 = vpop.f32.mrf.mxu0
      %v1586 = vadd.f32 0.0, %v1585
      %1587 = vmatprep.mubr.bf16.mxu0 0
      %1588 = vmatmul.mubr.bf16.gmra.mxu0 %v793
      %v1589 = vpop.f32.mrf.mxu0
      %v1590 = vadd.f32 0.0, %v1589
      %v1591 = vpop.f32.mrf.mxu0
      %v1592 = vadd.f32 0.0, %v1591
      %v1593 = vpop.f32.mrf.mxu0
      %v1594 = vadd.f32 0.0, %v1593
      %v1595 = vpop.f32.mrf.mxu0
      %v1596 = vadd.f32 0.0, %v1595
      %1597 = vmatprep.mubr.bf16.mxu0 0
      %1598 = vmatmul.mubr.bf16.gmra.mxu0 %v794
      %v1599 = vpop.f32.mrf.mxu0
      %v1600 = vadd.f32 0.0, %v1599
      %v1601 = vpop.f32.mrf.mxu0
      %v1602 = vadd.f32 0.0, %v1601
      %v1603 = vpop.f32.mrf.mxu0
      %v1604 = vadd.f32 0.0, %v1603
      %v1605 = vpop.f32.mrf.mxu0
      %v1606 = vadd.f32 0.0, %v1605
      %1607 = vmatprep.mubr.bf16.mxu0 0
      %1608 = vmatmul.mubr.bf16.gmra.mxu0 %v795
      %v1609 = vpop.f32.mrf.mxu0
      %v1610 = vadd.f32 0.0, %v1609
      %v1611 = vpop.f32.mrf.mxu0
      %v1612 = vadd.f32 0.0, %v1611
      %v1613 = vpop.f32.mrf.mxu0
      %v1614 = vadd.f32 0.0, %v1613
      %v1615 = vpop.f32.mrf.mxu0
      %v1616 = vadd.f32 0.0, %v1615
      %1617 = vmatprep.mubr.bf16.mxu0 0
      %1618 = vmatmul.mubr.bf16.gmra.mxu0 %v796
      %v1619 = vpop.f32.mrf.mxu0
      %v1620 = vadd.f32 0.0, %v1619
      %v1621 = vpop.f32.mrf.mxu0
      %v1622 = vadd.f32 0.0, %v1621
      %v1623 = vpop.f32.mrf.mxu0
      %v1624 = vadd.f32 0.0, %v1623
      %v1625 = vpop.f32.mrf.mxu0
      %v1626 = vadd.f32 0.0, %v1625
      %1627 = vmatprep.mubr.bf16.mxu0 0
      %1628 = vmatmul.mubr.bf16.gmra.mxu0 %v797
      %v1629 = vpop.f32.mrf.mxu0
      %v1630 = vadd.f32 0.0, %v1629
      %v1631 = vpop.f32.mrf.mxu0
      %v1632 = vadd.f32 0.0, %v1631
      %v1633 = vpop.f32.mrf.mxu0
      %v1634 = vadd.f32 0.0, %v1633
      %v1635 = vpop.f32.mrf.mxu0
      %v1636 = vadd.f32 0.0, %v1635
      %1637 = vmatprep.mubr.bf16.mxu0 0
      %1638 = vmatmul.mubr.bf16.gmra.mxu0 %v798
      %v1639 = vpop.f32.mrf.mxu0
      %v1640 = vadd.f32 0.0, %v1639
      %v1641 = vpop.f32.mrf.mxu0
      %v1642 = vadd.f32 0.0, %v1641
      %v1643 = vpop.f32.mrf.mxu0
      %v1644 = vadd.f32 0.0, %v1643
      %v1645 = vpop.f32.mrf.mxu0
      %v1646 = vadd.f32 0.0, %v1645
      %1647 = vmatprep.mubr.bf16.mxu0 0
      %1648 = vmatmul.mubr.bf16.gmra.mxu0 %v799
      %v1649 = vpop.f32.mrf.mxu0
      %v1650 = vadd.f32 0.0, %v1649
      %v1651 = vpop.f32.mrf.mxu0
      %v1652 = vadd.f32 0.0, %v1651
      %v1653 = vpop.f32.mrf.mxu0
      %v1654 = vadd.f32 0.0, %v1653
      %v1655 = vpop.f32.mrf.mxu0
      %v1656 = vadd.f32 0.0, %v1655
      %1657 = vmatprep.mubr.bf16.mxu0 0
      %1658 = vmatmul.mubr.bf16.gmra.mxu0 %v800
      %v1659 = vpop.f32.mrf.mxu0
      %v1660 = vadd.f32 0.0, %v1659
      %v1661 = vpop.f32.mrf.mxu0
      %v1662 = vadd.f32 0.0, %v1661
      %v1663 = vpop.f32.mrf.mxu0
      %v1664 = vadd.f32 0.0, %v1663
      %v1665 = vpop.f32.mrf.mxu0
      %v1666 = vadd.f32 0.0, %v1665
      %1667 = vdwg.mxu0
      %v1668 = vld [vmem:[%s5] sm:$0x3f]
      %v1670 = vlaneseq
      %v1671 = vshrl.u32 %v1670, 7
      %v1672 = vsub.s32 0, %v1671
      %v1673 = vrot.slane %v1668, %v1672
      %v1674 = vlaneseq
      %v1675 = vshrl.u32 %v1674, 7
      %v1676 = vsub.s32 1, %v1675
      %v1677 = vrot.slane %v1668, %v1676
      %v1678 = vlaneseq
      %v1679 = vshrl.u32 %v1678, 7
      %v1680 = vsub.s32 2, %v1679
      %v1681 = vrot.slane %v1668, %v1680
      %v1682 = vlaneseq
      %v1683 = vshrl.u32 %v1682, 7
      %v1684 = vsub.s32 3, %v1683
      %v1685 = vrot.slane %v1668, %v1684
      %v1686 = vlaneseq
      %v1687 = vshrl.u32 %v1686, 7
      %v1688 = vsub.s32 4, %v1687
      %v1689 = vrot.slane %v1668, %v1688
      %v1690 = vlaneseq
      %v1691 = vshrl.u32 %v1690, 7
      %v1692 = vsub.s32 5, %v1691
      %v1693 = vrot.slane %v1668, %v1692
      %v1700 = vmul.f32 %v1124, %v1673
      %v1701 = vmul.f32 %v1126, %v1677
      %v1702 = vmul.f32 %v1317, %v1681
      %v1703 = vmul.f32 %v1319, %v1685
      %v1704 = vmul.f32 %v1510, %v1689
      %v1705 = vmul.f32 %v1512, %v1693
      %v1706 = vmul.f32 %v1128, %v1673
      %v1707 = vmul.f32 %v1130, %v1677
      %v1708 = vmul.f32 %v1321, %v1681
      %v1709 = vmul.f32 %v1323, %v1685
      %v1710 = vmul.f32 %v1514, %v1689
      %v1711 = vmul.f32 %v1516, %v1693
      %v1712 = vmul.f32 %v1134, %v1673
      %v1713 = vmul.f32 %v1136, %v1677
      %v1714 = vmul.f32 %v1327, %v1681
      %v1715 = vmul.f32 %v1329, %v1685
      %v1716 = vmul.f32 %v1520, %v1689
      %v1717 = vmul.f32 %v1522, %v1693
      %v1718 = vmul.f32 %v1138, %v1673
      %v1719 = vmul.f32 %v1140, %v1677
      %v1720 = vmul.f32 %v1331, %v1681
      %v1721 = vmul.f32 %v1333, %v1685
      %v1722 = vmul.f32 %v1524, %v1689
      %v1723 = vmul.f32 %v1526, %v1693
      %v1724 = vmul.f32 %v1144, %v1673
      %v1725 = vmul.f32 %v1146, %v1677
      %v1726 = vmul.f32 %v1337, %v1681
      %v1727 = vmul.f32 %v1339, %v1685
      %v1728 = vmul.f32 %v1530, %v1689
      %v1729 = vmul.f32 %v1532, %v1693
      %v1730 = vmul.f32 %v1148, %v1673
      %v1731 = vmul.f32 %v1150, %v1677
      %v1732 = vmul.f32 %v1341, %v1681
      %v1733 = vmul.f32 %v1343, %v1685
      %v1734 = vmul.f32 %v1534, %v1689
      %v1735 = vmul.f32 %v1536, %v1693
      %v1736 = vmul.f32 %v1154, %v1673
      %v1737 = vmul.f32 %v1156, %v1677
      %v1738 = vmul.f32 %v1347, %v1681
      %v1739 = vmul.f32 %v1349, %v1685
      %v1740 = vmul.f32 %v1540, %v1689
      %v1741 = vmul.f32 %v1542, %v1693
      %v1742 = vmul.f32 %v1158, %v1673
      %v1743 = vmul.f32 %v1160, %v1677
      %v1744 = vmul.f32 %v1351, %v1681
      %v1745 = vmul.f32 %v1353, %v1685
      %v1746 = vmul.f32 %v1544, %v1689
      %v1747 = vmul.f32 %v1546, %v1693
      %v1748 = vmul.f32 %v1164, %v1673
      %v1749 = vmul.f32 %v1166, %v1677
      %v1750 = vmul.f32 %v1357, %v1681
      %v1751 = vmul.f32 %v1359, %v1685
      %v1752 = vmul.f32 %v1550, %v1689
      %v1753 = vmul.f32 %v1552, %v1693
      %v1754 = vmul.f32 %v1168, %v1673
      %v1755 = vmul.f32 %v1170, %v1677
      %v1756 = vmul.f32 %v1361, %v1681
      %v1757 = vmul.f32 %v1363, %v1685
      %v1758 = vmul.f32 %v1554, %v1689
      %v1759 = vmul.f32 %v1556, %v1693
      %v1760 = vmul.f32 %v1174, %v1673
      %v1761 = vmul.f32 %v1176, %v1677
      %v1762 = vmul.f32 %v1367, %v1681
      %v1763 = vmul.f32 %v1369, %v1685
      %v1764 = vmul.f32 %v1560, %v1689
      %v1765 = vmul.f32 %v1562, %v1693
      %v1766 = vmul.f32 %v1178, %v1673
      %v1767 = vmul.f32 %v1180, %v1677
      %v1768 = vmul.f32 %v1371, %v1681
      %v1769 = vmul.f32 %v1373, %v1685
      %v1770 = vmul.f32 %v1564, %v1689
      %v1771 = vmul.f32 %v1566, %v1693
      %v1772 = vmul.f32 %v1184, %v1673
      %v1773 = vmul.f32 %v1186, %v1677
      %v1774 = vmul.f32 %v1377, %v1681
      %v1775 = vmul.f32 %v1379, %v1685
      %v1776 = vmul.f32 %v1570, %v1689
      %v1777 = vmul.f32 %v1572, %v1693
      %v1778 = vmul.f32 %v1188, %v1673
      %v1779 = vmul.f32 %v1190, %v1677
      %v1780 = vmul.f32 %v1381, %v1681
      %v1781 = vmul.f32 %v1383, %v1685
      %v1782 = vmul.f32 %v1574, %v1689
      %v1783 = vmul.f32 %v1576, %v1693
      %v1784 = vmul.f32 %v1194, %v1673
      %v1785 = vmul.f32 %v1196, %v1677
      %v1786 = vmul.f32 %v1387, %v1681
      %v1787 = vmul.f32 %v1389, %v1685
      %v1788 = vmul.f32 %v1580, %v1689
      %v1789 = vmul.f32 %v1582, %v1693
      %v1790 = vmul.f32 %v1198, %v1673
      %v1791 = vmul.f32 %v1200, %v1677
      %v1792 = vmul.f32 %v1391, %v1681
      %v1793 = vmul.f32 %v1393, %v1685
      %v1794 = vmul.f32 %v1584, %v1689
      %v1795 = vmul.f32 %v1586, %v1693
      %v1796 = vmul.f32 %v1204, %v1673
      %v1797 = vmul.f32 %v1206, %v1677
      %v1798 = vmul.f32 %v1397, %v1681
      %v1799 = vmul.f32 %v1399, %v1685
      %v1800 = vmul.f32 %v1590, %v1689
      %v1801 = vmul.f32 %v1592, %v1693
      %v1802 = vmul.f32 %v1208, %v1673
      %v1803 = vmul.f32 %v1210, %v1677
      %v1804 = vmul.f32 %v1401, %v1681
      %v1805 = vmul.f32 %v1403, %v1685
      %v1806 = vmul.f32 %v1594, %v1689
      %v1807 = vmul.f32 %v1596, %v1693
      %v1808 = vmul.f32 %v1214, %v1673
      %v1809 = vmul.f32 %v1216, %v1677
      %v1810 = vmul.f32 %v1407, %v1681
      %v1811 = vmul.f32 %v1409, %v1685
      %v1812 = vmul.f32 %v1600, %v1689
      %v1813 = vmul.f32 %v1602, %v1693
      %v1814 = vmul.f32 %v1218, %v1673
      %v1815 = vmul.f32 %v1220, %v1677
      %v1816 = vmul.f32 %v1411, %v1681
      %v1817 = vmul.f32 %v1413, %v1685
      %v1818 = vmul.f32 %v1604, %v1689
      %v1819 = vmul.f32 %v1606, %v1693
      %v1820 = vmul.f32 %v1224, %v1673
      %v1821 = vmul.f32 %v1226, %v1677
      %v1822 = vmul.f32 %v1417, %v1681
      %v1823 = vmul.f32 %v1419, %v1685
      %v1824 = vmul.f32 %v1610, %v1689
      %v1825 = vmul.f32 %v1612, %v1693
      %v1826 = vmul.f32 %v1228, %v1673
      %v1827 = vmul.f32 %v1230, %v1677
      %v1828 = vmul.f32 %v1421, %v1681
      %v1829 = vmul.f32 %v1423, %v1685
      %v1830 = vmul.f32 %v1614, %v1689
      %v1831 = vmul.f32 %v1616, %v1693
      %v1832 = vmul.f32 %v1234, %v1673
      %v1833 = vmul.f32 %v1236, %v1677
      %v1834 = vmul.f32 %v1427, %v1681
      %v1835 = vmul.f32 %v1429, %v1685
      %v1836 = vmul.f32 %v1620, %v1689
      %v1837 = vmul.f32 %v1622, %v1693
      %v1838 = vmul.f32 %v1238, %v1673
      %v1839 = vmul.f32 %v1240, %v1677
      %v1840 = vmul.f32 %v1431, %v1681
      %v1841 = vmul.f32 %v1433, %v1685
      %v1842 = vmul.f32 %v1624, %v1689
      %v1843 = vmul.f32 %v1626, %v1693
      %v1844 = vmul.f32 %v1244, %v1673
      %v1845 = vmul.f32 %v1246, %v1677
      %v1846 = vmul.f32 %v1437, %v1681
      %v1847 = vmul.f32 %v1439, %v1685
      %v1848 = vmul.f32 %v1630, %v1689
      %v1849 = vmul.f32 %v1632, %v1693
      %v1850 = vmul.f32 %v1248, %v1673
      %v1851 = vmul.f32 %v1250, %v1677
      %v1852 = vmul.f32 %v1441, %v1681
      %v1853 = vmul.f32 %v1443, %v1685
      %v1854 = vmul.f32 %v1634, %v1689
      %v1855 = vmul.f32 %v1636, %v1693
      %v1856 = vmul.f32 %v1254, %v1673
      %v1857 = vmul.f32 %v1256, %v1677
      %v1858 = vmul.f32 %v1447, %v1681
      %v1859 = vmul.f32 %v1449, %v1685
      %v1860 = vmul.f32 %v1640, %v1689
      %v1861 = vmul.f32 %v1642, %v1693
      %v1862 = vmul.f32 %v1258, %v1673
      %v1863 = vmul.f32 %v1260, %v1677
      %v1864 = vmul.f32 %v1451, %v1681
      %v1865 = vmul.f32 %v1453, %v1685
      %v1866 = vmul.f32 %v1644, %v1689
      %v1867 = vmul.f32 %v1646, %v1693
      %v1868 = vmul.f32 %v1264, %v1673
      %v1869 = vmul.f32 %v1266, %v1677
      %v1870 = vmul.f32 %v1457, %v1681
      %v1871 = vmul.f32 %v1459, %v1685
      %v1872 = vmul.f32 %v1650, %v1689
      %v1873 = vmul.f32 %v1652, %v1693
      %v1874 = vmul.f32 %v1268, %v1673
      %v1875 = vmul.f32 %v1270, %v1677
      %v1876 = vmul.f32 %v1461, %v1681
      %v1877 = vmul.f32 %v1463, %v1685
      %v1878 = vmul.f32 %v1654, %v1689
      %v1879 = vmul.f32 %v1656, %v1693
      %v1880 = vmul.f32 %v1274, %v1673
      %v1881 = vmul.f32 %v1276, %v1677
      %v1882 = vmul.f32 %v1467, %v1681
      %v1883 = vmul.f32 %v1469, %v1685
      %v1884 = vmul.f32 %v1660, %v1689
      %v1885 = vmul.f32 %v1662, %v1693
      %v1886 = vmul.f32 %v1278, %v1673
      %v1887 = vmul.f32 %v1280, %v1677
      %v1888 = vmul.f32 %v1471, %v1681
      %v1889 = vmul.f32 %v1473, %v1685
      %v1890 = vmul.f32 %v1664, %v1689
      %v1891 = vmul.f32 %v1666, %v1693
      %v1892 = vld [vmem:[%s6] sm:$0x3f]
      %v1894 = vlaneseq
      %v1895 = vshrl.u32 %v1894, 7
      %v1896 = vsub.s32 0, %v1895
      %v1897 = vrot.slane %v1892, %v1896
      %v1898 = vlaneseq
      %v1899 = vshrl.u32 %v1898, 7
      %v1900 = vsub.s32 1, %v1899
      %v1901 = vrot.slane %v1892, %v1900
      %v1902 = vlaneseq
      %v1903 = vshrl.u32 %v1902, 7
      %v1904 = vsub.s32 2, %v1903
      %v1905 = vrot.slane %v1892, %v1904
      %v1906 = vlaneseq
      %v1907 = vshrl.u32 %v1906, 7
      %v1908 = vsub.s32 3, %v1907
      %v1909 = vrot.slane %v1892, %v1908
      %v1910 = vlaneseq
      %v1911 = vshrl.u32 %v1910, 7
      %v1912 = vsub.s32 4, %v1911
      %v1913 = vrot.slane %v1892, %v1912
      %v1914 = vlaneseq
      %v1915 = vshrl.u32 %v1914, 7
      %v1916 = vsub.s32 5, %v1915
      %v1917 = vrot.slane %v1892, %v1916
      %v1924 = vadd.f32 %v1700, %v1897
      %v1925 = vadd.f32 %v1701, %v1901
      %v1926 = vadd.f32 %v1702, %v1905
      %v1927 = vadd.f32 %v1703, %v1909
      %v1928 = vadd.f32 %v1704, %v1913
      %v1929 = vadd.f32 %v1705, %v1917
      %v1930 = vadd.f32 %v1706, %v1897
      %v1931 = vadd.f32 %v1707, %v1901
      %v1932 = vadd.f32 %v1708, %v1905
      %v1933 = vadd.f32 %v1709, %v1909
      %v1934 = vadd.f32 %v1710, %v1913
      %v1935 = vadd.f32 %v1711, %v1917
      %v1936 = vadd.f32 %v1712, %v1897
      %v1937 = vadd.f32 %v1713, %v1901
      %v1938 = vadd.f32 %v1714, %v1905
      %v1939 = vadd.f32 %v1715, %v1909
      %v1940 = vadd.f32 %v1716, %v1913
      %v1941 = vadd.f32 %v1717, %v1917
      %v1942 = vadd.f32 %v1718, %v1897
      %v1943 = vadd.f32 %v1719, %v1901
      %v1944 = vadd.f32 %v1720, %v1905
      %v1945 = vadd.f32 %v1721, %v1909
      %v1946 = vadd.f32 %v1722, %v1913
      %v1947 = vadd.f32 %v1723, %v1917
      %v1948 = vadd.f32 %v1724, %v1897
      %v1949 = vadd.f32 %v1725, %v1901
      %v1950 = vadd.f32 %v1726, %v1905
      %v1951 = vadd.f32 %v1727, %v1909
      %v1952 = vadd.f32 %v1728, %v1913
      %v1953 = vadd.f32 %v1729, %v1917
      %v1954 = vadd.f32 %v1730, %v1897
      %v1955 = vadd.f32 %v1731, %v1901
      %v1956 = vadd.f32 %v1732, %v1905
      %v1957 = vadd.f32 %v1733, %v1909
      %v1958 = vadd.f32 %v1734, %v1913
      %v1959 = vadd.f32 %v1735, %v1917
      %v1960 = vadd.f32 %v1736, %v1897
      %v1961 = vadd.f32 %v1737, %v1901
      %v1962 = vadd.f32 %v1738, %v1905
      %v1963 = vadd.f32 %v1739, %v1909
      %v1964 = vadd.f32 %v1740, %v1913
      %v1965 = vadd.f32 %v1741, %v1917
      %v1966 = vadd.f32 %v1742, %v1897
      %v1967 = vadd.f32 %v1743, %v1901
      %v1968 = vadd.f32 %v1744, %v1905
      %v1969 = vadd.f32 %v1745, %v1909
      %v1970 = vadd.f32 %v1746, %v1913
      %v1971 = vadd.f32 %v1747, %v1917
      %v1972 = vadd.f32 %v1748, %v1897
      %v1973 = vadd.f32 %v1749, %v1901
      %v1974 = vadd.f32 %v1750, %v1905
      %v1975 = vadd.f32 %v1751, %v1909
      %v1976 = vadd.f32 %v1752, %v1913
      %v1977 = vadd.f32 %v1753, %v1917
      %v1978 = vadd.f32 %v1754, %v1897
      %v1979 = vadd.f32 %v1755, %v1901
      %v1980 = vadd.f32 %v1756, %v1905
      %v1981 = vadd.f32 %v1757, %v1909
      %v1982 = vadd.f32 %v1758, %v1913
      %v1983 = vadd.f32 %v1759, %v1917
      %v1984 = vadd.f32 %v1760, %v1897
      %v1985 = vadd.f32 %v1761, %v1901
      %v1986 = vadd.f32 %v1762, %v1905
      %v1987 = vadd.f32 %v1763, %v1909
      %v1988 = vadd.f32 %v1764, %v1913
      %v1989 = vadd.f32 %v1765, %v1917
      %v1990 = vadd.f32 %v1766, %v1897
      %v1991 = vadd.f32 %v1767, %v1901
      %v1992 = vadd.f32 %v1768, %v1905
      %v1993 = vadd.f32 %v1769, %v1909
      %v1994 = vadd.f32 %v1770, %v1913
      %v1995 = vadd.f32 %v1771, %v1917
      %v1996 = vadd.f32 %v1772, %v1897
      %v1997 = vadd.f32 %v1773, %v1901
      %v1998 = vadd.f32 %v1774, %v1905
      %v1999 = vadd.f32 %v1775, %v1909
      %v2000 = vadd.f32 %v1776, %v1913
      %v2001 = vadd.f32 %v1777, %v1917
      %v2002 = vadd.f32 %v1778, %v1897
      %v2003 = vadd.f32 %v1779, %v1901
      %v2004 = vadd.f32 %v1780, %v1905
      %v2005 = vadd.f32 %v1781, %v1909
      %v2006 = vadd.f32 %v1782, %v1913
      %v2007 = vadd.f32 %v1783, %v1917
      %v2008 = vadd.f32 %v1784, %v1897
      %v2009 = vadd.f32 %v1785, %v1901
      %v2010 = vadd.f32 %v1786, %v1905
      %v2011 = vadd.f32 %v1787, %v1909
      %v2012 = vadd.f32 %v1788, %v1913
      %v2013 = vadd.f32 %v1789, %v1917
      %v2014 = vadd.f32 %v1790, %v1897
      %v2015 = vadd.f32 %v1791, %v1901
      %v2016 = vadd.f32 %v1792, %v1905
      %v2017 = vadd.f32 %v1793, %v1909
      %v2018 = vadd.f32 %v1794, %v1913
      %v2019 = vadd.f32 %v1795, %v1917
      %v2020 = vadd.f32 %v1796, %v1897
      %v2021 = vadd.f32 %v1797, %v1901
      %v2022 = vadd.f32 %v1798, %v1905
      %v2023 = vadd.f32 %v1799, %v1909
      %v2024 = vadd.f32 %v1800, %v1913
      %v2025 = vadd.f32 %v1801, %v1917
      %v2026 = vadd.f32 %v1802, %v1897
      %v2027 = vadd.f32 %v1803, %v1901
      %v2028 = vadd.f32 %v1804, %v1905
      %v2029 = vadd.f32 %v1805, %v1909
      %v2030 = vadd.f32 %v1806, %v1913
      %v2031 = vadd.f32 %v1807, %v1917
      %v2032 = vadd.f32 %v1808, %v1897
      %v2033 = vadd.f32 %v1809, %v1901
      %v2034 = vadd.f32 %v1810, %v1905
      %v2035 = vadd.f32 %v1811, %v1909
      %v2036 = vadd.f32 %v1812, %v1913
      %v2037 = vadd.f32 %v1813, %v1917
      %v2038 = vadd.f32 %v1814, %v1897
      %v2039 = vadd.f32 %v1815, %v1901
      %v2040 = vadd.f32 %v1816, %v1905
      %v2041 = vadd.f32 %v1817, %v1909
      %v2042 = vadd.f32 %v1818, %v1913
      %v2043 = vadd.f32 %v1819, %v1917
      %v2044 = vadd.f32 %v1820, %v1897
      %v2045 = vadd.f32 %v1821, %v1901
      %v2046 = vadd.f32 %v1822, %v1905
      %v2047 = vadd.f32 %v1823, %v1909
      %v2048 = vadd.f32 %v1824, %v1913
      %v2049 = vadd.f32 %v1825, %v1917
      %v2050 = vadd.f32 %v1826, %v1897
      %v2051 = vadd.f32 %v1827, %v1901
      %v2052 = vadd.f32 %v1828, %v1905
      %v2053 = vadd.f32 %v1829, %v1909
      %v2054 = vadd.f32 %v1830, %v1913
      %v2055 = vadd.f32 %v1831, %v1917
      %v2056 = vadd.f32 %v1832, %v1897
      %v2057 = vadd.f32 %v1833, %v1901
      %v2058 = vadd.f32 %v1834, %v1905
      %v2059 = vadd.f32 %v1835, %v1909
      %v2060 = vadd.f32 %v1836, %v1913
      %v2061 = vadd.f32 %v1837, %v1917
      %v2062 = vadd.f32 %v1838, %v1897
      %v2063 = vadd.f32 %v1839, %v1901
      %v2064 = vadd.f32 %v1840, %v1905
      %v2065 = vadd.f32 %v1841, %v1909
      %v2066 = vadd.f32 %v1842, %v1913
      %v2067 = vadd.f32 %v1843, %v1917
      %v2068 = vadd.f32 %v1844, %v1897
      %v2069 = vadd.f32 %v1845, %v1901
      %v2070 = vadd.f32 %v1846, %v1905
      %v2071 = vadd.f32 %v1847, %v1909
      %v2072 = vadd.f32 %v1848, %v1913
      %v2073 = vadd.f32 %v1849, %v1917
      %v2074 = vadd.f32 %v1850, %v1897
      %v2075 = vadd.f32 %v1851, %v1901
      %v2076 = vadd.f32 %v1852, %v1905
      %v2077 = vadd.f32 %v1853, %v1909
      %v2078 = vadd.f32 %v1854, %v1913
      %v2079 = vadd.f32 %v1855, %v1917
      %v2080 = vadd.f32 %v1856, %v1897
      %v2081 = vadd.f32 %v1857, %v1901
      %v2082 = vadd.f32 %v1858, %v1905
      %v2083 = vadd.f32 %v1859, %v1909
      %v2084 = vadd.f32 %v1860, %v1913
      %v2085 = vadd.f32 %v1861, %v1917
      %v2086 = vadd.f32 %v1862, %v1897
      %v2087 = vadd.f32 %v1863, %v1901
      %v2088 = vadd.f32 %v1864, %v1905
      %v2089 = vadd.f32 %v1865, %v1909
      %v2090 = vadd.f32 %v1866, %v1913
      %v2091 = vadd.f32 %v1867, %v1917
      %v2092 = vadd.f32 %v1868, %v1897
      %v2093 = vadd.f32 %v1869, %v1901
      %v2094 = vadd.f32 %v1870, %v1905
      %v2095 = vadd.f32 %v1871, %v1909
      %v2096 = vadd.f32 %v1872, %v1913
      %v2097 = vadd.f32 %v1873, %v1917
      %v2098 = vadd.f32 %v1874, %v1897
      %v2099 = vadd.f32 %v1875, %v1901
      %v2100 = vadd.f32 %v1876, %v1905
      %v2101 = vadd.f32 %v1877, %v1909
      %v2102 = vadd.f32 %v1878, %v1913
      %v2103 = vadd.f32 %v1879, %v1917
      %v2104 = vadd.f32 %v1880, %v1897
      %v2105 = vadd.f32 %v1881, %v1901
      %v2106 = vadd.f32 %v1882, %v1905
      %v2107 = vadd.f32 %v1883, %v1909
      %v2108 = vadd.f32 %v1884, %v1913
      %v2109 = vadd.f32 %v1885, %v1917
      %v2110 = vadd.f32 %v1886, %v1897
      %v2111 = vadd.f32 %v1887, %v1901
      %v2112 = vadd.f32 %v1888, %v1905
      %v2113 = vadd.f32 %v1889, %v1909
      %v2114 = vadd.f32 %v1890, %v1913
      %v2115 = vadd.f32 %v1891, %v1917
      %v2116 = vmax.f32 %v1924, 0.0
      %v2117 = vmax.f32 %v1925, 0.0
      %v2118 = vmax.f32 %v1926, 0.0
      %v2119 = vmax.f32 %v1927, 0.0
      %v2120 = vmax.f32 %v1928, 0.0
      %v2121 = vmax.f32 %v1929, 0.0
      %v2122 = vmax.f32 %v1930, 0.0
      %v2123 = vmax.f32 %v1931, 0.0
      %v2124 = vmax.f32 %v1932, 0.0
      %v2125 = vmax.f32 %v1933, 0.0
      %v2126 = vmax.f32 %v1934, 0.0
      %v2127 = vmax.f32 %v1935, 0.0
      %v2128 = vmax.f32 %v1936, 0.0
      %v2129 = vmax.f32 %v1937, 0.0
      %v2130 = vmax.f32 %v1938, 0.0
      %v2131 = vmax.f32 %v1939, 0.0
      %v2132 = vmax.f32 %v1940, 0.0
      %v2133 = vmax.f32 %v1941, 0.0
      %v2134 = vmax.f32 %v1942, 0.0
      %v2135 = vmax.f32 %v1943, 0.0
      %v2136 = vmax.f32 %v1944, 0.0
      %v2137 = vmax.f32 %v1945, 0.0
      %v2138 = vmax.f32 %v1946, 0.0
      %v2139 = vmax.f32 %v1947, 0.0
      %v2140 = vmax.f32 %v1948, 0.0
      %v2141 = vmax.f32 %v1949, 0.0
      %v2142 = vmax.f32 %v1950, 0.0
      %v2143 = vmax.f32 %v1951, 0.0
      %v2144 = vmax.f32 %v1952, 0.0
      %v2145 = vmax.f32 %v1953, 0.0
      %v2146 = vmax.f32 %v1954, 0.0
      %v2147 = vmax.f32 %v1955, 0.0
      %v2148 = vmax.f32 %v1956, 0.0
      %v2149 = vmax.f32 %v1957, 0.0
      %v2150 = vmax.f32 %v1958, 0.0
      %v2151 = vmax.f32 %v1959, 0.0
      %v2152 = vmax.f32 %v1960, 0.0
      %v2153 = vmax.f32 %v1961, 0.0
      %v2154 = vmax.f32 %v1962, 0.0
      %v2155 = vmax.f32 %v1963, 0.0
      %v2156 = vmax.f32 %v1964, 0.0
      %v2157 = vmax.f32 %v1965, 0.0
      %v2158 = vmax.f32 %v1966, 0.0
      %v2159 = vmax.f32 %v1967, 0.0
      %v2160 = vmax.f32 %v1968, 0.0
      %v2161 = vmax.f32 %v1969, 0.0
      %v2162 = vmax.f32 %v1970, 0.0
      %v2163 = vmax.f32 %v1971, 0.0
      %v2164 = vmax.f32 %v1972, 0.0
      %v2165 = vmax.f32 %v1973, 0.0
      %v2166 = vmax.f32 %v1974, 0.0
      %v2167 = vmax.f32 %v1975, 0.0
      %v2168 = vmax.f32 %v1976, 0.0
      %v2169 = vmax.f32 %v1977, 0.0
      %v2170 = vmax.f32 %v1978, 0.0
      %v2171 = vmax.f32 %v1979, 0.0
      %v2172 = vmax.f32 %v1980, 0.0
      %v2173 = vmax.f32 %v1981, 0.0
      %v2174 = vmax.f32 %v1982, 0.0
      %v2175 = vmax.f32 %v1983, 0.0
      %v2176 = vmax.f32 %v1984, 0.0
      %v2177 = vmax.f32 %v1985, 0.0
      %v2178 = vmax.f32 %v1986, 0.0
      %v2179 = vmax.f32 %v1987, 0.0
      %v2180 = vmax.f32 %v1988, 0.0
      %v2181 = vmax.f32 %v1989, 0.0
      %v2182 = vmax.f32 %v1990, 0.0
      %v2183 = vmax.f32 %v1991, 0.0
      %v2184 = vmax.f32 %v1992, 0.0
      %v2185 = vmax.f32 %v1993, 0.0
      %v2186 = vmax.f32 %v1994, 0.0
      %v2187 = vmax.f32 %v1995, 0.0
      %v2188 = vmax.f32 %v1996, 0.0
      %v2189 = vmax.f32 %v1997, 0.0
      %v2190 = vmax.f32 %v1998, 0.0
      %v2191 = vmax.f32 %v1999, 0.0
      %v2192 = vmax.f32 %v2000, 0.0
      %v2193 = vmax.f32 %v2001, 0.0
      %v2194 = vmax.f32 %v2002, 0.0
      %v2195 = vmax.f32 %v2003, 0.0
      %v2196 = vmax.f32 %v2004, 0.0
      %v2197 = vmax.f32 %v2005, 0.0
      %v2198 = vmax.f32 %v2006, 0.0
      %v2199 = vmax.f32 %v2007, 0.0
      %v2200 = vmax.f32 %v2008, 0.0
      %v2201 = vmax.f32 %v2009, 0.0
      %v2202 = vmax.f32 %v2010, 0.0
      %v2203 = vmax.f32 %v2011, 0.0
      %v2204 = vmax.f32 %v2012, 0.0
      %v2205 = vmax.f32 %v2013, 0.0
      %v2206 = vmax.f32 %v2014, 0.0
      %v2207 = vmax.f32 %v2015, 0.0
      %v2208 = vmax.f32 %v2016, 0.0
      %v2209 = vmax.f32 %v2017, 0.0
      %v2210 = vmax.f32 %v2018, 0.0
      %v2211 = vmax.f32 %v2019, 0.0
      %v2212 = vmax.f32 %v2020, 0.0
      %v2213 = vmax.f32 %v2021, 0.0
      %v2214 = vmax.f32 %v2022, 0.0
      %v2215 = vmax.f32 %v2023, 0.0
      %v2216 = vmax.f32 %v2024, 0.0
      %v2217 = vmax.f32 %v2025, 0.0
      %v2218 = vmax.f32 %v2026, 0.0
      %v2219 = vmax.f32 %v2027, 0.0
      %v2220 = vmax.f32 %v2028, 0.0
      %v2221 = vmax.f32 %v2029, 0.0
      %v2222 = vmax.f32 %v2030, 0.0
      %v2223 = vmax.f32 %v2031, 0.0
      %v2224 = vmax.f32 %v2032, 0.0
      %v2225 = vmax.f32 %v2033, 0.0
      %v2226 = vmax.f32 %v2034, 0.0
      %v2227 = vmax.f32 %v2035, 0.0
      %v2228 = vmax.f32 %v2036, 0.0
      %v2229 = vmax.f32 %v2037, 0.0
      %v2230 = vmax.f32 %v2038, 0.0
      %v2231 = vmax.f32 %v2039, 0.0
      %v2232 = vmax.f32 %v2040, 0.0
      %v2233 = vmax.f32 %v2041, 0.0
      %v2234 = vmax.f32 %v2042, 0.0
      %v2235 = vmax.f32 %v2043, 0.0
      %v2236 = vmax.f32 %v2044, 0.0
      %v2237 = vmax.f32 %v2045, 0.0
      %v2238 = vmax.f32 %v2046, 0.0
      %v2239 = vmax.f32 %v2047, 0.0
      %v2240 = vmax.f32 %v2048, 0.0
      %v2241 = vmax.f32 %v2049, 0.0
      %v2242 = vmax.f32 %v2050, 0.0
      %v2243 = vmax.f32 %v2051, 0.0
      %v2244 = vmax.f32 %v2052, 0.0
      %v2245 = vmax.f32 %v2053, 0.0
      %v2246 = vmax.f32 %v2054, 0.0
      %v2247 = vmax.f32 %v2055, 0.0
      %v2248 = vmax.f32 %v2056, 0.0
      %v2249 = vmax.f32 %v2057, 0.0
      %v2250 = vmax.f32 %v2058, 0.0
      %v2251 = vmax.f32 %v2059, 0.0
      %v2252 = vmax.f32 %v2060, 0.0
      %v2253 = vmax.f32 %v2061, 0.0
      %v2254 = vmax.f32 %v2062, 0.0
      %v2255 = vmax.f32 %v2063, 0.0
      %v2256 = vmax.f32 %v2064, 0.0
      %v2257 = vmax.f32 %v2065, 0.0
      %v2258 = vmax.f32 %v2066, 0.0
      %v2259 = vmax.f32 %v2067, 0.0
      %v2260 = vmax.f32 %v2068, 0.0
      %v2261 = vmax.f32 %v2069, 0.0
      %v2262 = vmax.f32 %v2070, 0.0
      %v2263 = vmax.f32 %v2071, 0.0
      %v2264 = vmax.f32 %v2072, 0.0
      %v2265 = vmax.f32 %v2073, 0.0
      %v2266 = vmax.f32 %v2074, 0.0
      %v2267 = vmax.f32 %v2075, 0.0
      %v2268 = vmax.f32 %v2076, 0.0
      %v2269 = vmax.f32 %v2077, 0.0
      %v2270 = vmax.f32 %v2078, 0.0
      %v2271 = vmax.f32 %v2079, 0.0
      %v2272 = vmax.f32 %v2080, 0.0
      %v2273 = vmax.f32 %v2081, 0.0
      %v2274 = vmax.f32 %v2082, 0.0
      %v2275 = vmax.f32 %v2083, 0.0
      %v2276 = vmax.f32 %v2084, 0.0
      %v2277 = vmax.f32 %v2085, 0.0
      %v2278 = vmax.f32 %v2086, 0.0
      %v2279 = vmax.f32 %v2087, 0.0
      %v2280 = vmax.f32 %v2088, 0.0
      %v2281 = vmax.f32 %v2089, 0.0
      %v2282 = vmax.f32 %v2090, 0.0
      %v2283 = vmax.f32 %v2091, 0.0
      %v2284 = vmax.f32 %v2092, 0.0
      %v2285 = vmax.f32 %v2093, 0.0
      %v2286 = vmax.f32 %v2094, 0.0
      %v2287 = vmax.f32 %v2095, 0.0
      %v2288 = vmax.f32 %v2096, 0.0
      %v2289 = vmax.f32 %v2097, 0.0
      %v2290 = vmax.f32 %v2098, 0.0
      %v2291 = vmax.f32 %v2099, 0.0
      %v2292 = vmax.f32 %v2100, 0.0
      %v2293 = vmax.f32 %v2101, 0.0
      %v2294 = vmax.f32 %v2102, 0.0
      %v2295 = vmax.f32 %v2103, 0.0
      %v2296 = vmax.f32 %v2104, 0.0
      %v2297 = vmax.f32 %v2105, 0.0
      %v2298 = vmax.f32 %v2106, 0.0
      %v2299 = vmax.f32 %v2107, 0.0
      %v2300 = vmax.f32 %v2108, 0.0
      %v2301 = vmax.f32 %v2109, 0.0
      %v2302 = vmax.f32 %v2110, 0.0
      %v2303 = vmax.f32 %v2111, 0.0
      %v2304 = vmax.f32 %v2112, 0.0
      %v2305 = vmax.f32 %v2113, 0.0
      %v2306 = vmax.f32 %v2114, 0.0
      %v2307 = vmax.f32 %v2115, 0.0
      %v2308 = vpack.c.bf16 %v2122, %v2116
      %v2309 = vpack.c.bf16 %v2123, %v2117
      %v2310 = vpack.c.bf16 %v2124, %v2118
      %v2311 = vpack.c.bf16 %v2125, %v2119
      %v2312 = vpack.c.bf16 %v2126, %v2120
      %v2313 = vpack.c.bf16 %v2127, %v2121
      %v2314 = vpack.c.bf16 %v2134, %v2128
      %v2315 = vpack.c.bf16 %v2135, %v2129
      %v2316 = vpack.c.bf16 %v2136, %v2130
      %v2317 = vpack.c.bf16 %v2137, %v2131
      %v2318 = vpack.c.bf16 %v2138, %v2132
      %v2319 = vpack.c.bf16 %v2139, %v2133
      %v2320 = vpack.c.bf16 %v2146, %v2140
      %v2321 = vpack.c.bf16 %v2147, %v2141
      %v2322 = vpack.c.bf16 %v2148, %v2142
      %v2323 = vpack.c.bf16 %v2149, %v2143
      %v2324 = vpack.c.bf16 %v2150, %v2144
      %v2325 = vpack.c.bf16 %v2151, %v2145
      %v2326 = vpack.c.bf16 %v2158, %v2152
      %v2327 = vpack.c.bf16 %v2159, %v2153
      %v2328 = vpack.c.bf16 %v2160, %v2154
      %v2329 = vpack.c.bf16 %v2161, %v2155
      %v2330 = vpack.c.bf16 %v2162, %v2156
      %v2331 = vpack.c.bf16 %v2163, %v2157
      %v2332 = vpack.c.bf16 %v2170, %v2164
      %v2333 = vpack.c.bf16 %v2171, %v2165
      %v2334 = vpack.c.bf16 %v2172, %v2166
      %v2335 = vpack.c.bf16 %v2173, %v2167
      %v2336 = vpack.c.bf16 %v2174, %v2168
      %v2337 = vpack.c.bf16 %v2175, %v2169
      %v2338 = vpack.c.bf16 %v2182, %v2176
      %v2339 = vpack.c.bf16 %v2183, %v2177
      %v2340 = vpack.c.bf16 %v2184, %v2178
      %v2341 = vpack.c.bf16 %v2185, %v2179
      %v2342 = vpack.c.bf16 %v2186, %v2180
      %v2343 = vpack.c.bf16 %v2187, %v2181
      %v2344 = vpack.c.bf16 %v2194, %v2188
      %v2345 = vpack.c.bf16 %v2195, %v2189
      %v2346 = vpack.c.bf16 %v2196, %v2190
      %v2347 = vpack.c.bf16 %v2197, %v2191
      %v2348 = vpack.c.bf16 %v2198, %v2192
      %v2349 = vpack.c.bf16 %v2199, %v2193
      %v2350 = vpack.c.bf16 %v2206, %v2200
      %v2351 = vpack.c.bf16 %v2207, %v2201
      %v2352 = vpack.c.bf16 %v2208, %v2202
      %v2353 = vpack.c.bf16 %v2209, %v2203
      %v2354 = vpack.c.bf16 %v2210, %v2204
      %v2355 = vpack.c.bf16 %v2211, %v2205
      %v2356 = vpack.c.bf16 %v2218, %v2212
      %v2357 = vpack.c.bf16 %v2219, %v2213
      %v2358 = vpack.c.bf16 %v2220, %v2214
      %v2359 = vpack.c.bf16 %v2221, %v2215
      %v2360 = vpack.c.bf16 %v2222, %v2216
      %v2361 = vpack.c.bf16 %v2223, %v2217
      %v2362 = vpack.c.bf16 %v2230, %v2224
      %v2363 = vpack.c.bf16 %v2231, %v2225
      %v2364 = vpack.c.bf16 %v2232, %v2226
      %v2365 = vpack.c.bf16 %v2233, %v2227
      %v2366 = vpack.c.bf16 %v2234, %v2228
      %v2367 = vpack.c.bf16 %v2235, %v2229
      %v2368 = vpack.c.bf16 %v2242, %v2236
      %v2369 = vpack.c.bf16 %v2243, %v2237
      %v2370 = vpack.c.bf16 %v2244, %v2238
      %v2371 = vpack.c.bf16 %v2245, %v2239
      %v2372 = vpack.c.bf16 %v2246, %v2240
      %v2373 = vpack.c.bf16 %v2247, %v2241
      %v2374 = vpack.c.bf16 %v2254, %v2248
      %v2375 = vpack.c.bf16 %v2255, %v2249
      %v2376 = vpack.c.bf16 %v2256, %v2250
      %v2377 = vpack.c.bf16 %v2257, %v2251
      %v2378 = vpack.c.bf16 %v2258, %v2252
      %v2379 = vpack.c.bf16 %v2259, %v2253
      %v2380 = vpack.c.bf16 %v2266, %v2260
      %v2381 = vpack.c.bf16 %v2267, %v2261
      %v2382 = vpack.c.bf16 %v2268, %v2262
      %v2383 = vpack.c.bf16 %v2269, %v2263
      %v2384 = vpack.c.bf16 %v2270, %v2264
      %v2385 = vpack.c.bf16 %v2271, %v2265
      %v2386 = vpack.c.bf16 %v2278, %v2272
      %v2387 = vpack.c.bf16 %v2279, %v2273
      %v2388 = vpack.c.bf16 %v2280, %v2274
      %v2389 = vpack.c.bf16 %v2281, %v2275
      %v2390 = vpack.c.bf16 %v2282, %v2276
      %v2391 = vpack.c.bf16 %v2283, %v2277
      %v2392 = vpack.c.bf16 %v2290, %v2284
      %v2393 = vpack.c.bf16 %v2291, %v2285
      %v2394 = vpack.c.bf16 %v2292, %v2286
      %v2395 = vpack.c.bf16 %v2293, %v2287
      %v2396 = vpack.c.bf16 %v2294, %v2288
      %v2397 = vpack.c.bf16 %v2295, %v2289
      %v2398 = vpack.c.bf16 %v2302, %v2296
      %v2399 = vpack.c.bf16 %v2303, %v2297
      %v2400 = vpack.c.bf16 %v2304, %v2298
      %v2401 = vpack.c.bf16 %v2305, %v2299
      %v2402 = vpack.c.bf16 %v2306, %v2300
      %v2403 = vpack.c.bf16 %v2307, %v2301
      %v2404 = vld [vmem:[%s7] sm:$0xf]
      %v2405 = vld [vmem:[%s7 + $0x4] sm:$0xf]
      %v2406 = vld [vmem:[%s7 + $0x8] sm:$0xf]
      %v2407 = vld [vmem:[%s7 + $0xc] sm:$0xf]
      %v2408 = vld [vmem:[%s7 + $0x10] sm:$0xf]
      %v2409 = vld [vmem:[%s7 + $0x14] sm:$0xf]
      %v2410 = vld [vmem:[%s7 + $0x18] sm:$0xf]
      %v2411 = vld [vmem:[%s7 + $0x1c] sm:$0xf]
      %v2412 = vld [vmem:[%s7 + $0x20] sm:$0xf]
      %v2413 = vld [vmem:[%s7 + $0x24] sm:$0xf]
      %v2414 = vld [vmem:[%s7 + $0x28] sm:$0xf]
      %v2415 = vld [vmem:[%s7 + $0x2c] sm:$0xf]
      %v2416 = vld [vmem:[%s7 + $0x30] sm:$0xf]
      %v2417 = vld [vmem:[%s7 + $0x34] sm:$0xf]
      %v2418 = vld [vmem:[%s7 + $0x38] sm:$0xf]
      %v2419 = vld [vmem:[%s7 + $0x3c] sm:$0xf]
      %v2420 = vld [vmem:[%s7 + $0x40] sm:$0xf]
      %v2421 = vld [vmem:[%s7 + $0x44] sm:$0xf]
      %v2422 = vld [vmem:[%s7 + $0x48] sm:$0xf]
      %v2423 = vld [vmem:[%s7 + $0x4c] sm:$0xf]
      %v2424 = vld [vmem:[%s7 + $0x50] sm:$0xf]
      %v2425 = vld [vmem:[%s7 + $0x54] sm:$0xf]
      %v2426 = vld [vmem:[%s7 + $0x58] sm:$0xf]
      %v2427 = vld [vmem:[%s7 + $0x5c] sm:$0xf]
      %v2428 = vld [vmem:[%s7 + $0x60] sm:$0xf]
      %v2429 = vld [vmem:[%s7 + $0x64] sm:$0xf]
      %v2430 = vld [vmem:[%s7 + $0x68] sm:$0xf]
      %v2431 = vld [vmem:[%s7 + $0x6c] sm:$0xf]
      %v2432 = vld [vmem:[%s7 + $0x70] sm:$0xf]
      %v2433 = vld [vmem:[%s7 + $0x74] sm:$0xf]
      %v2434 = vld [vmem:[%s7 + $0x78] sm:$0xf]
      %v2435 = vld [vmem:[%s7 + $0x7c] sm:$0xf]
      %v2436 = vld [vmem:[%s7 + $0x80] sm:$0xf]
      %v2437 = vld [vmem:[%s7 + $0x84] sm:$0xf]
      %v2438 = vld [vmem:[%s7 + $0x88] sm:$0xf]
      %v2439 = vld [vmem:[%s7 + $0x8c] sm:$0xf]
      %v2440 = vld [vmem:[%s7 + $0x90] sm:$0xf]
      %v2441 = vld [vmem:[%s7 + $0x94] sm:$0xf]
      %v2442 = vld [vmem:[%s7 + $0x98] sm:$0xf]
      %v2443 = vld [vmem:[%s7 + $0x9c] sm:$0xf]
      %v2444 = vld [vmem:[%s7 + $0xa0] sm:$0xf]
      %v2445 = vld [vmem:[%s7 + $0xa4] sm:$0xf]
      %v2446 = vld [vmem:[%s7 + $0xa8] sm:$0xf]
      %v2447 = vld [vmem:[%s7 + $0xac] sm:$0xf]
      %v2448 = vld [vmem:[%s7 + $0xb0] sm:$0xf]
      %v2449 = vld [vmem:[%s7 + $0xb4] sm:$0xf]
      %v2450 = vld [vmem:[%s7 + $0xb8] sm:$0xf]
      %v2451 = vld [vmem:[%s7 + $0xbc] sm:$0xf]
      %v2452 = vld [vmem:[%s7 + $0xc0] sm:$0xf]
      %v2453 = vld [vmem:[%s7 + $0xc4] sm:$0xf]
      %v2454 = vld [vmem:[%s7 + $0xc8] sm:$0xf]
      %v2455 = vld [vmem:[%s7 + $0xcc] sm:$0xf]
      %v2456 = vld [vmem:[%s7 + $0xd0] sm:$0xf]
      %v2457 = vld [vmem:[%s7 + $0xd4] sm:$0xf]
      %v2458 = vld [vmem:[%s7 + $0xd8] sm:$0xf]
      %v2459 = vld [vmem:[%s7 + $0xdc] sm:$0xf]
      %v2460 = vld [vmem:[%s7 + $0xe0] sm:$0xf]
      %v2461 = vld [vmem:[%s7 + $0xe4] sm:$0xf]
      %v2462 = vld [vmem:[%s7 + $0xe8] sm:$0xf]
      %v2463 = vld [vmem:[%s7 + $0xec] sm:$0xf]
      %v2464 = vld [vmem:[%s7 + $0xf0] sm:$0xf]
      %v2465 = vld [vmem:[%s7 + $0xf4] sm:$0xf]
      %v2466 = vld [vmem:[%s7 + $0xf8] sm:$0xf]
      %v2467 = vld [vmem:[%s7 + $0xfc] sm:$0xf]
      %v2468 = vld [vmem:[%s7 + $0x100] sm:$0xf]
      %v2469 = vld [vmem:[%s7 + $0x104] sm:$0xf]
      %v2470 = vld [vmem:[%s7 + $0x108] sm:$0xf]
      %v2471 = vld [vmem:[%s7 + $0x10c] sm:$0xf]
      %v2472 = vld [vmem:[%s7 + $0x110] sm:$0xf]
      %v2473 = vld [vmem:[%s7 + $0x114] sm:$0xf]
      %v2474 = vld [vmem:[%s7 + $0x118] sm:$0xf]
      %v2475 = vld [vmem:[%s7 + $0x11c] sm:$0xf]
      %v2476 = vld [vmem:[%s7 + $0x120] sm:$0xf]
      %v2477 = vld [vmem:[%s7 + $0x124] sm:$0xf]
      %v2478 = vld [vmem:[%s7 + $0x128] sm:$0xf]
      %v2479 = vld [vmem:[%s7 + $0x12c] sm:$0xf]
      %v2480 = vld [vmem:[%s7 + $0x130] sm:$0xf]
      %v2481 = vld [vmem:[%s7 + $0x134] sm:$0xf]
      %v2482 = vld [vmem:[%s7 + $0x138] sm:$0xf]
      %v2483 = vld [vmem:[%s7 + $0x13c] sm:$0xf]
      %v2484 = vld [vmem:[%s7 + $0x140] sm:$0xf]
      %v2485 = vld [vmem:[%s7 + $0x144] sm:$0xf]
      %v2486 = vld [vmem:[%s7 + $0x148] sm:$0xf]
      %v2487 = vld [vmem:[%s7 + $0x14c] sm:$0xf]
      %v2488 = vld [vmem:[%s7 + $0x150] sm:$0xf]
      %v2489 = vld [vmem:[%s7 + $0x154] sm:$0xf]
      %v2490 = vld [vmem:[%s7 + $0x158] sm:$0xf]
      %v2491 = vld [vmem:[%s7 + $0x15c] sm:$0xf]
      %v2492 = vld [vmem:[%s7 + $0x160] sm:$0xf]
      %v2493 = vld [vmem:[%s7 + $0x164] sm:$0xf]
      %v2494 = vld [vmem:[%s7 + $0x168] sm:$0xf]
      %v2495 = vld [vmem:[%s7 + $0x16c] sm:$0xf]
      %v2496 = vld [vmem:[%s7 + $0x170] sm:$0xf]
      %v2497 = vld [vmem:[%s7 + $0x174] sm:$0xf]
      %v2498 = vld [vmem:[%s7 + $0x178] sm:$0xf]
      %v2499 = vld [vmem:[%s7 + $0x17c] sm:$0xf]
      %v2500 = vld [vmem:[%s8] sm:$0x1]
      %v2502 = vlaneseq
      %v2503 = vshrl.u32 %v2502, 7
      %v2504 = vsub.s32 0, %v2503
      %v2505 = vrot.slane %v2500, %v2504
      %v2603 = vunpack.c.l.b16 %v2404
      %v2604 = vunpack.c.l.b16 %v2405
      %v2605 = vunpack.c.l.b16 %v2406
      %v2606 = vunpack.c.l.b16 %v2407
      %v2607 = vunpack.c.l.b16 %v2408
      %v2608 = vunpack.c.l.b16 %v2409
      %v2609 = vunpack.c.l.b16 %v2410
      %v2610 = vunpack.c.l.b16 %v2411
      %v2611 = vunpack.c.l.b16 %v2412
      %v2612 = vunpack.c.l.b16 %v2413
      %v2613 = vunpack.c.l.b16 %v2414
      %v2614 = vunpack.c.l.b16 %v2415
      %v2615 = vunpack.c.l.b16 %v2416
      %v2616 = vunpack.c.l.b16 %v2417
      %v2617 = vunpack.c.l.b16 %v2418
      %v2618 = vunpack.c.l.b16 %v2419
      %v2619 = vunpack.c.l.b16 %v2420
      %v2620 = vunpack.c.l.b16 %v2421
      %v2621 = vunpack.c.l.b16 %v2422
      %v2622 = vunpack.c.l.b16 %v2423
      %v2623 = vunpack.c.l.b16 %v2424
      %v2624 = vunpack.c.l.b16 %v2425
      %v2625 = vunpack.c.l.b16 %v2426
      %v2626 = vunpack.c.l.b16 %v2427
      %v2627 = vunpack.c.l.b16 %v2428
      %v2628 = vunpack.c.l.b16 %v2429
      %v2629 = vunpack.c.l.b16 %v2430
      %v2630 = vunpack.c.l.b16 %v2431
      %v2631 = vunpack.c.l.b16 %v2432
      %v2632 = vunpack.c.l.b16 %v2433
      %v2633 = vunpack.c.l.b16 %v2434
      %v2634 = vunpack.c.l.b16 %v2435
      %v2635 = vunpack.c.l.b16 %v2436
      %v2636 = vunpack.c.l.b16 %v2437
      %v2637 = vunpack.c.l.b16 %v2438
      %v2638 = vunpack.c.l.b16 %v2439
      %v2639 = vunpack.c.l.b16 %v2440
      %v2640 = vunpack.c.l.b16 %v2441
      %v2641 = vunpack.c.l.b16 %v2442
      %v2642 = vunpack.c.l.b16 %v2443
      %v2643 = vunpack.c.l.b16 %v2444
      %v2644 = vunpack.c.l.b16 %v2445
      %v2645 = vunpack.c.l.b16 %v2446
      %v2646 = vunpack.c.l.b16 %v2447
      %v2647 = vunpack.c.l.b16 %v2448
      %v2648 = vunpack.c.l.b16 %v2449
      %v2649 = vunpack.c.l.b16 %v2450
      %v2650 = vunpack.c.l.b16 %v2451
      %v2651 = vunpack.c.l.b16 %v2452
      %v2652 = vunpack.c.l.b16 %v2453
      %v2653 = vunpack.c.l.b16 %v2454
      %v2654 = vunpack.c.l.b16 %v2455
      %v2655 = vunpack.c.l.b16 %v2456
      %v2656 = vunpack.c.l.b16 %v2457
      %v2657 = vunpack.c.l.b16 %v2458
      %v2658 = vunpack.c.l.b16 %v2459
      %v2659 = vunpack.c.l.b16 %v2460
      %v2660 = vunpack.c.l.b16 %v2461
      %v2661 = vunpack.c.l.b16 %v2462
      %v2662 = vunpack.c.l.b16 %v2463
      %v2663 = vunpack.c.l.b16 %v2464
      %v2664 = vunpack.c.l.b16 %v2465
      %v2665 = vunpack.c.l.b16 %v2466
      %v2666 = vunpack.c.l.b16 %v2467
      %v2667 = vunpack.c.l.b16 %v2468
      %v2668 = vunpack.c.l.b16 %v2469
      %v2669 = vunpack.c.l.b16 %v2470
      %v2670 = vunpack.c.l.b16 %v2471
      %v2671 = vunpack.c.l.b16 %v2472
      %v2672 = vunpack.c.l.b16 %v2473
      %v2673 = vunpack.c.l.b16 %v2474
      %v2674 = vunpack.c.l.b16 %v2475
      %v2675 = vunpack.c.l.b16 %v2476
      %v2676 = vunpack.c.l.b16 %v2477
      %v2677 = vunpack.c.l.b16 %v2478
      %v2678 = vunpack.c.l.b16 %v2479
      %v2679 = vunpack.c.l.b16 %v2480
      %v2680 = vunpack.c.l.b16 %v2481
      %v2681 = vunpack.c.l.b16 %v2482
      %v2682 = vunpack.c.l.b16 %v2483
      %v2683 = vunpack.c.l.b16 %v2484
      %v2684 = vunpack.c.l.b16 %v2485
      %v2685 = vunpack.c.l.b16 %v2486
      %v2686 = vunpack.c.l.b16 %v2487
      %v2687 = vunpack.c.l.b16 %v2488
      %v2688 = vunpack.c.l.b16 %v2489
      %v2689 = vunpack.c.l.b16 %v2490
      %v2690 = vunpack.c.l.b16 %v2491
      %v2691 = vunpack.c.l.b16 %v2492
      %v2692 = vunpack.c.l.b16 %v2493
      %v2693 = vunpack.c.l.b16 %v2494
      %v2694 = vunpack.c.l.b16 %v2495
      %v2695 = vunpack.c.l.b16 %v2496
      %v2696 = vunpack.c.l.b16 %v2497
      %v2697 = vunpack.c.l.b16 %v2498
      %v2698 = vunpack.c.l.b16 %v2499
      %v2699 = vpack.c.b16 %v2604, %v2603
      %v2700 = vpack.c.b16 %v2606, %v2605
      %v2701 = vpack.c.b16 %v2608, %v2607
      %v2702 = vpack.c.b16 %v2610, %v2609
      %v2703 = vpack.c.b16 %v2612, %v2611
      %v2704 = vpack.c.b16 %v2614, %v2613
      %v2705 = vpack.c.b16 %v2616, %v2615
      %v2706 = vpack.c.b16 %v2618, %v2617
      %v2707 = vpack.c.b16 %v2620, %v2619
      %v2708 = vpack.c.b16 %v2622, %v2621
      %v2709 = vpack.c.b16 %v2624, %v2623
      %v2710 = vpack.c.b16 %v2626, %v2625
      %v2711 = vpack.c.b16 %v2628, %v2627
      %v2712 = vpack.c.b16 %v2630, %v2629
      %v2713 = vpack.c.b16 %v2632, %v2631
      %v2714 = vpack.c.b16 %v2634, %v2633
      %v2715 = vpack.c.b16 %v2636, %v2635
      %v2716 = vpack.c.b16 %v2638, %v2637
      %v2717 = vpack.c.b16 %v2640, %v2639
      %v2718 = vpack.c.b16 %v2642, %v2641
      %v2719 = vpack.c.b16 %v2644, %v2643
      %v2720 = vpack.c.b16 %v2646, %v2645
      %v2721 = vpack.c.b16 %v2648, %v2647
      %v2722 = vpack.c.b16 %v2650, %v2649
      %v2723 = vpack.c.b16 %v2652, %v2651
      %v2724 = vpack.c.b16 %v2654, %v2653
      %v2725 = vpack.c.b16 %v2656, %v2655
      %v2726 = vpack.c.b16 %v2658, %v2657
      %v2727 = vpack.c.b16 %v2660, %v2659
      %v2728 = vpack.c.b16 %v2662, %v2661
      %v2729 = vpack.c.b16 %v2664, %v2663
      %v2730 = vpack.c.b16 %v2666, %v2665
      %v2731 = vpack.c.b16 %v2668, %v2667
      %v2732 = vpack.c.b16 %v2670, %v2669
      %v2733 = vpack.c.b16 %v2672, %v2671
      %v2734 = vpack.c.b16 %v2674, %v2673
      %v2735 = vpack.c.b16 %v2676, %v2675
      %v2736 = vpack.c.b16 %v2678, %v2677
      %v2737 = vpack.c.b16 %v2680, %v2679
      %v2738 = vpack.c.b16 %v2682, %v2681
      %v2739 = vpack.c.b16 %v2684, %v2683
      %v2740 = vpack.c.b16 %v2686, %v2685
      %v2741 = vpack.c.b16 %v2688, %v2687
      %v2742 = vpack.c.b16 %v2690, %v2689
      %v2743 = vpack.c.b16 %v2692, %v2691
      %v2744 = vpack.c.b16 %v2694, %v2693
      %v2745 = vpack.c.b16 %v2696, %v2695
      %v2746 = vpack.c.b16 %v2698, %v2697
      %2795 = vmatprep.subr.bf16.mxu0 0
      %2796 = vmatpush1.bf16.msra.mxu0 %v2706
      %2797 = vmatprep.subr.bf16.mxu0 0
      %2798 = vmatpush1.bf16.msra.mxu0 %v2705
      %2799 = vmatprep.subr.bf16.mxu0 0
      %2800 = vmatpush1.bf16.msra.mxu0 %v2704
      %2801 = vmatprep.subr.bf16.mxu0 0
      %2802 = vmatpush1.bf16.msra.mxu0 %v2703
      %2803 = vmatprep.subr.bf16.mxu0 0
      %2804 = vmatpush1.bf16.msra.mxu0 %v2702
      %2805 = vmatprep.subr.bf16.mxu0 0
      %2806 = vmatpush1.bf16.msra.mxu0 %v2701
      %2807 = vmatprep.subr.bf16.mxu0 0
      %2808 = vmatpush1.bf16.msra.mxu0 %v2700
      %2809 = vmatprep.subr.bf16.mxu0 0
      %2810 = vmatpush1.bf16.msra.mxu0 %v2699
      %2811 = vmatprep.subr.bf16.mxu0 0
      %2812 = vmatpush2.bf16.msra.mxu0 %v2714
      %2813 = vmatprep.subr.bf16.mxu0 0
      %2814 = vmatpush2.bf16.msra.mxu0 %v2713
      %2815 = vmatprep.subr.bf16.mxu0 0
      %2816 = vmatpush2.bf16.msra.mxu0 %v2712
      %2817 = vmatprep.subr.bf16.mxu0 0
      %2818 = vmatpush2.bf16.msra.mxu0 %v2711
      %2819 = vmatprep.subr.bf16.mxu0 0
      %2820 = vmatpush2.bf16.msra.mxu0 %v2710
      %2821 = vmatprep.subr.bf16.mxu0 0
      %2822 = vmatpush2.bf16.msra.mxu0 %v2709
      %2823 = vmatprep.subr.bf16.mxu0 0
      %2824 = vmatpush2.bf16.msra.mxu0 %v2708
      %2825 = vmatprep.subr.bf16.mxu0 0
      %2826 = vmatpush2.bf16.msra.mxu0 %v2707
      %2827 = vmatprep.mubr.bf16.mxu0 %v2309
      %2828 = vmatmul.mubr.bf16.gmra.mxu0 %v2308
      %v2829 = vpop.f32.mrf.mxu0
      %v2830 = vadd.f32 %v2505, %v2829
      %v2831 = vpop.f32.mrf.mxu0
      %v2832 = vpop.f32.mrf.mxu0
      %v2833 = vadd.f32 %v2505, %v2832
      %v2834 = vpop.f32.mrf.mxu0
      %2835 = vmatprep.mubr.bf16.mxu0 %v2315
      %2836 = vmatmul.mubr.bf16.gmra.mxu0 %v2314
      %v2837 = vpop.f32.mrf.mxu0
      %v2838 = vadd.f32 %v2505, %v2837
      %v2839 = vpop.f32.mrf.mxu0
      %v2840 = vpop.f32.mrf.mxu0
      %v2841 = vadd.f32 %v2505, %v2840
      %v2842 = vpop.f32.mrf.mxu0
      %2843 = vmatprep.mubr.bf16.mxu0 %v2321
      %2844 = vmatmul.mubr.bf16.gmra.mxu0 %v2320
      %v2845 = vpop.f32.mrf.mxu0
      %v2846 = vadd.f32 %v2505, %v2845
      %v2847 = vpop.f32.mrf.mxu0
      %v2848 = vpop.f32.mrf.mxu0
      %v2849 = vadd.f32 %v2505, %v2848
      %v2850 = vpop.f32.mrf.mxu0
      %2851 = vmatprep.mubr.bf16.mxu0 %v2327
      %2852 = vmatmul.mubr.bf16.gmra.mxu0 %v2326
      %v2853 = vpop.f32.mrf.mxu0
      %v2854 = vadd.f32 %v2505, %v2853
      %v2855 = vpop.f32.mrf.mxu0
      %v2856 = vpop.f32.mrf.mxu0
      %v2857 = vadd.f32 %v2505, %v2856
      %v2858 = vpop.f32.mrf.mxu0
      %2859 = vmatprep.mubr.bf16.mxu0 %v2333
      %2860 = vmatmul.mubr.bf16.gmra.mxu0 %v2332
      %v2861 = vpop.f32.mrf.mxu0
      %v2862 = vadd.f32 %v2505, %v2861
      %v2863 = vpop.f32.mrf.mxu0
      %v2864 = vpop.f32.mrf.mxu0
      %v2865 = vadd.f32 %v2505, %v2864
      %v2866 = vpop.f32.mrf.mxu0
      %2867 = vmatprep.mubr.bf16.mxu0 %v2339
      %2868 = vmatmul.mubr.bf16.gmra.mxu0 %v2338
      %v2869 = vpop.f32.mrf.mxu0
      %v2870 = vadd.f32 %v2505, %v2869
      %v2871 = vpop.f32.mrf.mxu0
      %v2872 = vpop.f32.mrf.mxu0
      %v2873 = vadd.f32 %v2505, %v2872
      %v2874 = vpop.f32.mrf.mxu0
      %2875 = vmatprep.mubr.bf16.mxu0 %v2345
      %2876 = vmatmul.mubr.bf16.gmra.mxu0 %v2344
      %v2877 = vpop.f32.mrf.mxu0
      %v2878 = vadd.f32 %v2505, %v2877
      %v2879 = vpop.f32.mrf.mxu0
      %v2880 = vpop.f32.mrf.mxu0
      %v2881 = vadd.f32 %v2505, %v2880
      %v2882 = vpop.f32.mrf.mxu0
      %2883 = vmatprep.mubr.bf16.mxu0 %v2351
      %2884 = vmatmul.mubr.bf16.gmra.mxu0 %v2350
      %v2885 = vpop.f32.mrf.mxu0
      %v2886 = vadd.f32 %v2505, %v2885
      %v2887 = vpop.f32.mrf.mxu0
      %v2888 = vpop.f32.mrf.mxu0
      %v2889 = vadd.f32 %v2505, %v2888
      %v2890 = vpop.f32.mrf.mxu0
      %2891 = vmatprep.mubr.bf16.mxu0 %v2357
      %2892 = vmatmul.mubr.bf16.gmra.mxu0 %v2356
      %v2893 = vpop.f32.mrf.mxu0
      %v2894 = vadd.f32 %v2505, %v2893
      %v2895 = vpop.f32.mrf.mxu0
      %v2896 = vpop.f32.mrf.mxu0
      %v2897 = vadd.f32 %v2505, %v2896
      %v2898 = vpop.f32.mrf.mxu0
      %2899 = vmatprep.mubr.bf16.mxu0 %v2363
      %2900 = vmatmul.mubr.bf16.gmra.mxu0 %v2362
      %v2901 = vpop.f32.mrf.mxu0
      %v2902 = vadd.f32 %v2505, %v2901
      %v2903 = vpop.f32.mrf.mxu0
      %v2904 = vpop.f32.mrf.mxu0
      %v2905 = vadd.f32 %v2505, %v2904
      %v2906 = vpop.f32.mrf.mxu0
      %2907 = vmatprep.mubr.bf16.mxu0 %v2369
      %2908 = vmatmul.mubr.bf16.gmra.mxu0 %v2368
      %v2909 = vpop.f32.mrf.mxu0
      %v2910 = vadd.f32 %v2505, %v2909
      %v2911 = vpop.f32.mrf.mxu0
      %v2912 = vpop.f32.mrf.mxu0
      %v2913 = vadd.f32 %v2505, %v2912
      %v2914 = vpop.f32.mrf.mxu0
      %2915 = vmatprep.mubr.bf16.mxu0 %v2375
      %2916 = vmatmul.mubr.bf16.gmra.mxu0 %v2374
      %v2917 = vpop.f32.mrf.mxu0
      %v2918 = vadd.f32 %v2505, %v2917
      %v2919 = vpop.f32.mrf.mxu0
      %v2920 = vpop.f32.mrf.mxu0
      %v2921 = vadd.f32 %v2505, %v2920
      %v2922 = vpop.f32.mrf.mxu0
      %2923 = vmatprep.mubr.bf16.mxu0 %v2381
      %2924 = vmatmul.mubr.bf16.gmra.mxu0 %v2380
      %v2925 = vpop.f32.mrf.mxu0
      %v2926 = vadd.f32 %v2505, %v2925
      %v2927 = vpop.f32.mrf.mxu0
      %v2928 = vpop.f32.mrf.mxu0
      %v2929 = vadd.f32 %v2505, %v2928
      %v2930 = vpop.f32.mrf.mxu0
      %2931 = vmatprep.mubr.bf16.mxu0 %v2387
      %2932 = vmatmul.mubr.bf16.gmra.mxu0 %v2386
      %v2933 = vpop.f32.mrf.mxu0
      %v2934 = vadd.f32 %v2505, %v2933
      %v2935 = vpop.f32.mrf.mxu0
      %v2936 = vpop.f32.mrf.mxu0
      %v2937 = vadd.f32 %v2505, %v2936
      %v2938 = vpop.f32.mrf.mxu0
      %2939 = vmatprep.mubr.bf16.mxu0 %v2393
      %2940 = vmatmul.mubr.bf16.gmra.mxu0 %v2392
      %v2941 = vpop.f32.mrf.mxu0
      %v2942 = vadd.f32 %v2505, %v2941
      %v2943 = vpop.f32.mrf.mxu0
      %v2944 = vpop.f32.mrf.mxu0
      %v2945 = vadd.f32 %v2505, %v2944
      %v2946 = vpop.f32.mrf.mxu0
      %2947 = vmatprep.mubr.bf16.mxu0 %v2399
      %2948 = vmatmul.mubr.bf16.gmra.mxu0 %v2398
      %v2949 = vpop.f32.mrf.mxu0
      %v2950 = vadd.f32 %v2505, %v2949
      %v2951 = vpop.f32.mrf.mxu0
      %v2952 = vpop.f32.mrf.mxu0
      %v2953 = vadd.f32 %v2505, %v2952
      %v2954 = vpop.f32.mrf.mxu0
      %2955 = vdwg.mxu0
      %2956 = vmatprep.subr.bf16.mxu0 0
      %2957 = vmatpush1.bf16.msra.mxu0 %v2722
      %2958 = vmatprep.subr.bf16.mxu0 0
      %2959 = vmatpush1.bf16.msra.mxu0 %v2721
      %2960 = vmatprep.subr.bf16.mxu0 0
      %2961 = vmatpush1.bf16.msra.mxu0 %v2720
      %2962 = vmatprep.subr.bf16.mxu0 0
      %2963 = vmatpush1.bf16.msra.mxu0 %v2719
      %2964 = vmatprep.subr.bf16.mxu0 0
      %2965 = vmatpush1.bf16.msra.mxu0 %v2718
      %2966 = vmatprep.subr.bf16.mxu0 0
      %2967 = vmatpush1.bf16.msra.mxu0 %v2717
      %2968 = vmatprep.subr.bf16.mxu0 0
      %2969 = vmatpush1.bf16.msra.mxu0 %v2716
      %2970 = vmatprep.subr.bf16.mxu0 0
      %2971 = vmatpush1.bf16.msra.mxu0 %v2715
      %2972 = vmatprep.subr.bf16.mxu0 0
      %2973 = vmatpush2.bf16.msra.mxu0 %v2730
      %2974 = vmatprep.subr.bf16.mxu0 0
      %2975 = vmatpush2.bf16.msra.mxu0 %v2729
      %2976 = vmatprep.subr.bf16.mxu0 0
      %2977 = vmatpush2.bf16.msra.mxu0 %v2728
      %2978 = vmatprep.subr.bf16.mxu0 0
      %2979 = vmatpush2.bf16.msra.mxu0 %v2727
      %2980 = vmatprep.subr.bf16.mxu0 0
      %2981 = vmatpush2.bf16.msra.mxu0 %v2726
      %2982 = vmatprep.subr.bf16.mxu0 0
      %2983 = vmatpush2.bf16.msra.mxu0 %v2725
      %2984 = vmatprep.subr.bf16.mxu0 0
      %2985 = vmatpush2.bf16.msra.mxu0 %v2724
      %2986 = vmatprep.subr.bf16.mxu0 0
      %2987 = vmatpush2.bf16.msra.mxu0 %v2723
      %2988 = vmatprep.mubr.bf16.mxu0 %v2311
      %2989 = vmatmul.mubr.bf16.gmra.mxu0 %v2310
      %v2990 = vpop.f32.mrf.mxu0
      %v2991 = vadd.f32 %v2830, %v2990
      %v2992 = vpop.f32.mrf.mxu0
      %v2993 = vpop.f32.mrf.mxu0
      %v2994 = vadd.f32 %v2833, %v2993
      %v2995 = vpop.f32.mrf.mxu0
      %2996 = vmatprep.mubr.bf16.mxu0 %v2317
      %2997 = vmatmul.mubr.bf16.gmra.mxu0 %v2316
      %v2998 = vpop.f32.mrf.mxu0
      %v2999 = vadd.f32 %v2838, %v2998
      %v3000 = vpop.f32.mrf.mxu0
      %v3001 = vpop.f32.mrf.mxu0
      %v3002 = vadd.f32 %v2841, %v3001
      %v3003 = vpop.f32.mrf.mxu0
      %3004 = vmatprep.mubr.bf16.mxu0 %v2323
      %3005 = vmatmul.mubr.bf16.gmra.mxu0 %v2322
      %v3006 = vpop.f32.mrf.mxu0
      %v3007 = vadd.f32 %v2846, %v3006
      %v3008 = vpop.f32.mrf.mxu0
      %v3009 = vpop.f32.mrf.mxu0
      %v3010 = vadd.f32 %v2849, %v3009
      %v3011 = vpop.f32.mrf.mxu0
      %3012 = vmatprep.mubr.bf16.mxu0 %v2329
      %3013 = vmatmul.mubr.bf16.gmra.mxu0 %v2328
      %v3014 = vpop.f32.mrf.mxu0
      %v3015 = vadd.f32 %v2854, %v3014
      %v3016 = vpop.f32.mrf.mxu0
      %v3017 = vpop.f32.mrf.mxu0
      %v3018 = vadd.f32 %v2857, %v3017
      %v3019 = vpop.f32.mrf.mxu0
      %3020 = vmatprep.mubr.bf16.mxu0 %v2335
      %3021 = vmatmul.mubr.bf16.gmra.mxu0 %v2334
      %v3022 = vpop.f32.mrf.mxu0
      %v3023 = vadd.f32 %v2862, %v3022
      %v3024 = vpop.f32.mrf.mxu0
      %v3025 = vpop.f32.mrf.mxu0
      %v3026 = vadd.f32 %v2865, %v3025
      %v3027 = vpop.f32.mrf.mxu0
      %3028 = vmatprep.mubr.bf16.mxu0 %v2341
      %3029 = vmatmul.mubr.bf16.gmra.mxu0 %v2340
      %v3030 = vpop.f32.mrf.mxu0
      %v3031 = vadd.f32 %v2870, %v3030
      %v3032 = vpop.f32.mrf.mxu0
      %v3033 = vpop.f32.mrf.mxu0
      %v3034 = vadd.f32 %v2873, %v3033
      %v3035 = vpop.f32.mrf.mxu0
      %3036 = vmatprep.mubr.bf16.mxu0 %v2347
      %3037 = vmatmul.mubr.bf16.gmra.mxu0 %v2346
      %v3038 = vpop.f32.mrf.mxu0
      %v3039 = vadd.f32 %v2878, %v3038
      %v3040 = vpop.f32.mrf.mxu0
      %v3041 = vpop.f32.mrf.mxu0
      %v3042 = vadd.f32 %v2881, %v3041
      %v3043 = vpop.f32.mrf.mxu0
      %3044 = vmatprep.mubr.bf16.mxu0 %v2353
      %3045 = vmatmul.mubr.bf16.gmra.mxu0 %v2352
      %v3046 = vpop.f32.mrf.mxu0
      %v3047 = vadd.f32 %v2886, %v3046
      %v3048 = vpop.f32.mrf.mxu0
      %v3049 = vpop.f32.mrf.mxu0
      %v3050 = vadd.f32 %v2889, %v3049
      %v3051 = vpop.f32.mrf.mxu0
      %3052 = vmatprep.mubr.bf16.mxu0 %v2359
      %3053 = vmatmul.mubr.bf16.gmra.mxu0 %v2358
      %v3054 = vpop.f32.mrf.mxu0
      %v3055 = vadd.f32 %v2894, %v3054
      %v3056 = vpop.f32.mrf.mxu0
      %v3057 = vpop.f32.mrf.mxu0
      %v3058 = vadd.f32 %v2897, %v3057
      %v3059 = vpop.f32.mrf.mxu0
      %3060 = vmatprep.mubr.bf16.mxu0 %v2365
      %3061 = vmatmul.mubr.bf16.gmra.mxu0 %v2364
      %v3062 = vpop.f32.mrf.mxu0
      %v3063 = vadd.f32 %v2902, %v3062
      %v3064 = vpop.f32.mrf.mxu0
      %v3065 = vpop.f32.mrf.mxu0
      %v3066 = vadd.f32 %v2905, %v3065
      %v3067 = vpop.f32.mrf.mxu0
      %3068 = vmatprep.mubr.bf16.mxu0 %v2371
      %3069 = vmatmul.mubr.bf16.gmra.mxu0 %v2370
      %v3070 = vpop.f32.mrf.mxu0
      %v3071 = vadd.f32 %v2910, %v3070
      %v3072 = vpop.f32.mrf.mxu0
      %v3073 = vpop.f32.mrf.mxu0
      %v3074 = vadd.f32 %v2913, %v3073
      %v3075 = vpop.f32.mrf.mxu0
      %3076 = vmatprep.mubr.bf16.mxu0 %v2377
      %3077 = vmatmul.mubr.bf16.gmra.mxu0 %v2376
      %v3078 = vpop.f32.mrf.mxu0
      %v3079 = vadd.f32 %v2918, %v3078
      %v3080 = vpop.f32.mrf.mxu0
      %v3081 = vpop.f32.mrf.mxu0
      %v3082 = vadd.f32 %v2921, %v3081
      %v3083 = vpop.f32.mrf.mxu0
      %3084 = vmatprep.mubr.bf16.mxu0 %v2383
      %3085 = vmatmul.mubr.bf16.gmra.mxu0 %v2382
      %v3086 = vpop.f32.mrf.mxu0
      %v3087 = vadd.f32 %v2926, %v3086
      %v3088 = vpop.f32.mrf.mxu0
      %v3089 = vpop.f32.mrf.mxu0
      %v3090 = vadd.f32 %v2929, %v3089
      %v3091 = vpop.f32.mrf.mxu0
      %3092 = vmatprep.mubr.bf16.mxu0 %v2389
      %3093 = vmatmul.mubr.bf16.gmra.mxu0 %v2388
      %v3094 = vpop.f32.mrf.mxu0
      %v3095 = vadd.f32 %v2934, %v3094
      %v3096 = vpop.f32.mrf.mxu0
      %v3097 = vpop.f32.mrf.mxu0
      %v3098 = vadd.f32 %v2937, %v3097
      %v3099 = vpop.f32.mrf.mxu0
      %3100 = vmatprep.mubr.bf16.mxu0 %v2395
      %3101 = vmatmul.mubr.bf16.gmra.mxu0 %v2394
      %v3102 = vpop.f32.mrf.mxu0
      %v3103 = vadd.f32 %v2942, %v3102
      %v3104 = vpop.f32.mrf.mxu0
      %v3105 = vpop.f32.mrf.mxu0
      %v3106 = vadd.f32 %v2945, %v3105
      %v3107 = vpop.f32.mrf.mxu0
      %3108 = vmatprep.mubr.bf16.mxu0 %v2401
      %3109 = vmatmul.mubr.bf16.gmra.mxu0 %v2400
      %v3110 = vpop.f32.mrf.mxu0
      %v3111 = vadd.f32 %v2950, %v3110
      %v3112 = vpop.f32.mrf.mxu0
      %v3113 = vpop.f32.mrf.mxu0
      %v3114 = vadd.f32 %v2953, %v3113
      %v3115 = vpop.f32.mrf.mxu0
      %3116 = vdwg.mxu0
      %3117 = vmatprep.subr.bf16.mxu0 0
      %3118 = vmatpush1.bf16.msra.mxu0 %v2738
      %3119 = vmatprep.subr.bf16.mxu0 0
      %3120 = vmatpush1.bf16.msra.mxu0 %v2737
      %3121 = vmatprep.subr.bf16.mxu0 0
      %3122 = vmatpush1.bf16.msra.mxu0 %v2736
      %3123 = vmatprep.subr.bf16.mxu0 0
      %3124 = vmatpush1.bf16.msra.mxu0 %v2735
      %3125 = vmatprep.subr.bf16.mxu0 0
      %3126 = vmatpush1.bf16.msra.mxu0 %v2734
      %3127 = vmatprep.subr.bf16.mxu0 0
      %3128 = vmatpush1.bf16.msra.mxu0 %v2733
      %3129 = vmatprep.subr.bf16.mxu0 0
      %3130 = vmatpush1.bf16.msra.mxu0 %v2732
      %3131 = vmatprep.subr.bf16.mxu0 0
      %3132 = vmatpush1.bf16.msra.mxu0 %v2731
      %3133 = vmatprep.subr.bf16.mxu0 0
      %3134 = vmatpush2.bf16.msra.mxu0 %v2746
      %3135 = vmatprep.subr.bf16.mxu0 0
      %3136 = vmatpush2.bf16.msra.mxu0 %v2745
      %3137 = vmatprep.subr.bf16.mxu0 0
      %3138 = vmatpush2.bf16.msra.mxu0 %v2744
      %3139 = vmatprep.subr.bf16.mxu0 0
      %3140 = vmatpush2.bf16.msra.mxu0 %v2743
      %3141 = vmatprep.subr.bf16.mxu0 0
      %3142 = vmatpush2.bf16.msra.mxu0 %v2742
      %3143 = vmatprep.subr.bf16.mxu0 0
      %3144 = vmatpush2.bf16.msra.mxu0 %v2741
      %3145 = vmatprep.subr.bf16.mxu0 0
      %3146 = vmatpush2.bf16.msra.mxu0 %v2740
      %3147 = vmatprep.subr.bf16.mxu0 0
      %3148 = vmatpush2.bf16.msra.mxu0 %v2739
      %3149 = vmatprep.mubr.bf16.mxu0 %v2313
      %3150 = vmatmul.mubr.bf16.gmra.mxu0 %v2312
      %v3151 = vpop.f32.mrf.mxu0
      %v3152 = vadd.f32 %v2991, %v3151
      %v3153 = vpop.f32.mrf.mxu0
      %v3154 = vpop.f32.mrf.mxu0
      %v3155 = vadd.f32 %v2994, %v3154
      %v3156 = vpop.f32.mrf.mxu0
      %3157 = vmatprep.mubr.bf16.mxu0 %v2319
      %3158 = vmatmul.mubr.bf16.gmra.mxu0 %v2318
      %v3159 = vpop.f32.mrf.mxu0
      %v3160 = vadd.f32 %v2999, %v3159
      %v3161 = vpop.f32.mrf.mxu0
      %v3162 = vpop.f32.mrf.mxu0
      %v3163 = vadd.f32 %v3002, %v3162
      %v3164 = vpop.f32.mrf.mxu0
      %3165 = vmatprep.mubr.bf16.mxu0 %v2325
      %3166 = vmatmul.mubr.bf16.gmra.mxu0 %v2324
      %v3167 = vpop.f32.mrf.mxu0
      %v3168 = vadd.f32 %v3007, %v3167
      %v3169 = vpop.f32.mrf.mxu0
      %v3170 = vpop.f32.mrf.mxu0
      %v3171 = vadd.f32 %v3010, %v3170
      %v3172 = vpop.f32.mrf.mxu0
      %3173 = vmatprep.mubr.bf16.mxu0 %v2331
      %3174 = vmatmul.mubr.bf16.gmra.mxu0 %v2330
      %v3175 = vpop.f32.mrf.mxu0
      %v3176 = vadd.f32 %v3015, %v3175
      %v3177 = vpop.f32.mrf.mxu0
      %v3178 = vpop.f32.mrf.mxu0
      %v3179 = vadd.f32 %v3018, %v3178
      %v3180 = vpop.f32.mrf.mxu0
      %3181 = vmatprep.mubr.bf16.mxu0 %v2337
      %3182 = vmatmul.mubr.bf16.gmra.mxu0 %v2336
      %v3183 = vpop.f32.mrf.mxu0
      %v3184 = vadd.f32 %v3023, %v3183
      %v3185 = vpop.f32.mrf.mxu0
      %v3186 = vpop.f32.mrf.mxu0
      %v3187 = vadd.f32 %v3026, %v3186
      %v3188 = vpop.f32.mrf.mxu0
      %3189 = vmatprep.mubr.bf16.mxu0 %v2343
      %3190 = vmatmul.mubr.bf16.gmra.mxu0 %v2342
      %v3191 = vpop.f32.mrf.mxu0
      %v3192 = vadd.f32 %v3031, %v3191
      %v3193 = vpop.f32.mrf.mxu0
      %v3194 = vpop.f32.mrf.mxu0
      %v3195 = vadd.f32 %v3034, %v3194
      %v3196 = vpop.f32.mrf.mxu0
      %3197 = vmatprep.mubr.bf16.mxu0 %v2349
      %3198 = vmatmul.mubr.bf16.gmra.mxu0 %v2348
      %v3199 = vpop.f32.mrf.mxu0
      %v3200 = vadd.f32 %v3039, %v3199
      %v3201 = vpop.f32.mrf.mxu0
      %v3202 = vpop.f32.mrf.mxu0
      %v3203 = vadd.f32 %v3042, %v3202
      %v3204 = vpop.f32.mrf.mxu0
      %3205 = vmatprep.mubr.bf16.mxu0 %v2355
      %3206 = vmatmul.mubr.bf16.gmra.mxu0 %v2354
      %v3207 = vpop.f32.mrf.mxu0
      %v3208 = vadd.f32 %v3047, %v3207
      %v3209 = vpop.f32.mrf.mxu0
      %v3210 = vpop.f32.mrf.mxu0
      %v3211 = vadd.f32 %v3050, %v3210
      %v3212 = vpop.f32.mrf.mxu0
      %3213 = vmatprep.mubr.bf16.mxu0 %v2361
      %3214 = vmatmul.mubr.bf16.gmra.mxu0 %v2360
      %v3215 = vpop.f32.mrf.mxu0
      %v3216 = vadd.f32 %v3055, %v3215
      %v3217 = vpop.f32.mrf.mxu0
      %v3218 = vpop.f32.mrf.mxu0
      %v3219 = vadd.f32 %v3058, %v3218
      %v3220 = vpop.f32.mrf.mxu0
      %3221 = vmatprep.mubr.bf16.mxu0 %v2367
      %3222 = vmatmul.mubr.bf16.gmra.mxu0 %v2366
      %v3223 = vpop.f32.mrf.mxu0
      %v3224 = vadd.f32 %v3063, %v3223
      %v3225 = vpop.f32.mrf.mxu0
      %v3226 = vpop.f32.mrf.mxu0
      %v3227 = vadd.f32 %v3066, %v3226
      %v3228 = vpop.f32.mrf.mxu0
      %3229 = vmatprep.mubr.bf16.mxu0 %v2373
      %3230 = vmatmul.mubr.bf16.gmra.mxu0 %v2372
      %v3231 = vpop.f32.mrf.mxu0
      %v3232 = vadd.f32 %v3071, %v3231
      %v3233 = vpop.f32.mrf.mxu0
      %v3234 = vpop.f32.mrf.mxu0
      %v3235 = vadd.f32 %v3074, %v3234
      %v3236 = vpop.f32.mrf.mxu0
      %3237 = vmatprep.mubr.bf16.mxu0 %v2379
      %3238 = vmatmul.mubr.bf16.gmra.mxu0 %v2378
      %v3239 = vpop.f32.mrf.mxu0
      %v3240 = vadd.f32 %v3079, %v3239
      %v3241 = vpop.f32.mrf.mxu0
      %v3242 = vpop.f32.mrf.mxu0
      %v3243 = vadd.f32 %v3082, %v3242
      %v3244 = vpop.f32.mrf.mxu0
      %3245 = vmatprep.mubr.bf16.mxu0 %v2385
      %3246 = vmatmul.mubr.bf16.gmra.mxu0 %v2384
      %v3247 = vpop.f32.mrf.mxu0
      %v3248 = vadd.f32 %v3087, %v3247
      %v3249 = vpop.f32.mrf.mxu0
      %v3250 = vpop.f32.mrf.mxu0
      %v3251 = vadd.f32 %v3090, %v3250
      %v3252 = vpop.f32.mrf.mxu0
      %3253 = vmatprep.mubr.bf16.mxu0 %v2391
      %3254 = vmatmul.mubr.bf16.gmra.mxu0 %v2390
      %v3255 = vpop.f32.mrf.mxu0
      %v3256 = vadd.f32 %v3095, %v3255
      %v3257 = vpop.f32.mrf.mxu0
      %v3258 = vpop.f32.mrf.mxu0
      %v3259 = vadd.f32 %v3098, %v3258
      %v3260 = vpop.f32.mrf.mxu0
      %3261 = vmatprep.mubr.bf16.mxu0 %v2397
      %3262 = vmatmul.mubr.bf16.gmra.mxu0 %v2396
      %v3263 = vpop.f32.mrf.mxu0
      %v3264 = vadd.f32 %v3103, %v3263
      %v3265 = vpop.f32.mrf.mxu0
      %v3266 = vpop.f32.mrf.mxu0
      %v3267 = vadd.f32 %v3106, %v3266
      %v3268 = vpop.f32.mrf.mxu0
      %3269 = vmatprep.mubr.bf16.mxu0 %v2403
      %3270 = vmatmul.mubr.bf16.gmra.mxu0 %v2402
      %v3271 = vpop.f32.mrf.mxu0
      %v3272 = vadd.f32 %v3111, %v3271
      %v3273 = vpop.f32.mrf.mxu0
      %v3274 = vpop.f32.mrf.mxu0
      %v3275 = vadd.f32 %v3114, %v3274
      %v3276 = vpop.f32.mrf.mxu0
      %3277 = vdwg.mxu0
      %3278 = vst [vmem:[%s334] sm:$0xff] %v3152
      %3279 = vst [vmem:[%s334 + $0x8] sm:$0xff] %v3155
      %3280 = vst [vmem:[%s334 + $0x10] sm:$0xff] %v3160
      %3281 = vst [vmem:[%s334 + $0x18] sm:$0xff] %v3163
      %3282 = vst [vmem:[%s334 + $0x20] sm:$0xff] %v3168
      %3283 = vst [vmem:[%s334 + $0x28] sm:$0xff] %v3171
      %3284 = vst [vmem:[%s334 + $0x30] sm:$0xff] %v3176
      %3285 = vst [vmem:[%s334 + $0x38] sm:$0xff] %v3179
      %3286 = vst [vmem:[%s334 + $0x40] sm:$0xff] %v3184
      %3287 = vst [vmem:[%s334 + $0x48] sm:$0xff] %v3187
      %3288 = vst [vmem:[%s334 + $0x50] sm:$0xff] %v3192
      %3289 = vst [vmem:[%s334 + $0x58] sm:$0xff] %v3195
      %3290 = vst [vmem:[%s334 + $0x60] sm:$0xff] %v3200
      %3291 = vst [vmem:[%s334 + $0x68] sm:$0xff] %v3203
      %3292 = vst [vmem:[%s334 + $0x70] sm:$0xff] %v3208
      %3293 = vst [vmem:[%s334 + $0x78] sm:$0xff] %v3211
      %3294 = vst [vmem:[%s334 + $0x80] sm:$0xff] %v3216
      %3295 = vst [vmem:[%s334 + $0x88] sm:$0xff] %v3219
      %3296 = vst [vmem:[%s334 + $0x90] sm:$0xff] %v3224
      %3297 = vst [vmem:[%s334 + $0x98] sm:$0xff] %v3227
      %3298 = vst [vmem:[%s334 + $0xa0] sm:$0xff] %v3232
      %3299 = vst [vmem:[%s334 + $0xa8] sm:$0xff] %v3235
      %3300 = vst [vmem:[%s334 + $0xb0] sm:$0xff] %v3240
      %3301 = vst [vmem:[%s334 + $0xb8] sm:$0xff] %v3243
      %3302 = vst [vmem:[%s334 + $0xc0] sm:$0xff] %v3248
      %3303 = vst [vmem:[%s334 + $0xc8] sm:$0xff] %v3251
      %3304 = vst [vmem:[%s334 + $0xd0] sm:$0xff] %v3256
      %3305 = vst [vmem:[%s334 + $0xd8] sm:$0xff] %v3259
      %3306 = vst [vmem:[%s334 + $0xe0] sm:$0xff] %v3264
      %3307 = vst [vmem:[%s334 + $0xe8] sm:$0xff] %v3267
      %3308 = vst [vmem:[%s334 + $0xf0] sm:$0xff] %v3272
      %3309 = vst [vmem:[%s334 + $0xf8] sm:$0xff] %v3275
      %s3310 = smul.u32 32, %s20
      %p3311 = scmp.lt.s32.totalorder %s3310, 95
      %s3312 = scalar_select %p3311, %s3310, 95
      %s3313 = smul.addr %s3312, 8
      %s3314 = scalar_lea.vmem %s9, %s3313
      // Predicated region
      $region57: #{auxiliary_head_ppi.5} parent=55 // pred_check
        %p3315 = pneg %p232
      $region58: #{auxiliary_head_ppi.5} parent=55 // pred_check_branch
        %3317 = sbr.rel (%p3315) target = $region60
      $region59: #{auxiliary_head_ppi.5} parent=55 // pred_region
        %s3318 = smul.u32 32, %s20
      $region60: #{auxiliary_head_ppi.5} parent=55 // pred_fallthru
        _
    $region56: #{auxiliary_head_ppi.5} parent=5 // pred_fallthru
      _
    %p3319 = scmp.le.s32.totalorder 2, %s15
    // Predicated region
    $region61: #{auxiliary_head_ppi.5} parent=5 // pred_check
      %p3320 = pneg %p3319
    $region62: #{auxiliary_head_ppi.5} parent=5 // pred_check_branch
      %3322 = sbr.rel (%p3320) target = $region64
    $region63: #{auxiliary_head_ppi.5} parent=5 // pred_region
      %s3323 = ssub.s32 %s15, 2
      // Predicated region
      $region65: #{auxiliary_head_ppi.5} parent=63 // pred_check
        %p3324 = pneg %p238
      $region66: #{auxiliary_head_ppi.5} parent=63 // pred_check_branch
        %3326 = sbr.rel (%p3324) target = $region68
      $region67: #{auxiliary_head_ppi.5} parent=63 // pred_region
        %s3327 = smul.u32 32, %s21
        %p3328 = scmp.lt.s32.totalorder %s3327, 95
        %s3329 = scalar_select %p3328, %s3327, 95
        %s3330 = smul.addr %s3329, 8
        %s3331 = scalar_lea.vmem %s9, %s3330
      $region68: #{auxiliary_head_ppi.5} parent=63 // pred_fallthru
        _
    $region64: #{auxiliary_head_ppi.5} parent=5 // pred_fallthru
      _
  $region6: #{auxiliary_head_ppi.5} parent=0 // loop_footer
    %s19 = sadd.s32 1, %s15
  $region7: #{auxiliary_head_ppi.5} parent=0 // loop_footer_branch
    %14 = sbr.rel target = $region3
  $region8: #{auxiliary_head_ppi.5} parent=0 // loop_exit
    _

</llo_original>
